<compile_context>
chip_gen: v7x
topology: tpu7x:2x2x1
jax: 0.10.0
libtpu: 0.0.40
codegen_flags: <defaults>
</compile_context>

<pallas_src>
import functools

import jax
import jax.numpy as jnp
from jax.experimental import pallas as pl
from jax.experimental.pallas import tpu as pltpu

LANES = 128
MXU_DTYPE = jnp.bfloat16
BN_EPS = 1e-5
_VMEM_LIMIT = 32 * 1024 * 1024   # conservative: <= default scoped VMEM on v6e/v7x


def _round_up(x, m):
    return ((x + m - 1) // m) * m


def _pick_tile(m, cap=256):
    t = cap
    while t >= 8:
        if m % t == 0:
            return t
        t //= 2
    return m   # full-extent block (always legal)


# ----------------------------------------------------------------------------
# 3x3 convolution: implicit im2col, VMEM-resident image, 9 statically unrolled
# tap matmuls accumulated in f32.  Stride handled by parity slabs.
# ----------------------------------------------------------------------------
def _conv3x3_kernel(x_ref, w_ref, o_ref, *, stride, ho, wo):
    # x_ref: (s*s, Hs, Ws, Cp) f32 - parity slabs of one spatially padded image
    # w_ref: (9, Cp, tn)       bf16 - per-tap weight slices
    # o_ref: (ho*wo, tn)       f32
    s = stride
    cp = x_ref.shape[-1]
    tn = w_ref.shape[-1]
    acc = jnp.zeros((ho * wo, tn), jnp.float32)
    for t in range(9):                                # static unroll: 3x3 taps
        ky, kx = t // 3, t % 3
        slab = (ky % s) * s + (kx % s)                # parity slab for this tap
        dy, dx = ky // s, kx // s                     # shift within that slab
        tap = x_ref[slab, pl.ds(dy, ho), pl.ds(dx, wo), :]
        tap = tap.reshape(ho * wo, cp).astype(w_ref.dtype)
        acc = acc + jnp.dot(tap, w_ref[t], preferred_element_type=jnp.float32)
    o_ref[...] = acc


def _conv3x3(x_slabs, w9, *, stride, ho, wo):
    ns2, hs, ws, cp = x_slabs.shape
    s2 = stride * stride
    n = ns2 // s2
    coutp = w9.shape[-1]
    tn = LANES
    mo = ho * wo
    kernel = functools.partial(_conv3x3_kernel, stride=stride, ho=ho, wo=wo)
    return pl.pallas_call(
        kernel,
        out_shape=jax.ShapeDtypeStruct((n * mo, coutp), jnp.float32),
        grid=(n, coutp // tn),
        in_specs=[
            pl.BlockSpec((s2, hs, ws, cp), lambda i, j: (i, 0, 0, 0)),
            pl.BlockSpec((9, cp, tn), lambda i, j: (0, 0, j)),
        ],
        out_specs=pl.BlockSpec((mo, tn), lambda i, j: (i, j)),
        compiler_params=pltpu.CompilerParams(
            dimension_semantics=("parallel", "parallel"),
            vmem_limit_bytes=_VMEM_LIMIT),
    )(x_slabs, w9)


# ----------------------------------------------------------------------------
# 1x1 projection conv: canonical tiled matmul with f32 accumulator scratch.
# ----------------------------------------------------------------------------
def _matmul_bias_kernel(x_ref, w_ref, b_ref, o_ref, acc_ref):
    @pl.when(pl.program_id(2) == 0)
    def _():
        acc_ref[...] = jnp.zeros_like(acc_ref)

    acc_ref[...] += jnp.dot(x_ref[...], w_ref[...],
                            preferred_element_type=jnp.float32)

    @pl.when(pl.program_id(2) == pl.num_programs(2) - 1)
    def _():
        o_ref[...] = acc_ref[...] + b_ref[...]


def _matmul_bias(x, w, b):
    # x: (M, K) bf16, w: (K, Coutp) bf16, b: (Coutp,) f32 -> (M, Coutp) f32
    m, k = x.shape
    coutp = w.shape[-1]
    tm = _pick_tile(m, cap=256)
    tn = LANES
    tk = _pick_tile(k, cap=512)
    return pl.pallas_call(
        _matmul_bias_kernel,
        out_shape=jax.ShapeDtypeStruct((m, coutp), jnp.float32),
        grid=(m // tm, coutp // tn, k // tk),
        in_specs=[
            pl.BlockSpec((tm, tk), lambda i, j, kk: (i, kk)),
            pl.BlockSpec((tk, tn), lambda i, j, kk: (kk, j)),
            pl.BlockSpec((1, tn), lambda i, j, kk: (0, j)),
        ],
        out_specs=pl.BlockSpec((tm, tn), lambda i, j, kk: (i, j)),
        scratch_shapes=[pltpu.VMEM((tm, tn), jnp.float32)],
        compiler_params=pltpu.CompilerParams(
            dimension_semantics=("parallel", "parallel", "arbitrary"),
            vmem_limit_bytes=_VMEM_LIMIT),
    )(x, w, b.reshape(1, coutp))


# ----------------------------------------------------------------------------
# BatchNorm (training semantics, batch stats over N,H,W): tiled two-pass.
# ----------------------------------------------------------------------------
def _bn_stats_kernel(y_ref, s_ref):
    @pl.when(pl.program_id(0) == 0)
    def _():
        s_ref[...] = jnp.zeros_like(s_ref)

    y = y_ref[...]
    s_ref[...] += jnp.concatenate(
        [jnp.sum(y, axis=0, keepdims=True),
         jnp.sum(y * y, axis=0, keepdims=True)], axis=0)


def _bn_stats(y):
    m, cp = y.shape
    tm = _pick_tile(m, cap=256)
    return pl.pallas_call(
        _bn_stats_kernel,
        out_shape=jax.ShapeDtypeStruct((2, cp), jnp.float32),
        grid=(m // tm,),
        in_specs=[pl.BlockSpec((tm, cp), lambda i: (i, 0))],
        out_specs=pl.BlockSpec((2, cp), lambda i: (0, 0)),
        compiler_params=pltpu.CompilerParams(
            dimension_semantics=("arbitrary",)),
    )(y)


def _bn_apply_kernel(y_ref, s_ref, g_ref, b_ref, o_ref, *, count):
    st = s_ref[...]                              # (2, Cp): [sum; sum of squares]
    inv = 1.0 / count
    mean = st[0:1, :] * inv
    var = st[1:2, :] * inv - mean * mean
    scale = g_ref[...] * jax.lax.rsqrt(var + BN_EPS)
    shift = b_ref[...] - mean * scale
    o_ref[...] = jnp.maximum(y_ref[...] * scale + shift, 0.0)


def _bn_add_apply_kernel(y_ref, r_ref, s_ref, g_ref, b_ref, o_ref, *, count):
    st = s_ref[...]
    inv = 1.0 / count
    mean = st[0:1, :] * inv
    var = st[1:2, :] * inv - mean * mean
    scale = g_ref[...] * jax.lax.rsqrt(var + BN_EPS)
    shift = b_ref[...] - mean * scale
    o_ref[...] = jnp.maximum(y_ref[...] * scale + shift + r_ref[...], 0.0)


def _batchnorm_relu(y, gamma, beta):
    m, cp = y.shape
    stats = _bn_stats(y)
    tm = _pick_tile(m, cap=256)
    kernel = functools.partial(_bn_apply_kernel, count=float(m))
    return pl.pallas_call(
        kernel,
        out_shape=jax.ShapeDtypeStruct((m, cp), jnp.float32),
        grid=(m // tm,),
        in_specs=[
            pl.BlockSpec((tm, cp), lambda i: (i, 0)),
            pl.BlockSpec((2, cp), lambda i: (0, 0)),
            pl.BlockSpec((1, cp), lambda i: (0, 0)),
            pl.BlockSpec((1, cp), lambda i: (0, 0)),
        ],
        out_specs=pl.BlockSpec((tm, cp), lambda i: (i, 0)),
        compiler_params=pltpu.CompilerParams(
            dimension_semantics=("parallel",)),
    )(y, stats, gamma.reshape(1, cp), beta.reshape(1, cp))


def _batchnorm_add_relu(y, r, gamma, beta):
    m, cp = y.shape
    stats = _bn_stats(y)
    tm = _pick_tile(m, cap=256)
    kernel = functools.partial(_bn_add_apply_kernel, count=float(m))
    return pl.pallas_call(
        kernel,
        out_shape=jax.ShapeDtypeStruct((m, cp), jnp.float32),
        grid=(m // tm,),
        in_specs=[
            pl.BlockSpec((tm, cp), lambda i: (i, 0)),
            pl.BlockSpec((tm, cp), lambda i: (i, 0)),
            pl.BlockSpec((2, cp), lambda i: (0, 0)),
            pl.BlockSpec((1, cp), lambda i: (0, 0)),
            pl.BlockSpec((1, cp), lambda i: (0, 0)),
        ],
        out_specs=pl.BlockSpec((tm, cp), lambda i: (i, 0)),
        compiler_params=pltpu.CompilerParams(
            dimension_semantics=("parallel",)),
    )(y, r, stats, gamma.reshape(1, cp), beta.reshape(1, cp))


# ----------------------------------------------------------------------------
# Glue (plain JAX): channel padding, weight packing, parity-slab construction.
# ----------------------------------------------------------------------------
def _pad_channels(x, cp):
    return jnp.pad(x, ((0, 0),) * (x.ndim - 1) + ((0, cp - x.shape[-1]),))


def _pad_vec(v, cp):
    return jnp.pad(v.astype(jnp.float32), (0, cp - v.shape[0]))


def _prep_w3x3(w, cinp, coutp):
    # (3, 3, Cin, Cout) -> (9, cinp, coutp), zero padded, MXU dtype.
    kh, kw, cin, cout = w.shape
    w = jnp.pad(w, ((0, 0), (0, 0), (0, cinp - cin), (0, coutp - cout)))
    return w.reshape(kh * kw, cinp, coutp).astype(MXU_DTYPE)


def _prep_w1x1(w, cinp, coutp):
    cin, cout = w.shape
    w = jnp.pad(w, ((0, cinp - cin), (0, coutp - cout)))
    return w.astype(MXU_DTYPE)


def _make_tap_slabs(x, stride):
    """(N, H, W, Cp) -> (N*s*s, Hs, Ws, Cp) parity slabs of the pad=1 image.

    Output pixel (oh, ow) tap (ky, kx) of image n lives at
    slabs[n*s*s + (ky%s)*s + kx%s, oh + ky//s, ow + kx//s, :].
    """
    n, h, w, cp = x.shape
    xp = jnp.pad(x, ((0, 0), (1, 1), (1, 1), (0, 0)))
    s = stride
    if s == 1:
        return xp
    hs = -(-(h + 2) // s)
    ws = -(-(w + 2) // s)
    parts = []
    for a in range(s):
        for b in range(s):
            sl = xp[:, a::s, b::s, :]
            sl = jnp.pad(sl, ((0, 0), (0, hs - sl.shape[1]),
                              (0, ws - sl.shape[2]), (0, 0)))
            parts.append(sl)
    return jnp.stack(parts, axis=1).reshape(n * s * s, hs, ws, cp)


# ----------------------------------------------------------------------------
# Residual block forward (matches the PyTorch module's forward semantics)
# ----------------------------------------------------------------------------
def residual_forward(x_nchw, p, stride=1):
    x = jnp.transpose(x_nchw, (0, 2, 3, 1)).astype(jnp.float32)   # NCHW -> NHWC
    n, h, w, cin = x.shape
    cout = p["w1"].shape[-1]
    cinp = _round_up(cin, LANES)
    coutp = _round_up(cout, LANES)

    ho = (h - 1) // stride + 1
    wo = (w - 1) // stride + 1
    m = n * ho * wo

    xpc = _pad_channels(x, cinp)                      # lane-dense channels

    # conv1 (3x3, stride) -> bn1 -> relu.  conv bias folded away by BN.
    y = _conv3x3(_make_tap_slabs(xpc, stride),
                 _prep_w3x3(p["w1"], cinp, coutp),
                 stride=stride, ho=ho, wo=wo)                     # (m, coutp)
    y = _batchnorm_relu(y, _pad_vec(p["g1"], coutp), _pad_vec(p["be1"], coutp))

    # conv2 (3x3, stride 1).  conv bias folded away by bn2.
    y = _conv3x3(_make_tap_slabs(y.reshape(n, ho, wo, coutp), 1),
                 _prep_w3x3(p["w2"], coutp, coutp),
                 stride=1, ho=ho, wo=wo)                          # (m, coutp)

    # Shortcut path.
    if "w3" in p:
        xs = xpc[:, ::stride, ::stride, :]            # pre-strided: no wasted MXU work
        xs = xs.reshape(m, cinp).astype(MXU_DTYPE)
        r = _matmul_bias(xs, _prep_w1x1(p["w3"], cinp, coutp),
                         _pad_vec(p["b3"], coutp))
    else:
        r = xpc.reshape(m, coutp)                     # identity (cin==cout, stride==1)

    # bn2 + residual add + relu, fused.
    out = _batchnorm_add_relu(y, r, _pad_vec(p["g2"], coutp),
                              _pad_vec(p["be2"], coutp))

    out = out.reshape(n, ho, wo, coutp)[:, :, :, :cout]
    return jnp.transpose(out, (0, 3, 1, 2))           # NHWC -> NCHW


# ----------------------------------------------------------------------------
# Pure-JAX reference (faithful to the PyTorch module, incl. conv biases)
# ----------------------------------------------------------------------------
def residual_ref(x, p, stride=1):
    def conv(x, w, b, s, pad):
        y = jax.lax.conv_general_dilated(
            x, w, (s, s), [(pad, pad), (pad, pad)],
            dimension_numbers=("NCHW", "HWIO", "NCHW"))
        return y + b.reshape(1, -1, 1, 1)

    def bn(y, g, be):
        mu = jnp.mean(y, axis=(0, 2, 3), keepdims=True)
        var = jnp.mean(jnp.square(y - mu), axis=(0, 2, 3), keepdims=True)
        return ((y - mu) * jax.lax.rsqrt(var + BN_EPS) * g.reshape(1, -1, 1, 1)
                + be.reshape(1, -1, 1, 1))

    y = jax.nn.relu(bn(conv(x, p["w1"], p["b1"], stride, 1), p["g1"], p["be1"]))
    y = bn(conv(y, p["w2"], p["b2"], 1, 1), p["g2"], p["be2"])
    if "w3" in p:
        x = conv(x, p["w3"].reshape(1, 1, *p["w3"].shape), p["b3"], stride, 0)
    return jax.nn.relu(y + x)


# ----------------------------------------------------------------------------
# Deterministic synthetic params (mirrors nn.Conv2d / nn.BatchNorm2d shapes).
# b1/b2 exist to mirror nn.Conv2d(bias=True) and are consumed only by the
# reference: BatchNorm cancels them exactly, so the Pallas path drops them.
# ----------------------------------------------------------------------------
def init_params(cin, cout, use_1x1conv, key):
    ks = jax.random.split(key, 8)
    p = {
        "w1": 0.1 * jax.random.normal(ks[0], (3, 3, cin, cout), jnp.float32),
        "b1": 0.05 * jax.random.normal(ks[1], (cout,), jnp.float32),
        "w2": 0.1 * jax.random.normal(ks[2], (3, 3, cout, cout), jnp.float32),
        "b2": 0.05 * jax.random.normal(ks[3], (cout,), jnp.float32),
        "g1": 1.0 + 0.1 * jax.random.normal(ks[4], (cout,), jnp.float32),
        "be1": 0.1 * jax.random.normal(ks[5], (cout,), jnp.float32),
        "g2": jnp.ones((cout,), jnp.float32),
        "be2": jnp.zeros((cout,), jnp.float32),
    }
    if use_1x1conv:
        p["w3"] = 0.1 * jax.random.normal(ks[6], (cin, cout), jnp.float32)
        p["b3"] = 0.05 * jax.random.normal(ks[7], (cout,), jnp.float32)
    return p


if __name__ == "__main__":
    key = jax.random.PRNGKey(0)
    kx1, kx2, kp1, kp2 = jax.random.split(key, 4)

    # Tolerance is looser than pure-f32 because MXU operands are bf16.
    ATOL = RTOL = 3e-2

    # Config A: identity shortcut (use_1x1conv=False, stride=1)
    x_a = jax.random.normal(kx1, (2, 8, 16, 16), jnp.float32)   # NCHW
    p_a = init_params(8, 8, False, kp1)
    out_a = jax.block_until_ready(residual_forward(x_a, p_a, stride=1))
    ref_a = residual_ref(x_a, p_a, stride=1)
    assert out_a.shape == ref_a.shape
    assert bool(jnp.allclose(out_a, ref_a, atol=ATOL, rtol=RTOL)), \
        float(jnp.max(jnp.abs(out_a - ref_a)))

    # Config B: projection shortcut (use_1x1conv=True, stride=2)
    x_b = jax.random.normal(kx2, (2, 4, 16, 16), jnp.float32)   # NCHW
    p_b = init_params(4, 8, True, kp2)
    out_b = jax.block_until_ready(residual_forward(x_b, p_b, stride=2))
    ref_b = residual_ref(x_b, p_b, stride=2)
    assert out_b.shape == ref_b.shape
    assert bool(jnp.allclose(out_b, ref_b, atol=ATOL, rtol=RTOL)), \
        float(jnp.max(jnp.abs(out_b - ref_b)))

    print("KERNEL_OK")
</pallas_src>

<mosaic_0001>
module attributes {stable_mosaic.version = 11 : i64} {
  func.func @_conv3x3_kernel(%arg0: i32, %arg1: i32, %arg2: memref<1x18x18x128xf32, #tpu.memory_space<vmem>>, %arg3: memref<9x128x128xbf16, #tpu.memory_space<vmem>>, %arg4: memref<256x128xf32, #tpu.memory_space<vmem>>) attributes {dimension_semantics = [#tpu.dimension_semantics<parallel>, #tpu.dimension_semantics<parallel>], iteration_bounds = array<i64: 2, 1>, scalar_prefetch = 0 : i64, scratch_operands = 0 : i64, tpu.core_type = #tpu.core_type<tc>, window_params = [{transform_indices = @transform_0, window_bounds = array<i64: 1, 18, 18, 128>}, {transform_indices = @transform_1, window_bounds = array<i64: 9, 128, 128>}, {transform_indices = @transform_2, window_bounds = array<i64: 256, 128>}]} {
    %cst = arith.constant 0.000000e+00 : f32
    %0 = vector.broadcast %cst : f32 to vector<256x128xf32>
    %c0 = arith.constant 0 : index
    %c0_0 = arith.constant 0 : index
    %c0_1 = arith.constant 0 : index
    %c0_2 = arith.constant 0 : index
    %1 = vector.load %arg2[%c0, %c0_0, %c0_1, %c0_2] : memref<1x18x18x128xf32, #tpu.memory_space<vmem>>, vector<1x16x16x128xf32>
    %2 = vector.shape_cast %1 : vector<1x16x16x128xf32> to vector<16x16x128xf32>
    %3 = vector.shape_cast %2 : vector<16x16x128xf32> to vector<256x128xf32>
    %4 = arith.truncf %3 : vector<256x128xf32> to vector<256x128xbf16>
    %c0_3 = arith.constant 0 : index
    %c0_4 = arith.constant 0 : index
    %c0_5 = arith.constant 0 : index
    %5 = vector.load %arg3[%c0_3, %c0_4, %c0_5] : memref<9x128x128xbf16, #tpu.memory_space<vmem>>, vector<1x128x128xbf16>
    %6 = vector.shape_cast %5 : vector<1x128x128xbf16> to vector<128x128xbf16>
    %cst_6 = arith.constant dense<0.000000e+00> : vector<256x128xf32>
    %7 = tpu.matmul %4, %6, %cst_6 {dimension_numbers = #tpu.dot_dimension_numbers<[1], [0], [0], [1], [0, 0, 1, 1], [], []>} : vector<256x128xbf16>, vector<128x128xbf16>, vector<256x128xf32> -> vector<256x128xf32>
    %8 = arith.addf %0, %7 : vector<256x128xf32>
    %c0_7 = arith.constant 0 : index
    %c0_8 = arith.constant 0 : index
    %c1 = arith.constant 1 : index
    %c0_9 = arith.constant 0 : index
    %9 = vector.load %arg2[%c0_7, %c0_8, %c1, %c0_9] : memref<1x18x18x128xf32, #tpu.memory_space<vmem>>, vector<1x16x16x128xf32>
    %10 = vector.shape_cast %9 : vector<1x16x16x128xf32> to vector<16x16x128xf32>
    %11 = vector.shape_cast %10 : vector<16x16x128xf32> to vector<256x128xf32>
    %12 = arith.truncf %11 : vector<256x128xf32> to vector<256x128xbf16>
    %c1_10 = arith.constant 1 : index
    %c0_11 = arith.constant 0 : index
    %c0_12 = arith.constant 0 : index
    %13 = vector.load %arg3[%c1_10, %c0_11, %c0_12] : memref<9x128x128xbf16, #tpu.memory_space<vmem>>, vector<1x128x128xbf16>
    %14 = vector.shape_cast %13 : vector<1x128x128xbf16> to vector<128x128xbf16>
    %cst_13 = arith.constant dense<0.000000e+00> : vector<256x128xf32>
    %15 = tpu.matmul %12, %14, %cst_13 {dimension_numbers = #tpu.dot_dimension_numbers<[1], [0], [0], [1], [0, 0, 1, 1], [], []>} : vector<256x128xbf16>, vector<128x128xbf16>, vector<256x128xf32> -> vector<256x128xf32>
    %16 = arith.addf %8, %15 : vector<256x128xf32>
    %c0_14 = arith.constant 0 : index
    %c0_15 = arith.constant 0 : index
    %c2 = arith.constant 2 : index
    %c0_16 = arith.constant 0 : index
    %17 = vector.load %arg2[%c0_14, %c0_15, %c2, %c0_16] : memref<1x18x18x128xf32, #tpu.memory_space<vmem>>, vector<1x16x16x128xf32>
    %18 = vector.shape_cast %17 : vector<1x16x16x128xf32> to vector<16x16x128xf32>
    %19 = vector.shape_cast %18 : vector<16x16x128xf32> to vector<256x128xf32>
    %20 = arith.truncf %19 : vector<256x128xf32> to vector<256x128xbf16>
    %c2_17 = arith.constant 2 : index
    %c0_18 = arith.constant 0 : index
    %c0_19 = arith.constant 0 : index
    %21 = vector.load %arg3[%c2_17, %c0_18, %c0_19] : memref<9x128x128xbf16, #tpu.memory_space<vmem>>, vector<1x128x128xbf16>
    %22 = vector.shape_cast %21 : vector<1x128x128xbf16> to vector<128x128xbf16>
    %cst_20 = arith.constant dense<0.000000e+00> : vector<256x128xf32>
    %23 = tpu.matmul %20, %22, %cst_20 {dimension_numbers = #tpu.dot_dimension_numbers<[1], [0], [0], [1], [0, 0, 1, 1], [], []>} : vector<256x128xbf16>, vector<128x128xbf16>, vector<256x128xf32> -> vector<256x128xf32>
    %24 = arith.addf %16, %23 : vector<256x128xf32>
    %c0_21 = arith.constant 0 : index
    %c1_22 = arith.constant 1 : index
    %c0_23 = arith.constant 0 : index
    %c0_24 = arith.constant 0 : index
    %25 = vector.load %arg2[%c0_21, %c1_22, %c0_23, %c0_24] : memref<1x18x18x128xf32, #tpu.memory_space<vmem>>, vector<1x16x16x128xf32>
    %26 = vector.shape_cast %25 : vector<1x16x16x128xf32> to vector<16x16x128xf32>
    %27 = vector.shape_cast %26 : vector<16x16x128xf32> to vector<256x128xf32>
    %28 = arith.truncf %27 : vector<256x128xf32> to vector<256x128xbf16>
    %c3 = arith.constant 3 : index
    %c0_25 = arith.constant 0 : index
    %c0_26 = arith.constant 0 : index
    %29 = vector.load %arg3[%c3, %c0_25, %c0_26] : memref<9x128x128xbf16, #tpu.memory_space<vmem>>, vector<1x128x128xbf16>
    %30 = vector.shape_cast %29 : vector<1x128x128xbf16> to vector<128x128xbf16>
    %cst_27 = arith.constant dense<0.000000e+00> : vector<256x128xf32>
    %31 = tpu.matmul %28, %30, %cst_27 {dimension_numbers = #tpu.dot_dimension_numbers<[1], [0], [0], [1], [0, 0, 1, 1], [], []>} : vector<256x128xbf16>, vector<128x128xbf16>, vector<256x128xf32> -> vector<256x128xf32>
    %32 = arith.addf %24, %31 : vector<256x128xf32>
    %c0_28 = arith.constant 0 : index
    %c1_29 = arith.constant 1 : index
    %c1_30 = arith.constant 1 : index
    %c0_31 = arith.constant 0 : index
    %33 = vector.load %arg2[%c0_28, %c1_29, %c1_30, %c0_31] : memref<1x18x18x128xf32, #tpu.memory_space<vmem>>, vector<1x16x16x128xf32>
    %34 = vector.shape_cast %33 : vector<1x16x16x128xf32> to vector<16x16x128xf32>
    %35 = vector.shape_cast %34 : vector<16x16x128xf32> to vector<256x128xf32>
    %36 = arith.truncf %35 : vector<256x128xf32> to vector<256x128xbf16>
    %c4 = arith.constant 4 : index
    %c0_32 = arith.constant 0 : index
    %c0_33 = arith.constant 0 : index
    %37 = vector.load %arg3[%c4, %c0_32, %c0_33] : memref<9x128x128xbf16, #tpu.memory_space<vmem>>, vector<1x128x128xbf16>
    %38 = vector.shape_cast %37 : vector<1x128x128xbf16> to vector<128x128xbf16>
    %cst_34 = arith.constant dense<0.000000e+00> : vector<256x128xf32>
    %39 = tpu.matmul %36, %38, %cst_34 {dimension_numbers = #tpu.dot_dimension_numbers<[1], [0], [0], [1], [0, 0, 1, 1], [], []>} : vector<256x128xbf16>, vector<128x128xbf16>, vector<256x128xf32> -> vector<256x128xf32>
    %40 = arith.addf %32, %39 : vector<256x128xf32>
    %c0_35 = arith.constant 0 : index
    %c1_36 = arith.constant 1 : index
    %c2_37 = arith.constant 2 : index
    %c0_38 = arith.constant 0 : index
    %41 = vector.load %arg2[%c0_35, %c1_36, %c2_37, %c0_38] : memref<1x18x18x128xf32, #tpu.memory_space<vmem>>, vector<1x16x16x128xf32>
    %42 = vector.shape_cast %41 : vector<1x16x16x128xf32> to vector<16x16x128xf32>
    %43 = vector.shape_cast %42 : vector<16x16x128xf32> to vector<256x128xf32>
    %44 = arith.truncf %43 : vector<256x128xf32> to vector<256x128xbf16>
    %c5 = arith.constant 5 : index
    %c0_39 = arith.constant 0 : index
    %c0_40 = arith.constant 0 : index
    %45 = vector.load %arg3[%c5, %c0_39, %c0_40] : memref<9x128x128xbf16, #tpu.memory_space<vmem>>, vector<1x128x128xbf16>
    %46 = vector.shape_cast %45 : vector<1x128x128xbf16> to vector<128x128xbf16>
    %cst_41 = arith.constant dense<0.000000e+00> : vector<256x128xf32>
    %47 = tpu.matmul %44, %46, %cst_41 {dimension_numbers = #tpu.dot_dimension_numbers<[1], [0], [0], [1], [0, 0, 1, 1], [], []>} : vector<256x128xbf16>, vector<128x128xbf16>, vector<256x128xf32> -> vector<256x128xf32>
    %48 = arith.addf %40, %47 : vector<256x128xf32>
    %c0_42 = arith.constant 0 : index
    %c2_43 = arith.constant 2 : index
    %c0_44 = arith.constant 0 : index
    %c0_45 = arith.constant 0 : index
    %49 = vector.load %arg2[%c0_42, %c2_43, %c0_44, %c0_45] : memref<1x18x18x128xf32, #tpu.memory_space<vmem>>, vector<1x16x16x128xf32>
    %50 = vector.shape_cast %49 : vector<1x16x16x128xf32> to vector<16x16x128xf32>
    %51 = vector.shape_cast %50 : vector<16x16x128xf32> to vector<256x128xf32>
    %52 = arith.truncf %51 : vector<256x128xf32> to vector<256x128xbf16>
    %c6 = arith.constant 6 : index
    %c0_46 = arith.constant 0 : index
    %c0_47 = arith.constant 0 : index
    %53 = vector.load %arg3[%c6, %c0_46, %c0_47] : memref<9x128x128xbf16, #tpu.memory_space<vmem>>, vector<1x128x128xbf16>
    %54 = vector.shape_cast %53 : vector<1x128x128xbf16> to vector<128x128xbf16>
    %cst_48 = arith.constant dense<0.000000e+00> : vector<256x128xf32>
    %55 = tpu.matmul %52, %54, %cst_48 {dimension_numbers = #tpu.dot_dimension_numbers<[1], [0], [0], [1], [0, 0, 1, 1], [], []>} : vector<256x128xbf16>, vector<128x128xbf16>, vector<256x128xf32> -> vector<256x128xf32>
    %56 = arith.addf %48, %55 : vector<256x128xf32>
    %c0_49 = arith.constant 0 : index
    %c2_50 = arith.constant 2 : index
    %c1_51 = arith.constant 1 : index
    %c0_52 = arith.constant 0 : index
    %57 = vector.load %arg2[%c0_49, %c2_50, %c1_51, %c0_52] : memref<1x18x18x128xf32, #tpu.memory_space<vmem>>, vector<1x16x16x128xf32>
    %58 = vector.shape_cast %57 : vector<1x16x16x128xf32> to vector<16x16x128xf32>
    %59 = vector.shape_cast %58 : vector<16x16x128xf32> to vector<256x128xf32>
    %60 = arith.truncf %59 : vector<256x128xf32> to vector<256x128xbf16>
    %c7 = arith.constant 7 : index
    %c0_53 = arith.constant 0 : index
    %c0_54 = arith.constant 0 : index
    %61 = vector.load %arg3[%c7, %c0_53, %c0_54] : memref<9x128x128xbf16, #tpu.memory_space<vmem>>, vector<1x128x128xbf16>
    %62 = vector.shape_cast %61 : vector<1x128x128xbf16> to vector<128x128xbf16>
    %cst_55 = arith.constant dense<0.000000e+00> : vector<256x128xf32>
    %63 = tpu.matmul %60, %62, %cst_55 {dimension_numbers = #tpu.dot_dimension_numbers<[1], [0], [0], [1], [0, 0, 1, 1], [], []>} : vector<256x128xbf16>, vector<128x128xbf16>, vector<256x128xf32> -> vector<256x128xf32>
    %64 = arith.addf %56, %63 : vector<256x128xf32>
    %c0_56 = arith.constant 0 : index
    %c2_57 = arith.constant 2 : index
    %c2_58 = arith.constant 2 : index
    %c0_59 = arith.constant 0 : index
    %65 = vector.load %arg2[%c0_56, %c2_57, %c2_58, %c0_59] : memref<1x18x18x128xf32, #tpu.memory_space<vmem>>, vector<1x16x16x128xf32>
    %66 = vector.shape_cast %65 : vector<1x16x16x128xf32> to vector<16x16x128xf32>
    %67 = vector.shape_cast %66 : vector<16x16x128xf32> to vector<256x128xf32>
    %68 = arith.truncf %67 : vector<256x128xf32> to vector<256x128xbf16>
    %c8 = arith.constant 8 : index
    %c0_60 = arith.constant 0 : index
    %c0_61 = arith.constant 0 : index
    %69 = vector.load %arg3[%c8, %c0_60, %c0_61] : memref<9x128x128xbf16, #tpu.memory_space<vmem>>, vector<1x128x128xbf16>
    %70 = vector.shape_cast %69 : vector<1x128x128xbf16> to vector<128x128xbf16>
    %cst_62 = arith.constant dense<0.000000e+00> : vector<256x128xf32>
    %71 = tpu.matmul %68, %70, %cst_62 {dimension_numbers = #tpu.dot_dimension_numbers<[1], [0], [0], [1], [0, 0, 1, 1], [], []>} : vector<256x128xbf16>, vector<128x128xbf16>, vector<256x128xf32> -> vector<256x128xf32>
    %72 = arith.addf %64, %71 : vector<256x128xf32>
    %c0_63 = arith.constant 0 : index
    %c0_64 = arith.constant 0 : index
    %73 = vector.load %arg4[%c0_63, %c0_64] : memref<256x128xf32, #tpu.memory_space<vmem>>, vector<256x128xf32>
    tpu.vector_store %arg4[%c0_63, %c0_64], %72 {strides = array<i32>} : memref<256x128xf32, #tpu.memory_space<vmem>>, vector<256x128xf32>,
    return
  }
  func.func @transform_0(%arg0: i32, %arg1: i32) -> (i32, i32, i32, i32) {
    %c0_i32 = arith.constant 0 : i32
    %c0_i32_0 = arith.constant 0 : i32
    %c0_i32_1 = arith.constant 0 : i32
    %c0_i32_2 = arith.constant 0 : i32
    return %arg0, %c0_i32, %c0_i32_0, %c0_i32_1 : i32, i32, i32, i32
  }
  func.func @transform_1(%arg0: i32, %arg1: i32) -> (i32, i32, i32) {
    %c0_i32 = arith.constant 0 : i32
    %c0_i32_0 = arith.constant 0 : i32
    %c0_i32_1 = arith.constant 0 : i32
    return %c0_i32, %c0_i32_0, %arg1 : i32, i32, i32
  }
  func.func @transform_2(%arg0: i32, %arg1: i32) -> (i32, i32) {
    %c0_i32 = arith.constant 0 : i32
    return %arg0, %arg1 : i32, i32
  }
}

</mosaic_0001>

<llo_original>
// kernel: tpu_custom_call.1
$region0: #{tpu_custom_call.1}
  #allocation0 [shape = 'u32[]', space=smem, size = 0x4, offset = 0x4, fixed_abs, tag = 'smem constant byte address 0x4 - core index']
  #allocation1 [shape = 'u32[144,128]{1,0:T(1,128)}', space=vmem, size = 0x12000, scoped, tag = 'internal scratch']
  %s0 = inlined_call_operand.vmem [shape: f32[2,18,18,128], index: 0, kind: input, shape index: {}]
  %s1 = inlined_call_operand.vmem [shape: bf16[9,128,128], index: 1, kind: input, shape index: {}]
  %s2 = inlined_call_operand.hbm [shape: f32[512,128], index: 2, kind: output, shape index: {}]
  %s3 = sld [smem:[#allocation0]]
  $region41: #{tpu_custom_call.1} parent=0
    _
  %s5 = ssub.s32 1, %s3
  %s6 = scalar_select 0, %s5, %s3
  $region1: #{tpu_custom_call.1} parent=0
    #allocation2 [shape = 'u8[262144]{0}', space=vmem, size = 0x40000, scoped, tag = 'output window, operand 0']
    #allocation3 [shape = 's32[2]{0}', space=sflag, size = 0x8, scoped, tag = 'scoped memory for tpu_custom_call.1']
    %7 = vsyncpa [#allocation3], 0
    %s8 = scalar_lea.sflag [#allocation3], 1
    %9 = vsyncpa %s8, 0
    loop: start=0, step=1, limit=4
    $region2: #{tpu_custom_call.1} parent=1 // loop_pre_header
      _
    $region3: #{tpu_custom_call.1} parent=1 // loop_header
      %s11 = sphi 0, %s15
      %p12 = scmp.ge.s32.totalorder %s11, 4
      %s18 = sphi 0, %s30
      %s19 = sphi 0, %s26
      %s20 = sphi 0, %s18
      %s21 = sphi 0, %s19
      %s22 = sphi 0, %s20
      %s23 = sphi 0, %s21
      %s33 = sphi 0, %s35
      %s36 = sphi 0, %s33
      %s37 = sphi 0, %s36
      %s53 = sphi 0, %s37
      %s59 = sphi 0, %s61
      %s62 = sphi 0, %s59
      %s63 = sphi 0, %s62
      %s79 = sphi 0, %s63
      %s87 = sphi 0, %s89
      %s90 = sphi 0, %s87
      %s91 = sphi 0, %s90
      %s107 = sphi 0, %s91
    $region4: #{tpu_custom_call.1} parent=1 // loop_header_branch
      %14 = sbr.rel (%p12) target = $region8
    $region5: #{tpu_custom_call.1} parent=1 // loop_body
      %s16 = ssub.s32 %s11, 1
      %s17 = ssub.s32 %s11, 2
      %s24 = sadd.s32 1, %s19
      %p25 = scmp.ge.s32.totalorder %s24, 1
      %s26 = scalar_select %p25, 0, %s24
      %s27 = sadd.s32 1, %s18
      %s28 = scalar_select %p25, %s27, %s18
      %p29 = scmp.ge.s32.totalorder %s28, 2
      %s30 = scalar_select %p29, 0, %s28
      %s31 = ssub.s32 %s18, %s30
      %p32 = scmp.eq.s32.totalorder %s31, 0
      %s34 = sadd.s32 %s33, 1
      %s35 = scalar_select %p32, %s33, %s34
      %p38 = pneg %p32
      %p39 = scmp.eq.s32.totalorder %s11, 1
      %p40 = por %p38, %p39
      %p41 = scmp.ne.s32.totalorder %s33, %s36
      %p42 = scmp.eq.s32.totalorder %s11, 0
      %p43 = por %p41, %p42
      %p44 = scmp.ne.s32.totalorder %s33, %s36
      %p45 = scmp.eq.s32.totalorder %s16, 1
      %p46 = por %p44, %p45
      %p47 = scmp.ne.s32.totalorder %s36, %s37
      %p48 = scmp.eq.s32.totalorder %s16, 0
      %p49 = por %p47, %p48
      %p50 = scmp.ne.s32.totalorder %s36, %s37
      %p51 = scmp.eq.s32.totalorder %s17, 1
      %p52 = por %p50, %p51
      %p54 = scmp.ne.s32.totalorder %s37, %s53
      %p55 = scmp.eq.s32.totalorder %s17, 0
      %p56 = por %p54, %p55
      %s57 = ssub.s32 %s19, %s26
      %p58 = scmp.eq.s32.totalorder %s57, 0
      %s60 = sadd.s32 %s59, 1
      %s61 = scalar_select %p58, %s59, %s60
      %p64 = pneg %p58
      %p65 = scmp.eq.s32.totalorder %s11, 1
      %p66 = por %p64, %p65
      %p67 = scmp.ne.s32.totalorder %s59, %s62
      %p68 = scmp.eq.s32.totalorder %s11, 0
      %p69 = por %p67, %p68
      %p70 = scmp.ne.s32.totalorder %s59, %s62
      %p71 = scmp.eq.s32.totalorder %s16, 1
      %p72 = por %p70, %p71
      %p73 = scmp.ne.s32.totalorder %s62, %s63
      %p74 = scmp.eq.s32.totalorder %s16, 0
      %p75 = por %p73, %p74
      %p76 = scmp.ne.s32.totalorder %s62, %s63
      %p77 = scmp.eq.s32.totalorder %s17, 1
      %p78 = por %p76, %p77
      %p80 = scmp.ne.s32.totalorder %s63, %s79
      %p81 = scmp.eq.s32.totalorder %s17, 0
      %p82 = por %p80, %p81
      %s83 = ssub.s32 %s18, %s30
      %s84 = ssub.s32 %s19, %s26
      %s85 = sor.u32 %s83, %s84
      %p86 = scmp.eq.s32.totalorder %s85, 0
      %s88 = sadd.s32 %s87, 1
      %s89 = scalar_select %p86, %s87, %s88
      %p92 = pneg %p86
      %p93 = scmp.eq.s32.totalorder %s11, 1
      %p94 = por %p92, %p93
      %p95 = scmp.ne.s32.totalorder %s87, %s90
      %p96 = scmp.eq.s32.totalorder %s11, 0
      %p97 = por %p95, %p96
      %p98 = scmp.ne.s32.totalorder %s87, %s90
      %p99 = scmp.eq.s32.totalorder %s16, 1
      %p100 = por %p98, %p99
      %p101 = scmp.ne.s32.totalorder %s90, %s91
      %p102 = scmp.eq.s32.totalorder %s16, 0
      %p103 = por %p101, %p102
      %p104 = scmp.ne.s32.totalorder %s90, %s91
      %p105 = scmp.eq.s32.totalorder %s17, 1
      %p106 = por %p104, %p105
      %p108 = scmp.ne.s32.totalorder %s91, %s107
      %p109 = scmp.eq.s32.totalorder %s17, 0
      %p110 = por %p108, %p109
      %p111 = scmp.le.s32.totalorder 1, %s11
      %p112 = scmp.lt.s32.totalorder %s11, 3
      %p113 = pnand %p111, %p112
      %p114 = pneg %p113
      // Predicated region
      $region9: #{tpu_custom_call.1} parent=5 // pred_check
        _
      $region10: #{tpu_custom_call.1} parent=5 // pred_check_branch
        %116 = sbr.rel (%p113) target = $region12
      $region11: #{tpu_custom_call.1} parent=5 // pred_region
        %s117 = ssub.s32 %s11, 1
        // Predicated region
        $region13: #{tpu_custom_call.1} parent=11 // pred_check
          %p118 = pneg %p75
        $region14: #{tpu_custom_call.1} parent=11 // pred_check_branch
          %120 = sbr.rel (%p118) target = $region16
        $region15: #{tpu_custom_call.1} parent=11 // pred_region
          %p121 = scmp.lt.s32.totalorder %s21, 0
          %s122 = scalar_select %p121, %s21, 0
          %s123 = smul.addr %s122, 4
          %s124 = scalar_lea.vmem %s1, %s123
        $region16: #{tpu_custom_call.1} parent=11 // pred_fallthru
          _
      $region12: #{tpu_custom_call.1} parent=5 // pred_fallthru
        _
      %p125 = scmp.lt.s32.totalorder %s11, 2
      // Predicated region
      $region17: #{tpu_custom_call.1} parent=5 // pred_check
        %p126 = pneg %p125
      $region18: #{tpu_custom_call.1} parent=5 // pred_check_branch
        %128 = sbr.rel (%p126) target = $region20
      $region19: #{tpu_custom_call.1} parent=5 // pred_region
        // Predicated region
        $region21: #{tpu_custom_call.1} parent=19 // pred_check
          %p129 = pneg %p43
        $region22: #{tpu_custom_call.1} parent=19 // pred_check_branch
          %131 = sbr.rel (%p129) target = $region24
        $region23: #{tpu_custom_call.1} parent=19 // pred_region
          %p132 = scmp.lt.s32.totalorder %s18, 1
          %s133 = scalar_select %p132, %s18, 1
          %s134 = smul.addr %s133, 54
          %s135 = smul.addr %s134, 8
          %s136 = scalar_lea.vmem %s0, %s135
        $region24: #{tpu_custom_call.1} parent=19 // pred_fallthru
          _
      $region20: #{tpu_custom_call.1} parent=5 // pred_fallthru
        _
      %p137 = scmp.le.s32.totalorder 1, %s11
      %p138 = scmp.lt.s32.totalorder %s11, 3
      %p139 = pnand %p137, %p138
      %p140 = pneg %p139
      // Predicated region
      $region25: #{tpu_custom_call.1} parent=5 // pred_check
        _
      $region26: #{tpu_custom_call.1} parent=5 // pred_check_branch
        %142 = sbr.rel (%p139) target = $region28
      $region27: #{tpu_custom_call.1} parent=5 // pred_region
        %s143 = ssub.s32 %s11, 1
        %p144 = scmp.lt.s32.totalorder %s20, 1
        %s145 = scalar_select %p144, %s20, 1
        %s146 = smul.addr %s145, 54
        %s147 = smul.addr %s146, 8
        %s148 = scalar_lea.vmem %s0, %s147
        %p149 = pneg %p49
        %p150 = pneg %p46
        %p151 = scmp.lt.s32.totalorder %s21, 0
        %s152 = scalar_select %p151, %s21, 0
        %s153 = smul.addr %s152, 4
        %s154 = scalar_lea.vmem %s1, %s153
        %p155 = pneg %p75
        %p156 = pneg %p72
        %p157 = pneg %p103
        %p158 = pneg %p100
        %s159 = sand.u32 %s90, 1
        %s160 = scalar_lea.sflag [#allocation3], %s159
        %s161 = sand.u32 %s90, 1
        %s162 = smul.addr %s161, 256
        %s163 = scalar_lea.vmem [#allocation2], %s162
        %p164 = scmp.lt.s32.totalorder %s20, 1
        %s165 = scalar_select %p164, %s20, 1
        %s166 = smul.addr %s165, 54
        %s167 = smul.addr %s166, 8
        %s168 = scalar_lea.vmem %s0, %s167
        %p169 = scmp.lt.s32.totalorder %s21, 0
        %s170 = scalar_select %p169, %s21, 0
        %s171 = smul.addr %s170, 4
        %s172 = scalar_lea.vmem %s1, %s171
        %s173 = smul.u32 32, %s20
        %v175 = vld [vmem:[%s168] sm:$0xff]
        %v176 = vld [vmem:[%s168 + $0x8] sm:$0xff]
        %v177 = vld [vmem:[%s168 + $0x18] sm:$0xff]
        %v178 = vld [vmem:[%s168 + $0x20] sm:$0xff]
        %v179 = vld [vmem:[%s168 + $0x30] sm:$0xff]
        %v180 = vld [vmem:[%s168 + $0x38] sm:$0xff]
        %v181 = vld [vmem:[%s168 + $0x48] sm:$0xff]
        %v182 = vld [vmem:[%s168 + $0x50] sm:$0xff]
        %v183 = vld [vmem:[%s168 + $0x60] sm:$0xff]
        %v184 = vld [vmem:[%s168 + $0x68] sm:$0xff]
        %v185 = vld [vmem:[%s168 + $0x78] sm:$0xff]
        %v186 = vld [vmem:[%s168 + $0x80] sm:$0xff]
        %v187 = vld [vmem:[%s168 + $0x90] sm:$0xff]
        %v188 = vld [vmem:[%s168 + $0x98] sm:$0xff]
        %v189 = vld [vmem:[%s168 + $0xa8] sm:$0xff]
        %v190 = vld [vmem:[%s168 + $0xb0] sm:$0xff]
        %v191 = vld [vmem:[%s168 + $0xc0] sm:$0xff]
        %v192 = vld [vmem:[%s168 + $0xc8] sm:$0xff]
        %v193 = vld [vmem:[%s168 + $0xd8] sm:$0xff]
        %v194 = vld [vmem:[%s168 + $0xe0] sm:$0xff]
        %v195 = vld [vmem:[%s168 + $0xf0] sm:$0xff]
        %v196 = vld [vmem:[%s168 + $0xf8] sm:$0xff]
        %v197 = vld [vmem:[%s168 + $0x108] sm:$0xff]
        %v198 = vld [vmem:[%s168 + $0x110] sm:$0xff]
        %v199 = vld [vmem:[%s168 + $0x120] sm:$0xff]
        %v200 = vld [vmem:[%s168 + $0x128] sm:$0xff]
        %v201 = vld [vmem:[%s168 + $0x138] sm:$0xff]
        %v202 = vld [vmem:[%s168 + $0x140] sm:$0xff]
        %v203 = vld [vmem:[%s168 + $0x150] sm:$0xff]
        %v204 = vld [vmem:[%s168 + $0x158] sm:$0xff]
        %v205 = vld [vmem:[%s168 + $0x168] sm:$0xff]
        %v206 = vld [vmem:[%s168 + $0x170] sm:$0xff]
        %v207 = vpack.c.bf16 %v176, %v175
        %v208 = vpack.c.bf16 %v178, %v177
        %v209 = vpack.c.bf16 %v180, %v179
        %v210 = vpack.c.bf16 %v182, %v181
        %v211 = vpack.c.bf16 %v184, %v183
        %v212 = vpack.c.bf16 %v186, %v185
        %v213 = vpack.c.bf16 %v188, %v187
        %v214 = vpack.c.bf16 %v190, %v189
        %v215 = vpack.c.bf16 %v192, %v191
        %v216 = vpack.c.bf16 %v194, %v193
        %v217 = vpack.c.bf16 %v196, %v195
        %v218 = vpack.c.bf16 %v198, %v197
        %v219 = vpack.c.bf16 %v200, %v199
        %v220 = vpack.c.bf16 %v202, %v201
        %v221 = vpack.c.bf16 %v204, %v203
        %v222 = vpack.c.bf16 %v206, %v205
        %v223 = vld [vmem:[%s172] sm:$0xf]
        %v224 = vld [vmem:[%s172 + $0x4] sm:$0xf]
        %v225 = vld [vmem:[%s172 + $0x8] sm:$0xf]
        %v226 = vld [vmem:[%s172 + $0xc] sm:$0xf]
        %v227 = vld [vmem:[%s172 + $0x10] sm:$0xf]
        %v228 = vld [vmem:[%s172 + $0x14] sm:$0xf]
        %v229 = vld [vmem:[%s172 + $0x18] sm:$0xf]
        %v230 = vld [vmem:[%s172 + $0x1c] sm:$0xf]
        %v231 = vld [vmem:[%s172 + $0x20] sm:$0xf]
        %v232 = vld [vmem:[%s172 + $0x24] sm:$0xf]
        %v233 = vld [vmem:[%s172 + $0x28] sm:$0xf]
        %v234 = vld [vmem:[%s172 + $0x2c] sm:$0xf]
        %v235 = vld [vmem:[%s172 + $0x30] sm:$0xf]
        %v236 = vld [vmem:[%s172 + $0x34] sm:$0xf]
        %v237 = vld [vmem:[%s172 + $0x38] sm:$0xf]
        %v238 = vld [vmem:[%s172 + $0x3c] sm:$0xf]
        %v239 = vld [vmem:[%s168 + $0x1] sm:$0xff]
        %v240 = vld [vmem:[%s168 + $0x9] sm:$0xff]
        %v241 = vld [vmem:[%s168 + $0x19] sm:$0xff]
        %v242 = vld [vmem:[%s168 + $0x21] sm:$0xff]
        %v243 = vld [vmem:[%s168 + $0x31] sm:$0xff]
        %v244 = vld [vmem:[%s168 + $0x39] sm:$0xff]
        %v245 = vld [vmem:[%s168 + $0x49] sm:$0xff]
        %v246 = vld [vmem:[%s168 + $0x51] sm:$0xff]
        %v247 = vld [vmem:[%s168 + $0x61] sm:$0xff]
        %v248 = vld [vmem:[%s168 + $0x69] sm:$0xff]
        %v249 = vld [vmem:[%s168 + $0x79] sm:$0xff]
        %v250 = vld [vmem:[%s168 + $0x81] sm:$0xff]
        %v251 = vld [vmem:[%s168 + $0x91] sm:$0xff]
        %v252 = vld [vmem:[%s168 + $0x99] sm:$0xff]
        %v253 = vld [vmem:[%s168 + $0xa9] sm:$0xff]
        %v254 = vld [vmem:[%s168 + $0xb1] sm:$0xff]
        %v255 = vld [vmem:[%s168 + $0xc1] sm:$0xff]
        %v256 = vld [vmem:[%s168 + $0xc9] sm:$0xff]
        %v257 = vld [vmem:[%s168 + $0xd9] sm:$0xff]
        %v258 = vld [vmem:[%s168 + $0xe1] sm:$0xff]
        %v259 = vld [vmem:[%s168 + $0xf1] sm:$0xff]
        %v260 = vld [vmem:[%s168 + $0xf9] sm:$0xff]
        %v261 = vld [vmem:[%s168 + $0x109] sm:$0xff]
        %v262 = vld [vmem:[%s168 + $0x111] sm:$0xff]
        %v263 = vld [vmem:[%s168 + $0x121] sm:$0xff]
        %v264 = vld [vmem:[%s168 + $0x129] sm:$0xff]
        %v265 = vld [vmem:[%s168 + $0x139] sm:$0xff]
        %v266 = vld [vmem:[%s168 + $0x141] sm:$0xff]
        %v267 = vld [vmem:[%s168 + $0x151] sm:$0xff]
        %v268 = vld [vmem:[%s168 + $0x159] sm:$0xff]
        %v269 = vld [vmem:[%s168 + $0x169] sm:$0xff]
        %v270 = vld [vmem:[%s168 + $0x171] sm:$0xff]
        %v271 = vpack.c.bf16 %v240, %v239
        %v272 = vpack.c.bf16 %v242, %v241
        %v273 = vpack.c.bf16 %v244, %v243
        %v274 = vpack.c.bf16 %v246, %v245
        %v275 = vpack.c.bf16 %v248, %v247
        %v276 = vpack.c.bf16 %v250, %v249
        %v277 = vpack.c.bf16 %v252, %v251
        %v278 = vpack.c.bf16 %v254, %v253
        %v279 = vpack.c.bf16 %v256, %v255
        %v280 = vpack.c.bf16 %v258, %v257
        %v281 = vpack.c.bf16 %v260, %v259
        %v282 = vpack.c.bf16 %v262, %v261
        %v283 = vpack.c.bf16 %v264, %v263
        %v284 = vpack.c.bf16 %v266, %v265
        %v285 = vpack.c.bf16 %v268, %v267
        %v286 = vpack.c.bf16 %v270, %v269
        %s287 = scalar_lea.vmem %s172, 64
        %v288 = vld [vmem:[%s287] sm:$0xf]
        %v289 = vld [vmem:[%s287 + $0x4] sm:$0xf]
        %v290 = vld [vmem:[%s287 + $0x8] sm:$0xf]
        %v291 = vld [vmem:[%s287 + $0xc] sm:$0xf]
        %v292 = vld [vmem:[%s287 + $0x10] sm:$0xf]
        %v293 = vld [vmem:[%s287 + $0x14] sm:$0xf]
        %v294 = vld [vmem:[%s287 + $0x18] sm:$0xf]
        %v295 = vld [vmem:[%s287 + $0x1c] sm:$0xf]
        %v296 = vld [vmem:[%s287 + $0x20] sm:$0xf]
        %v297 = vld [vmem:[%s287 + $0x24] sm:$0xf]
        %v298 = vld [vmem:[%s287 + $0x28] sm:$0xf]
        %v299 = vld [vmem:[%s287 + $0x2c] sm:$0xf]
        %v300 = vld [vmem:[%s287 + $0x30] sm:$0xf]
        %v301 = vld [vmem:[%s287 + $0x34] sm:$0xf]
        %v302 = vld [vmem:[%s287 + $0x38] sm:$0xf]
        %v303 = vld [vmem:[%s287 + $0x3c] sm:$0xf]
        %v320 = vunpack.c.l.b16 %v288
        %v321 = vunpack.c.l.b16 %v289
        %v322 = vunpack.c.l.b16 %v290
        %v323 = vunpack.c.l.b16 %v291
        %v324 = vunpack.c.l.b16 %v292
        %v325 = vunpack.c.l.b16 %v293
        %v326 = vunpack.c.l.b16 %v294
        %v327 = vunpack.c.l.b16 %v295
        %v328 = vunpack.c.l.b16 %v296
        %v329 = vunpack.c.l.b16 %v297
        %v330 = vunpack.c.l.b16 %v298
        %v331 = vunpack.c.l.b16 %v299
        %v332 = vunpack.c.l.b16 %v300
        %v333 = vunpack.c.l.b16 %v301
        %v334 = vunpack.c.l.b16 %v302
        %v335 = vunpack.c.l.b16 %v303
        %v336 = vpack.c.b16 %v321, %v320
        %v337 = vpack.c.b16 %v323, %v322
        %v338 = vpack.c.b16 %v325, %v324
        %v339 = vpack.c.b16 %v327, %v326
        %v340 = vpack.c.b16 %v329, %v328
        %v341 = vpack.c.b16 %v331, %v330
        %v342 = vpack.c.b16 %v333, %v332
        %v343 = vpack.c.b16 %v335, %v334
        %352 = vmatprep.subr.bf16.mxu0 0
        %353 = vmatpush1.bf16.msra.mxu0 %v336
        %354 = vmatprep.subr.bf16.mxu0 0
        %355 = vmatpush1.bf16.msra.mxu0 %v337
        %356 = vmatprep.subr.bf16.mxu0 0
        %357 = vmatpush1.bf16.msra.mxu0 %v338
        %358 = vmatprep.subr.bf16.mxu0 0
        %359 = vmatpush1.bf16.msra.mxu0 %v339
        %360 = vmatprep.subr.bf16.mxu0 0
        %361 = vmatpush1.bf16.msra.mxu0 %v340
        %362 = vmatprep.subr.bf16.mxu0 0
        %363 = vmatpush1.bf16.msra.mxu0 %v341
        %364 = vmatprep.subr.bf16.mxu0 0
        %365 = vmatpush1.bf16.msra.mxu0 %v342
        %366 = vmatprep.subr.bf16.mxu0 0
        %367 = vmatpush1.bf16.msra.mxu0 %v343
        %368 = vmatprep.subr.bf16.mxu0 0
        %369 = vmatpush1.bf16.msra.mxu0 0
        %370 = vmatprep.subr.bf16.mxu0 0
        %371 = vmatpush1.bf16.msra.mxu0 0
        %372 = vmatprep.subr.bf16.mxu0 0
        %373 = vmatpush1.bf16.msra.mxu0 0
        %374 = vmatprep.subr.bf16.mxu0 0
        %375 = vmatpush1.bf16.msra.mxu0 0
        %376 = vmatprep.subr.bf16.mxu0 0
        %377 = vmatpush1.bf16.msra.mxu0 0
        %378 = vmatprep.subr.bf16.mxu0 0
        %379 = vmatpush1.bf16.msra.mxu0 0
        %380 = vmatprep.subr.bf16.mxu0 0
        %381 = vmatpush1.bf16.msra.mxu0 0
        %382 = vmatprep.subr.bf16.mxu0 0
        %383 = vmatpush1.bf16.msra.mxu0 0
        %384 = vmatprep.mubr.bf16.mxu0 0
        %385 = vmatmul.mubr.bf16.gmra.mrb[0].mxu0 %v271
        %v386 = vpop.f32.mrb[0].mxu0
        %v387 = vadd.f32 0.0, %v386
        %v388 = vpop.f32.mrb[0].mxu0
        %v389 = vpop.f32.mrb[0].mxu0
        %v390 = vadd.f32 0.0, %v389
        %v391 = vpop.f32.mrb[0].mxu0
        %392 = vmatprep.mubr.bf16.mxu0 0
        %393 = vmatmul.mubr.bf16.gmra.mrb[0].mxu0 %v272
        %v394 = vpop.f32.mrb[0].mxu0
        %v395 = vadd.f32 0.0, %v394
        %v396 = vpop.f32.mrb[0].mxu0
        %v397 = vpop.f32.mrb[0].mxu0
        %v398 = vadd.f32 0.0, %v397
        %v399 = vpop.f32.mrb[0].mxu0
        %400 = vmatprep.mubr.bf16.mxu0 0
        %401 = vmatmul.mubr.bf16.gmra.mrb[0].mxu0 %v273
        %v402 = vpop.f32.mrb[0].mxu0
        %v403 = vadd.f32 0.0, %v402
        %v404 = vpop.f32.mrb[0].mxu0
        %v405 = vpop.f32.mrb[0].mxu0
        %v406 = vadd.f32 0.0, %v405
        %v407 = vpop.f32.mrb[0].mxu0
        %408 = vmatprep.mubr.bf16.mxu0 0
        %409 = vmatmul.mubr.bf16.gmra.mrb[0].mxu0 %v274
        %v410 = vpop.f32.mrb[0].mxu0
        %v411 = vadd.f32 0.0, %v410
        %v412 = vpop.f32.mrb[0].mxu0
        %v413 = vpop.f32.mrb[0].mxu0
        %v414 = vadd.f32 0.0, %v413
        %v415 = vpop.f32.mrb[0].mxu0
        %416 = vmatprep.mubr.bf16.mxu0 0
        %417 = vmatmul.mubr.bf16.gmra.mrb[0].mxu0 %v275
        %v418 = vpop.f32.mrb[0].mxu0
        %v419 = vadd.f32 0.0, %v418
        %v420 = vpop.f32.mrb[0].mxu0
        %v421 = vpop.f32.mrb[0].mxu0
        %v422 = vadd.f32 0.0, %v421
        %v423 = vpop.f32.mrb[0].mxu0
        %424 = vmatprep.mubr.bf16.mxu0 0
        %425 = vmatmul.mubr.bf16.gmra.mrb[0].mxu0 %v276
        %v426 = vpop.f32.mrb[0].mxu0
        %v427 = vadd.f32 0.0, %v426
        %v428 = vpop.f32.mrb[0].mxu0
        %v429 = vpop.f32.mrb[0].mxu0
        %v430 = vadd.f32 0.0, %v429
        %v431 = vpop.f32.mrb[0].mxu0
        %432 = vmatprep.mubr.bf16.mxu0 0
        %433 = vmatmul.mubr.bf16.gmra.mrb[0].mxu0 %v277
        %v434 = vpop.f32.mrb[0].mxu0
        %v435 = vadd.f32 0.0, %v434
        %v436 = vpop.f32.mrb[0].mxu0
        %v437 = vpop.f32.mrb[0].mxu0
        %v438 = vadd.f32 0.0, %v437
        %v439 = vpop.f32.mrb[0].mxu0
        %440 = vmatprep.mubr.bf16.mxu0 0
        %441 = vmatmul.mubr.bf16.gmra.mrb[0].mxu0 %v278
        %v442 = vpop.f32.mrb[0].mxu0
        %v443 = vadd.f32 0.0, %v442
        %v444 = vpop.f32.mrb[0].mxu0
        %v445 = vpop.f32.mrb[0].mxu0
        %v446 = vadd.f32 0.0, %v445
        %v447 = vpop.f32.mrb[0].mxu0
        %448 = vmatprep.mubr.bf16.mxu0 0
        %449 = vmatmul.mubr.bf16.gmra.mrb[0].mxu0 %v279
        %v450 = vpop.f32.mrb[0].mxu0
        %v451 = vadd.f32 0.0, %v450
        %v452 = vpop.f32.mrb[0].mxu0
        %v453 = vpop.f32.mrb[0].mxu0
        %v454 = vadd.f32 0.0, %v453
        %v455 = vpop.f32.mrb[0].mxu0
        %456 = vmatprep.mubr.bf16.mxu0 0
        %457 = vmatmul.mubr.bf16.gmra.mrb[0].mxu0 %v280
        %v458 = vpop.f32.mrb[0].mxu0
        %v459 = vadd.f32 0.0, %v458
        %v460 = vpop.f32.mrb[0].mxu0
        %v461 = vpop.f32.mrb[0].mxu0
        %v462 = vadd.f32 0.0, %v461
        %v463 = vpop.f32.mrb[0].mxu0
        %464 = vmatprep.mubr.bf16.mxu0 0
        %465 = vmatmul.mubr.bf16.gmra.mrb[0].mxu0 %v281
        %v466 = vpop.f32.mrb[0].mxu0
        %v467 = vadd.f32 0.0, %v466
        %v468 = vpop.f32.mrb[0].mxu0
        %v469 = vpop.f32.mrb[0].mxu0
        %v470 = vadd.f32 0.0, %v469
        %v471 = vpop.f32.mrb[0].mxu0
        %472 = vmatprep.mubr.bf16.mxu0 0
        %473 = vmatmul.mubr.bf16.gmra.mrb[0].mxu0 %v282
        %v474 = vpop.f32.mrb[0].mxu0
        %v475 = vadd.f32 0.0, %v474
        %v476 = vpop.f32.mrb[0].mxu0
        %v477 = vpop.f32.mrb[0].mxu0
        %v478 = vadd.f32 0.0, %v477
        %v479 = vpop.f32.mrb[0].mxu0
        %480 = vmatprep.mubr.bf16.mxu0 0
        %481 = vmatmul.mubr.bf16.gmra.mrb[0].mxu0 %v283
        %v482 = vpop.f32.mrb[0].mxu0
        %v483 = vadd.f32 0.0, %v482
        %v484 = vpop.f32.mrb[0].mxu0
        %v485 = vpop.f32.mrb[0].mxu0
        %v486 = vadd.f32 0.0, %v485
        %v487 = vpop.f32.mrb[0].mxu0
        %488 = vmatprep.mubr.bf16.mxu0 0
        %489 = vmatmul.mubr.bf16.gmra.mrb[0].mxu0 %v284
        %v490 = vpop.f32.mrb[0].mxu0
        %v491 = vadd.f32 0.0, %v490
        %v492 = vpop.f32.mrb[0].mxu0
        %v493 = vpop.f32.mrb[0].mxu0
        %v494 = vadd.f32 0.0, %v493
        %v495 = vpop.f32.mrb[0].mxu0
        %496 = vmatprep.mubr.bf16.mxu0 0
        %497 = vmatmul.mubr.bf16.gmra.mrb[0].mxu0 %v285
        %v498 = vpop.f32.mrb[0].mxu0
        %v499 = vadd.f32 0.0, %v498
        %v500 = vpop.f32.mrb[0].mxu0
        %v501 = vpop.f32.mrb[0].mxu0
        %v502 = vadd.f32 0.0, %v501
        %v503 = vpop.f32.mrb[0].mxu0
        %504 = vmatprep.mubr.bf16.mxu0 0
        %505 = vmatmul.mubr.bf16.gmra.mrb[0].mxu0 %v286
        %v506 = vpop.f32.mrb[0].mxu0
        %v507 = vadd.f32 0.0, %v506
        %v508 = vpop.f32.mrb[0].mxu0
        %v509 = vpop.f32.mrb[0].mxu0
        %v510 = vadd.f32 0.0, %v509
        %v511 = vpop.f32.mrb[0].mxu0
        %512 = vdwg.mxu0
        %v529 = vunpack.c.l.b16 %v223
        %v530 = vunpack.c.l.b16 %v224
        %v531 = vunpack.c.l.b16 %v225
        %v532 = vunpack.c.l.b16 %v226
        %v533 = vunpack.c.l.b16 %v227
        %v534 = vunpack.c.l.b16 %v228
        %v535 = vunpack.c.l.b16 %v229
        %v536 = vunpack.c.l.b16 %v230
        %v537 = vunpack.c.l.b16 %v231
        %v538 = vunpack.c.l.b16 %v232
        %v539 = vunpack.c.l.b16 %v233
        %v540 = vunpack.c.l.b16 %v234
        %v541 = vunpack.c.l.b16 %v235
        %v542 = vunpack.c.l.b16 %v236
        %v543 = vunpack.c.l.b16 %v237
        %v544 = vunpack.c.l.b16 %v238
        %v545 = vpack.c.b16 %v530, %v529
        %v546 = vpack.c.b16 %v532, %v531
        %v547 = vpack.c.b16 %v534, %v533
        %v548 = vpack.c.b16 %v536, %v535
        %v549 = vpack.c.b16 %v538, %v537
        %v550 = vpack.c.b16 %v540, %v539
        %v551 = vpack.c.b16 %v542, %v541
        %v552 = vpack.c.b16 %v544, %v543
        %561 = vmatprep.subr.bf16.mxu0 0
        %562 = vmatpush1.bf16.msra.mxu0 %v545
        %563 = vmatprep.subr.bf16.mxu0 0
        %564 = vmatpush1.bf16.msra.mxu0 %v546
        %565 = vmatprep.subr.bf16.mxu0 0
        %566 = vmatpush1.bf16.msra.mxu0 %v547
        %567 = vmatprep.subr.bf16.mxu0 0
        %568 = vmatpush1.bf16.msra.mxu0 %v548
        %569 = vmatprep.subr.bf16.mxu0 0
        %570 = vmatpush1.bf16.msra.mxu0 %v549
        %571 = vmatprep.subr.bf16.mxu0 0
        %572 = vmatpush1.bf16.msra.mxu0 %v550
        %573 = vmatprep.subr.bf16.mxu0 0
        %574 = vmatpush1.bf16.msra.mxu0 %v551
        %575 = vmatprep.subr.bf16.mxu0 0
        %576 = vmatpush1.bf16.msra.mxu0 %v552
        %577 = vmatprep.subr.bf16.mxu0 0
        %578 = vmatpush1.bf16.msra.mxu0 0
        %579 = vmatprep.subr.bf16.mxu0 0
        %580 = vmatpush1.bf16.msra.mxu0 0
        %581 = vmatprep.subr.bf16.mxu0 0
        %582 = vmatpush1.bf16.msra.mxu0 0
        %583 = vmatprep.subr.bf16.mxu0 0
        %584 = vmatpush1.bf16.msra.mxu0 0
        %585 = vmatprep.subr.bf16.mxu0 0
        %586 = vmatpush1.bf16.msra.mxu0 0
        %587 = vmatprep.subr.bf16.mxu0 0
        %588 = vmatpush1.bf16.msra.mxu0 0
        %589 = vmatprep.subr.bf16.mxu0 0
        %590 = vmatpush1.bf16.msra.mxu0 0
        %591 = vmatprep.subr.bf16.mxu0 0
        %592 = vmatpush1.bf16.msra.mxu0 0
        %593 = vmatprep.mubr.bf16.mxu0 0
        %594 = vmatmul.mubr.bf16.gmra.mrb[0].mxu0 %v207
        %v595 = vpop.f32.mrb[0].mxu0
        %v596 = vadd.f32 %v387, %v595
        %v597 = vpop.f32.mrb[0].mxu0
        %v598 = vpop.f32.mrb[0].mxu0
        %v599 = vadd.f32 %v390, %v598
        %v600 = vpop.f32.mrb[0].mxu0
        %601 = vmatprep.mubr.bf16.mxu0 0
        %602 = vmatmul.mubr.bf16.gmra.mrb[0].mxu0 %v208
        %v603 = vpop.f32.mrb[0].mxu0
        %v604 = vadd.f32 %v395, %v603
        %v605 = vpop.f32.mrb[0].mxu0
        %v606 = vpop.f32.mrb[0].mxu0
        %v607 = vadd.f32 %v398, %v606
        %v608 = vpop.f32.mrb[0].mxu0
        %609 = vmatprep.mubr.bf16.mxu0 0
        %610 = vmatmul.mubr.bf16.gmra.mrb[0].mxu0 %v209
        %v611 = vpop.f32.mrb[0].mxu0
        %v612 = vadd.f32 %v403, %v611
        %v613 = vpop.f32.mrb[0].mxu0
        %v614 = vpop.f32.mrb[0].mxu0
        %v615 = vadd.f32 %v406, %v614
        %v616 = vpop.f32.mrb[0].mxu0
        %617 = vmatprep.mubr.bf16.mxu0 0
        %618 = vmatmul.mubr.bf16.gmra.mrb[0].mxu0 %v210
        %v619 = vpop.f32.mrb[0].mxu0
        %v620 = vadd.f32 %v411, %v619
        %v621 = vpop.f32.mrb[0].mxu0
        %v622 = vpop.f32.mrb[0].mxu0
        %v623 = vadd.f32 %v414, %v622
        %v624 = vpop.f32.mrb[0].mxu0
        %625 = vmatprep.mubr.bf16.mxu0 0
        %626 = vmatmul.mubr.bf16.gmra.mrb[0].mxu0 %v211
        %v627 = vpop.f32.mrb[0].mxu0
        %v628 = vadd.f32 %v419, %v627
        %v629 = vpop.f32.mrb[0].mxu0
        %v630 = vpop.f32.mrb[0].mxu0
        %v631 = vadd.f32 %v422, %v630
        %v632 = vpop.f32.mrb[0].mxu0
        %633 = vmatprep.mubr.bf16.mxu0 0
        %634 = vmatmul.mubr.bf16.gmra.mrb[0].mxu0 %v212
        %v635 = vpop.f32.mrb[0].mxu0
        %v636 = vadd.f32 %v427, %v635
        %v637 = vpop.f32.mrb[0].mxu0
        %v638 = vpop.f32.mrb[0].mxu0
        %v639 = vadd.f32 %v430, %v638
        %v640 = vpop.f32.mrb[0].mxu0
        %641 = vmatprep.mubr.bf16.mxu0 0
        %642 = vmatmul.mubr.bf16.gmra.mrb[0].mxu0 %v213
        %v643 = vpop.f32.mrb[0].mxu0
        %v644 = vadd.f32 %v435, %v643
        %v645 = vpop.f32.mrb[0].mxu0
        %v646 = vpop.f32.mrb[0].mxu0
        %v647 = vadd.f32 %v438, %v646
        %v648 = vpop.f32.mrb[0].mxu0
        %649 = vmatprep.mubr.bf16.mxu0 0
        %650 = vmatmul.mubr.bf16.gmra.mrb[0].mxu0 %v214
        %v651 = vpop.f32.mrb[0].mxu0
        %v652 = vadd.f32 %v443, %v651
        %v653 = vpop.f32.mrb[0].mxu0
        %v654 = vpop.f32.mrb[0].mxu0
        %v655 = vadd.f32 %v446, %v654
        %v656 = vpop.f32.mrb[0].mxu0
        %657 = vmatprep.mubr.bf16.mxu0 0
        %658 = vmatmul.mubr.bf16.gmra.mrb[0].mxu0 %v215
        %v659 = vpop.f32.mrb[0].mxu0
        %v660 = vadd.f32 %v451, %v659
        %v661 = vpop.f32.mrb[0].mxu0
        %v662 = vpop.f32.mrb[0].mxu0
        %v663 = vadd.f32 %v454, %v662
        %v664 = vpop.f32.mrb[0].mxu0
        %665 = vmatprep.mubr.bf16.mxu0 0
        %666 = vmatmul.mubr.bf16.gmra.mrb[0].mxu0 %v216
        %v667 = vpop.f32.mrb[0].mxu0
        %v668 = vadd.f32 %v459, %v667
        %v669 = vpop.f32.mrb[0].mxu0
        %v670 = vpop.f32.mrb[0].mxu0
        %v671 = vadd.f32 %v462, %v670
        %v672 = vpop.f32.mrb[0].mxu0
        %673 = vmatprep.mubr.bf16.mxu0 0
        %674 = vmatmul.mubr.bf16.gmra.mrb[0].mxu0 %v217
        %v675 = vpop.f32.mrb[0].mxu0
        %v676 = vadd.f32 %v467, %v675
        %v677 = vpop.f32.mrb[0].mxu0
        %v678 = vpop.f32.mrb[0].mxu0
        %v679 = vadd.f32 %v470, %v678
        %v680 = vpop.f32.mrb[0].mxu0
        %681 = vmatprep.mubr.bf16.mxu0 0
        %682 = vmatmul.mubr.bf16.gmra.mrb[0].mxu0 %v218
        %v683 = vpop.f32.mrb[0].mxu0
        %v684 = vadd.f32 %v475, %v683
        %v685 = vpop.f32.mrb[0].mxu0
        %v686 = vpop.f32.mrb[0].mxu0
        %v687 = vadd.f32 %v478, %v686
        %v688 = vpop.f32.mrb[0].mxu0
        %689 = vmatprep.mubr.bf16.mxu0 0
        %690 = vmatmul.mubr.bf16.gmra.mrb[0].mxu0 %v219
        %v691 = vpop.f32.mrb[0].mxu0
        %v692 = vadd.f32 %v483, %v691
        %v693 = vpop.f32.mrb[0].mxu0
        %v694 = vpop.f32.mrb[0].mxu0
        %v695 = vadd.f32 %v486, %v694
        %v696 = vpop.f32.mrb[0].mxu0
        %697 = vmatprep.mubr.bf16.mxu0 0
        %698 = vmatmul.mubr.bf16.gmra.mrb[0].mxu0 %v220
        %v699 = vpop.f32.mrb[0].mxu0
        %v700 = vadd.f32 %v491, %v699
        %v701 = vpop.f32.mrb[0].mxu0
        %v702 = vpop.f32.mrb[0].mxu0
        %v703 = vadd.f32 %v494, %v702
        %v704 = vpop.f32.mrb[0].mxu0
        %705 = vmatprep.mubr.bf16.mxu0 0
        %706 = vmatmul.mubr.bf16.gmra.mrb[0].mxu0 %v221
        %v707 = vpop.f32.mrb[0].mxu0
        %v708 = vadd.f32 %v499, %v707
        %v709 = vpop.f32.mrb[0].mxu0
        %v710 = vpop.f32.mrb[0].mxu0
        %v711 = vadd.f32 %v502, %v710
        %v712 = vpop.f32.mrb[0].mxu0
        %713 = vmatprep.mubr.bf16.mxu0 0
        %714 = vmatmul.mubr.bf16.gmra.mrb[0].mxu0 %v222
        %v715 = vpop.f32.mrb[0].mxu0
        %v716 = vadd.f32 %v507, %v715
        %v717 = vpop.f32.mrb[0].mxu0
        %v718 = vpop.f32.mrb[0].mxu0
        %v719 = vadd.f32 %v510, %v718
        %v720 = vpop.f32.mrb[0].mxu0
        %721 = vdwg.mxu0
        %v722 = vld [vmem:[%s168 + $0x2] sm:$0xff]
        %v723 = vld [vmem:[%s168 + $0xa] sm:$0xff]
        %v724 = vld [vmem:[%s168 + $0x1a] sm:$0xff]
        %v725 = vld [vmem:[%s168 + $0x22] sm:$0xff]
        %v726 = vld [vmem:[%s168 + $0x32] sm:$0xff]
        %v727 = vld [vmem:[%s168 + $0x3a] sm:$0xff]
        %v728 = vld [vmem:[%s168 + $0x4a] sm:$0xff]
        %v729 = vld [vmem:[%s168 + $0x52] sm:$0xff]
        %v730 = vld [vmem:[%s168 + $0x62] sm:$0xff]
        %v731 = vld [vmem:[%s168 + $0x6a] sm:$0xff]
        %v732 = vld [vmem:[%s168 + $0x7a] sm:$0xff]
        %v733 = vld [vmem:[%s168 + $0x82] sm:$0xff]
        %v734 = vld [vmem:[%s168 + $0x92] sm:$0xff]
        %v735 = vld [vmem:[%s168 + $0x9a] sm:$0xff]
        %v736 = vld [vmem:[%s168 + $0xaa] sm:$0xff]
        %v737 = vld [vmem:[%s168 + $0xb2] sm:$0xff]
        %v738 = vld [vmem:[%s168 + $0xc2] sm:$0xff]
        %v739 = vld [vmem:[%s168 + $0xca] sm:$0xff]
        %v740 = vld [vmem:[%s168 + $0xda] sm:$0xff]
        %v741 = vld [vmem:[%s168 + $0xe2] sm:$0xff]
        %v742 = vld [vmem:[%s168 + $0xf2] sm:$0xff]
        %v743 = vld [vmem:[%s168 + $0xfa] sm:$0xff]
        %v744 = vld [vmem:[%s168 + $0x10a] sm:$0xff]
        %v745 = vld [vmem:[%s168 + $0x112] sm:$0xff]
        %v746 = vld [vmem:[%s168 + $0x122] sm:$0xff]
        %v747 = vld [vmem:[%s168 + $0x12a] sm:$0xff]
        %v748 = vld [vmem:[%s168 + $0x13a] sm:$0xff]
        %v749 = vld [vmem:[%s168 + $0x142] sm:$0xff]
        %v750 = vld [vmem:[%s168 + $0x152] sm:$0xff]
        %v751 = vld [vmem:[%s168 + $0x15a] sm:$0xff]
        %v752 = vld [vmem:[%s168 + $0x16a] sm:$0xff]
        %v753 = vld [vmem:[%s168 + $0x172] sm:$0xff]
        %v754 = vpack.c.bf16 %v723, %v722
        %v755 = vpack.c.bf16 %v725, %v724
        %v756 = vpack.c.bf16 %v727, %v726
        %v757 = vpack.c.bf16 %v729, %v728
        %v758 = vpack.c.bf16 %v731, %v730
        %v759 = vpack.c.bf16 %v733, %v732
        %v760 = vpack.c.bf16 %v735, %v734
        %v761 = vpack.c.bf16 %v737, %v736
        %v762 = vpack.c.bf16 %v739, %v738
        %v763 = vpack.c.bf16 %v741, %v740
        %v764 = vpack.c.bf16 %v743, %v742
        %v765 = vpack.c.bf16 %v745, %v744
        %v766 = vpack.c.bf16 %v747, %v746
        %v767 = vpack.c.bf16 %v749, %v748
        %v768 = vpack.c.bf16 %v751, %v750
        %v769 = vpack.c.bf16 %v753, %v752
        %s770 = scalar_lea.vmem %s172, 128
        %v771 = vld [vmem:[%s770] sm:$0xf]
        %v772 = vld [vmem:[%s770 + $0x4] sm:$0xf]
        %v773 = vld [vmem:[%s770 + $0x8] sm:$0xf]
        %v774 = vld [vmem:[%s770 + $0xc] sm:$0xf]
        %v775 = vld [vmem:[%s770 + $0x10] sm:$0xf]
        %v776 = vld [vmem:[%s770 + $0x14] sm:$0xf]
        %v777 = vld [vmem:[%s770 + $0x18] sm:$0xf]
        %v778 = vld [vmem:[%s770 + $0x1c] sm:$0xf]
        %v779 = vld [vmem:[%s770 + $0x20] sm:$0xf]
        %v780 = vld [vmem:[%s770 + $0x24] sm:$0xf]
        %v781 = vld [vmem:[%s770 + $0x28] sm:$0xf]
        %v782 = vld [vmem:[%s770 + $0x2c] sm:$0xf]
        %v783 = vld [vmem:[%s770 + $0x30] sm:$0xf]
        %v784 = vld [vmem:[%s770 + $0x34] sm:$0xf]
        %v785 = vld [vmem:[%s770 + $0x38] sm:$0xf]
        %v786 = vld [vmem:[%s770 + $0x3c] sm:$0xf]
        %v803 = vunpack.c.l.b16 %v771
        %v804 = vunpack.c.l.b16 %v772
        %v805 = vunpack.c.l.b16 %v773
        %v806 = vunpack.c.l.b16 %v774
        %v807 = vunpack.c.l.b16 %v775
        %v808 = vunpack.c.l.b16 %v776
        %v809 = vunpack.c.l.b16 %v777
        %v810 = vunpack.c.l.b16 %v778
        %v811 = vunpack.c.l.b16 %v779
        %v812 = vunpack.c.l.b16 %v780
        %v813 = vunpack.c.l.b16 %v781
        %v814 = vunpack.c.l.b16 %v782
        %v815 = vunpack.c.l.b16 %v783
        %v816 = vunpack.c.l.b16 %v784
        %v817 = vunpack.c.l.b16 %v785
        %v818 = vunpack.c.l.b16 %v786
        %v819 = vpack.c.b16 %v804, %v803
        %v820 = vpack.c.b16 %v806, %v805
        %v821 = vpack.c.b16 %v808, %v807
        %v822 = vpack.c.b16 %v810, %v809
        %v823 = vpack.c.b16 %v812, %v811
        %v824 = vpack.c.b16 %v814, %v813
        %v825 = vpack.c.b16 %v816, %v815
        %v826 = vpack.c.b16 %v818, %v817
        %835 = vmatprep.subr.bf16.mxu0 0
        %836 = vmatpush1.bf16.msra.mxu0 %v819
        %837 = vmatprep.subr.bf16.mxu0 0
        %838 = vmatpush1.bf16.msra.mxu0 %v820
        %839 = vmatprep.subr.bf16.mxu0 0
        %840 = vmatpush1.bf16.msra.mxu0 %v821
        %841 = vmatprep.subr.bf16.mxu0 0
        %842 = vmatpush1.bf16.msra.mxu0 %v822
        %843 = vmatprep.subr.bf16.mxu0 0
        %844 = vmatpush1.bf16.msra.mxu0 %v823
        %845 = vmatprep.subr.bf16.mxu0 0
        %846 = vmatpush1.bf16.msra.mxu0 %v824
        %847 = vmatprep.subr.bf16.mxu0 0
        %848 = vmatpush1.bf16.msra.mxu0 %v825
        %849 = vmatprep.subr.bf16.mxu0 0
        %850 = vmatpush1.bf16.msra.mxu0 %v826
        %851 = vmatprep.subr.bf16.mxu0 0
        %852 = vmatpush1.bf16.msra.mxu0 0
        %853 = vmatprep.subr.bf16.mxu0 0
        %854 = vmatpush1.bf16.msra.mxu0 0
        %855 = vmatprep.subr.bf16.mxu0 0
        %856 = vmatpush1.bf16.msra.mxu0 0
        %857 = vmatprep.subr.bf16.mxu0 0
        %858 = vmatpush1.bf16.msra.mxu0 0
        %859 = vmatprep.subr.bf16.mxu0 0
        %860 = vmatpush1.bf16.msra.mxu0 0
        %861 = vmatprep.subr.bf16.mxu0 0
        %862 = vmatpush1.bf16.msra.mxu0 0
        %863 = vmatprep.subr.bf16.mxu0 0
        %864 = vmatpush1.bf16.msra.mxu0 0
        %865 = vmatprep.subr.bf16.mxu0 0
        %866 = vmatpush1.bf16.msra.mxu0 0
        %867 = vmatprep.mubr.bf16.mxu0 0
        %868 = vmatmul.mubr.bf16.gmra.mrb[0].mxu0 %v754
        %v869 = vpop.f32.mrb[0].mxu0
        %v870 = vadd.f32 0.0, %v869
        %v871 = vpop.f32.mrb[0].mxu0
        %v872 = vpop.f32.mrb[0].mxu0
        %v873 = vadd.f32 0.0, %v872
        %v874 = vpop.f32.mrb[0].mxu0
        %875 = vmatprep.mubr.bf16.mxu0 0
        %876 = vmatmul.mubr.bf16.gmra.mrb[0].mxu0 %v755
        %v877 = vpop.f32.mrb[0].mxu0
        %v878 = vadd.f32 0.0, %v877
        %v879 = vpop.f32.mrb[0].mxu0
        %v880 = vpop.f32.mrb[0].mxu0
        %v881 = vadd.f32 0.0, %v880
        %v882 = vpop.f32.mrb[0].mxu0
        %883 = vmatprep.mubr.bf16.mxu0 0
        %884 = vmatmul.mubr.bf16.gmra.mrb[0].mxu0 %v756
        %v885 = vpop.f32.mrb[0].mxu0
        %v886 = vadd.f32 0.0, %v885
        %v887 = vpop.f32.mrb[0].mxu0
        %v888 = vpop.f32.mrb[0].mxu0
        %v889 = vadd.f32 0.0, %v888
        %v890 = vpop.f32.mrb[0].mxu0
        %891 = vmatprep.mubr.bf16.mxu0 0
        %892 = vmatmul.mubr.bf16.gmra.mrb[0].mxu0 %v757
        %v893 = vpop.f32.mrb[0].mxu0
        %v894 = vadd.f32 0.0, %v893
        %v895 = vpop.f32.mrb[0].mxu0
        %v896 = vpop.f32.mrb[0].mxu0
        %v897 = vadd.f32 0.0, %v896
        %v898 = vpop.f32.mrb[0].mxu0
        %899 = vmatprep.mubr.bf16.mxu0 0
        %900 = vmatmul.mubr.bf16.gmra.mrb[0].mxu0 %v758
        %v901 = vpop.f32.mrb[0].mxu0
        %v902 = vadd.f32 0.0, %v901
        %v903 = vpop.f32.mrb[0].mxu0
        %v904 = vpop.f32.mrb[0].mxu0
        %v905 = vadd.f32 0.0, %v904
        %v906 = vpop.f32.mrb[0].mxu0
        %907 = vmatprep.mubr.bf16.mxu0 0
        %908 = vmatmul.mubr.bf16.gmra.mrb[0].mxu0 %v759
        %v909 = vpop.f32.mrb[0].mxu0
        %v910 = vadd.f32 0.0, %v909
        %v911 = vpop.f32.mrb[0].mxu0
        %v912 = vpop.f32.mrb[0].mxu0
        %v913 = vadd.f32 0.0, %v912
        %v914 = vpop.f32.mrb[0].mxu0
        %915 = vmatprep.mubr.bf16.mxu0 0
        %916 = vmatmul.mubr.bf16.gmra.mrb[0].mxu0 %v760
        %v917 = vpop.f32.mrb[0].mxu0
        %v918 = vadd.f32 0.0, %v917
        %v919 = vpop.f32.mrb[0].mxu0
        %v920 = vpop.f32.mrb[0].mxu0
        %v921 = vadd.f32 0.0, %v920
        %v922 = vpop.f32.mrb[0].mxu0
        %923 = vmatprep.mubr.bf16.mxu0 0
        %924 = vmatmul.mubr.bf16.gmra.mrb[0].mxu0 %v761
        %v925 = vpop.f32.mrb[0].mxu0
        %v926 = vadd.f32 0.0, %v925
        %v927 = vpop.f32.mrb[0].mxu0
        %v928 = vpop.f32.mrb[0].mxu0
        %v929 = vadd.f32 0.0, %v928
        %v930 = vpop.f32.mrb[0].mxu0
        %931 = vmatprep.mubr.bf16.mxu0 0
        %932 = vmatmul.mubr.bf16.gmra.mrb[0].mxu0 %v762
        %v933 = vpop.f32.mrb[0].mxu0
        %v934 = vadd.f32 0.0, %v933
        %v935 = vpop.f32.mrb[0].mxu0
        %v936 = vpop.f32.mrb[0].mxu0
        %v937 = vadd.f32 0.0, %v936
        %v938 = vpop.f32.mrb[0].mxu0
        %939 = vmatprep.mubr.bf16.mxu0 0
        %940 = vmatmul.mubr.bf16.gmra.mrb[0].mxu0 %v763
        %v941 = vpop.f32.mrb[0].mxu0
        %v942 = vadd.f32 0.0, %v941
        %v943 = vpop.f32.mrb[0].mxu0
        %v944 = vpop.f32.mrb[0].mxu0
        %v945 = vadd.f32 0.0, %v944
        %v946 = vpop.f32.mrb[0].mxu0
        %947 = vmatprep.mubr.bf16.mxu0 0
        %948 = vmatmul.mubr.bf16.gmra.mrb[0].mxu0 %v764
        %v949 = vpop.f32.mrb[0].mxu0
        %v950 = vadd.f32 0.0, %v949
        %v951 = vpop.f32.mrb[0].mxu0
        %v952 = vpop.f32.mrb[0].mxu0
        %v953 = vadd.f32 0.0, %v952
        %v954 = vpop.f32.mrb[0].mxu0
        %955 = vmatprep.mubr.bf16.mxu0 0
        %956 = vmatmul.mubr.bf16.gmra.mrb[0].mxu0 %v765
        %v957 = vpop.f32.mrb[0].mxu0
        %v958 = vadd.f32 0.0, %v957
        %v959 = vpop.f32.mrb[0].mxu0
        %v960 = vpop.f32.mrb[0].mxu0
        %v961 = vadd.f32 0.0, %v960
        %v962 = vpop.f32.mrb[0].mxu0
        %963 = vmatprep.mubr.bf16.mxu0 0
        %964 = vmatmul.mubr.bf16.gmra.mrb[0].mxu0 %v766
        %v965 = vpop.f32.mrb[0].mxu0
        %v966 = vadd.f32 0.0, %v965
        %v967 = vpop.f32.mrb[0].mxu0
        %v968 = vpop.f32.mrb[0].mxu0
        %v969 = vadd.f32 0.0, %v968
        %v970 = vpop.f32.mrb[0].mxu0
        %971 = vmatprep.mubr.bf16.mxu0 0
        %972 = vmatmul.mubr.bf16.gmra.mrb[0].mxu0 %v767
        %v973 = vpop.f32.mrb[0].mxu0
        %v974 = vadd.f32 0.0, %v973
        %v975 = vpop.f32.mrb[0].mxu0
        %v976 = vpop.f32.mrb[0].mxu0
        %v977 = vadd.f32 0.0, %v976
        %v978 = vpop.f32.mrb[0].mxu0
        %979 = vmatprep.mubr.bf16.mxu0 0
        %980 = vmatmul.mubr.bf16.gmra.mrb[0].mxu0 %v768
        %v981 = vpop.f32.mrb[0].mxu0
        %v982 = vadd.f32 0.0, %v981
        %v983 = vpop.f32.mrb[0].mxu0
        %v984 = vpop.f32.mrb[0].mxu0
        %v985 = vadd.f32 0.0, %v984
        %v986 = vpop.f32.mrb[0].mxu0
        %987 = vmatprep.mubr.bf16.mxu0 0
        %988 = vmatmul.mubr.bf16.gmra.mrb[0].mxu0 %v769
        %v989 = vpop.f32.mrb[0].mxu0
        %v990 = vadd.f32 0.0, %v989
        %v991 = vpop.f32.mrb[0].mxu0
        %v992 = vpop.f32.mrb[0].mxu0
        %v993 = vadd.f32 0.0, %v992
        %v994 = vpop.f32.mrb[0].mxu0
        %995 = vdwg.mxu0
        %v996 = vadd.f32 %v596, %v870
        %v997 = vadd.f32 %v599, %v873
        %v998 = vadd.f32 %v604, %v878
        %v999 = vadd.f32 %v607, %v881
        %v1000 = vadd.f32 %v612, %v886
        %v1001 = vadd.f32 %v615, %v889
        %v1002 = vadd.f32 %v620, %v894
        %v1003 = vadd.f32 %v623, %v897
        %v1004 = vadd.f32 %v628, %v902
        %v1005 = vadd.f32 %v631, %v905
        %v1006 = vadd.f32 %v636, %v910
        %v1007 = vadd.f32 %v639, %v913
        %v1008 = vadd.f32 %v644, %v918
        %v1009 = vadd.f32 %v647, %v921
        %v1010 = vadd.f32 %v652, %v926
        %v1011 = vadd.f32 %v655, %v929
        %v1012 = vadd.f32 %v660, %v934
        %v1013 = vadd.f32 %v663, %v937
        %v1014 = vadd.f32 %v668, %v942
        %v1015 = vadd.f32 %v671, %v945
        %v1016 = vadd.f32 %v676, %v950
        %v1017 = vadd.f32 %v679, %v953
        %v1018 = vadd.f32 %v684, %v958
        %v1019 = vadd.f32 %v687, %v961
        %v1020 = vadd.f32 %v692, %v966
        %v1021 = vadd.f32 %v695, %v969
        %v1022 = vadd.f32 %v700, %v974
        %v1023 = vadd.f32 %v703, %v977
        %v1024 = vadd.f32 %v708, %v982
        %v1025 = vadd.f32 %v711, %v985
        %v1026 = vadd.f32 %v716, %v990
        %v1027 = vadd.f32 %v719, %v993
        %s1028 = scalar_lea.vmem %s168, 24
        %v1029 = vld [vmem:[%s1028] sm:$0xff]
        %v1030 = vld [vmem:[%s1028 + $0x8] sm:$0xff]
        %v1031 = vld [vmem:[%s1028 + $0x18] sm:$0xff]
        %v1032 = vld [vmem:[%s1028 + $0x20] sm:$0xff]
        %v1033 = vld [vmem:[%s1028 + $0x30] sm:$0xff]
        %v1034 = vld [vmem:[%s1028 + $0x38] sm:$0xff]
        %v1035 = vld [vmem:[%s1028 + $0x48] sm:$0xff]
        %v1036 = vld [vmem:[%s1028 + $0x50] sm:$0xff]
        %v1037 = vld [vmem:[%s1028 + $0x60] sm:$0xff]
        %v1038 = vld [vmem:[%s1028 + $0x68] sm:$0xff]
        %v1039 = vld [vmem:[%s1028 + $0x78] sm:$0xff]
        %v1040 = vld [vmem:[%s1028 + $0x80] sm:$0xff]
        %v1041 = vld [vmem:[%s1028 + $0x90] sm:$0xff]
        %v1042 = vld [vmem:[%s1028 + $0x98] sm:$0xff]
        %v1043 = vld [vmem:[%s1028 + $0xa8] sm:$0xff]
        %v1044 = vld [vmem:[%s1028 + $0xb0] sm:$0xff]
        %v1045 = vld [vmem:[%s1028 + $0xc0] sm:$0xff]
        %v1046 = vld [vmem:[%s1028 + $0xc8] sm:$0xff]
        %v1047 = vld [vmem:[%s1028 + $0xd8] sm:$0xff]
        %v1048 = vld [vmem:[%s1028 + $0xe0] sm:$0xff]
        %v1049 = vld [vmem:[%s1028 + $0xf0] sm:$0xff]
        %v1050 = vld [vmem:[%s1028 + $0xf8] sm:$0xff]
        %v1051 = vld [vmem:[%s1028 + $0x108] sm:$0xff]
        %v1052 = vld [vmem:[%s1028 + $0x110] sm:$0xff]
        %v1053 = vld [vmem:[%s1028 + $0x120] sm:$0xff]
        %v1054 = vld [vmem:[%s1028 + $0x128] sm:$0xff]
        %v1055 = vld [vmem:[%s1028 + $0x138] sm:$0xff]
        %v1056 = vld [vmem:[%s1028 + $0x140] sm:$0xff]
        %v1057 = vld [vmem:[%s1028 + $0x150] sm:$0xff]
        %v1058 = vld [vmem:[%s1028 + $0x158] sm:$0xff]
        %v1059 = vld [vmem:[%s1028 + $0x168] sm:$0xff]
        %v1060 = vld [vmem:[%s1028 + $0x170] sm:$0xff]
        %v1061 = vpack.c.bf16 %v1030, %v1029
        %v1062 = vpack.c.bf16 %v1032, %v1031
        %v1063 = vpack.c.bf16 %v1034, %v1033
        %v1064 = vpack.c.bf16 %v1036, %v1035
        %v1065 = vpack.c.bf16 %v1038, %v1037
        %v1066 = vpack.c.bf16 %v1040, %v1039
        %v1067 = vpack.c.bf16 %v1042, %v1041
        %v1068 = vpack.c.bf16 %v1044, %v1043
        %v1069 = vpack.c.bf16 %v1046, %v1045
        %v1070 = vpack.c.bf16 %v1048, %v1047
        %v1071 = vpack.c.bf16 %v1050, %v1049
        %v1072 = vpack.c.bf16 %v1052, %v1051
        %v1073 = vpack.c.bf16 %v1054, %v1053
        %v1074 = vpack.c.bf16 %v1056, %v1055
        %v1075 = vpack.c.bf16 %v1058, %v1057
        %v1076 = vpack.c.bf16 %v1060, %v1059
        %s1077 = scalar_lea.vmem %s172, 192
        %v1078 = vld [vmem:[%s1077] sm:$0xf]
        %v1079 = vld [vmem:[%s1077 + $0x4] sm:$0xf]
        %v1080 = vld [vmem:[%s1077 + $0x8] sm:$0xf]
        %v1081 = vld [vmem:[%s1077 + $0xc] sm:$0xf]
        %v1082 = vld [vmem:[%s1077 + $0x10] sm:$0xf]
        %v1083 = vld [vmem:[%s1077 + $0x14] sm:$0xf]
        %v1084 = vld [vmem:[%s1077 + $0x18] sm:$0xf]
        %v1085 = vld [vmem:[%s1077 + $0x1c] sm:$0xf]
        %v1086 = vld [vmem:[%s1077 + $0x20] sm:$0xf]
        %v1087 = vld [vmem:[%s1077 + $0x24] sm:$0xf]
        %v1088 = vld [vmem:[%s1077 + $0x28] sm:$0xf]
        %v1089 = vld [vmem:[%s1077 + $0x2c] sm:$0xf]
        %v1090 = vld [vmem:[%s1077 + $0x30] sm:$0xf]
        %v1091 = vld [vmem:[%s1077 + $0x34] sm:$0xf]
        %v1092 = vld [vmem:[%s1077 + $0x38] sm:$0xf]
        %v1093 = vld [vmem:[%s1077 + $0x3c] sm:$0xf]
        %v1110 = vunpack.c.l.b16 %v1078
        %v1111 = vunpack.c.l.b16 %v1079
        %v1112 = vunpack.c.l.b16 %v1080
        %v1113 = vunpack.c.l.b16 %v1081
        %v1114 = vunpack.c.l.b16 %v1082
        %v1115 = vunpack.c.l.b16 %v1083
        %v1116 = vunpack.c.l.b16 %v1084
        %v1117 = vunpack.c.l.b16 %v1085
        %v1118 = vunpack.c.l.b16 %v1086
        %v1119 = vunpack.c.l.b16 %v1087
        %v1120 = vunpack.c.l.b16 %v1088
        %v1121 = vunpack.c.l.b16 %v1089
        %v1122 = vunpack.c.l.b16 %v1090
        %v1123 = vunpack.c.l.b16 %v1091
        %v1124 = vunpack.c.l.b16 %v1092
        %v1125 = vunpack.c.l.b16 %v1093
        %v1126 = vpack.c.b16 %v1111, %v1110
        %v1127 = vpack.c.b16 %v1113, %v1112
        %v1128 = vpack.c.b16 %v1115, %v1114
        %v1129 = vpack.c.b16 %v1117, %v1116
        %v1130 = vpack.c.b16 %v1119, %v1118
        %v1131 = vpack.c.b16 %v1121, %v1120
        %v1132 = vpack.c.b16 %v1123, %v1122
        %v1133 = vpack.c.b16 %v1125, %v1124
        %1142 = vmatprep.subr.bf16.mxu0 0
        %1143 = vmatpush1.bf16.msra.mxu0 %v1126
        %1144 = vmatprep.subr.bf16.mxu0 0
        %1145 = vmatpush1.bf16.msra.mxu0 %v1127
        %1146 = vmatprep.subr.bf16.mxu0 0
        %1147 = vmatpush1.bf16.msra.mxu0 %v1128
        %1148 = vmatprep.subr.bf16.mxu0 0
        %1149 = vmatpush1.bf16.msra.mxu0 %v1129
        %1150 = vmatprep.subr.bf16.mxu0 0
        %1151 = vmatpush1.bf16.msra.mxu0 %v1130
        %1152 = vmatprep.subr.bf16.mxu0 0
        %1153 = vmatpush1.bf16.msra.mxu0 %v1131
        %1154 = vmatprep.subr.bf16.mxu0 0
        %1155 = vmatpush1.bf16.msra.mxu0 %v1132
        %1156 = vmatprep.subr.bf16.mxu0 0
        %1157 = vmatpush1.bf16.msra.mxu0 %v1133
        %1158 = vmatprep.subr.bf16.mxu0 0
        %1159 = vmatpush1.bf16.msra.mxu0 0
        %1160 = vmatprep.subr.bf16.mxu0 0
        %1161 = vmatpush1.bf16.msra.mxu0 0
        %1162 = vmatprep.subr.bf16.mxu0 0
        %1163 = vmatpush1.bf16.msra.mxu0 0
        %1164 = vmatprep.subr.bf16.mxu0 0
        %1165 = vmatpush1.bf16.msra.mxu0 0
        %1166 = vmatprep.subr.bf16.mxu0 0
        %1167 = vmatpush1.bf16.msra.mxu0 0
        %1168 = vmatprep.subr.bf16.mxu0 0
        %1169 = vmatpush1.bf16.msra.mxu0 0
        %1170 = vmatprep.subr.bf16.mxu0 0
        %1171 = vmatpush1.bf16.msra.mxu0 0
        %1172 = vmatprep.subr.bf16.mxu0 0
        %1173 = vmatpush1.bf16.msra.mxu0 0
        %1174 = vmatprep.mubr.bf16.mxu0 0
        %1175 = vmatmul.mubr.bf16.gmra.mrb[0].mxu0 %v1061
        %v1176 = vpop.f32.mrb[0].mxu0
        %v1177 = vadd.f32 0.0, %v1176
        %v1178 = vpop.f32.mrb[0].mxu0
        %v1179 = vpop.f32.mrb[0].mxu0
        %v1180 = vadd.f32 0.0, %v1179
        %v1181 = vpop.f32.mrb[0].mxu0
        %1182 = vmatprep.mubr.bf16.mxu0 0
        %1183 = vmatmul.mubr.bf16.gmra.mrb[0].mxu0 %v1062
        %v1184 = vpop.f32.mrb[0].mxu0
        %v1185 = vadd.f32 0.0, %v1184
        %v1186 = vpop.f32.mrb[0].mxu0
        %v1187 = vpop.f32.mrb[0].mxu0
        %v1188 = vadd.f32 0.0, %v1187
        %v1189 = vpop.f32.mrb[0].mxu0
        %1190 = vmatprep.mubr.bf16.mxu0 0
        %1191 = vmatmul.mubr.bf16.gmra.mrb[0].mxu0 %v1063
        %v1192 = vpop.f32.mrb[0].mxu0
        %v1193 = vadd.f32 0.0, %v1192
        %v1194 = vpop.f32.mrb[0].mxu0
        %v1195 = vpop.f32.mrb[0].mxu0
        %v1196 = vadd.f32 0.0, %v1195
        %v1197 = vpop.f32.mrb[0].mxu0
        %1198 = vmatprep.mubr.bf16.mxu0 0
        %1199 = vmatmul.mubr.bf16.gmra.mrb[0].mxu0 %v1064
        %v1200 = vpop.f32.mrb[0].mxu0
        %v1201 = vadd.f32 0.0, %v1200
        %v1202 = vpop.f32.mrb[0].mxu0
        %v1203 = vpop.f32.mrb[0].mxu0
        %v1204 = vadd.f32 0.0, %v1203
        %v1205 = vpop.f32.mrb[0].mxu0
        %1206 = vmatprep.mubr.bf16.mxu0 0
        %1207 = vmatmul.mubr.bf16.gmra.mrb[0].mxu0 %v1065
        %v1208 = vpop.f32.mrb[0].mxu0
        %v1209 = vadd.f32 0.0, %v1208
        %v1210 = vpop.f32.mrb[0].mxu0
        %v1211 = vpop.f32.mrb[0].mxu0
        %v1212 = vadd.f32 0.0, %v1211
        %v1213 = vpop.f32.mrb[0].mxu0
        %1214 = vmatprep.mubr.bf16.mxu0 0
        %1215 = vmatmul.mubr.bf16.gmra.mrb[0].mxu0 %v1066
        %v1216 = vpop.f32.mrb[0].mxu0
        %v1217 = vadd.f32 0.0, %v1216
        %v1218 = vpop.f32.mrb[0].mxu0
        %v1219 = vpop.f32.mrb[0].mxu0
        %v1220 = vadd.f32 0.0, %v1219
        %v1221 = vpop.f32.mrb[0].mxu0
        %1222 = vmatprep.mubr.bf16.mxu0 0
        %1223 = vmatmul.mubr.bf16.gmra.mrb[0].mxu0 %v1067
        %v1224 = vpop.f32.mrb[0].mxu0
        %v1225 = vadd.f32 0.0, %v1224
        %v1226 = vpop.f32.mrb[0].mxu0
        %v1227 = vpop.f32.mrb[0].mxu0
        %v1228 = vadd.f32 0.0, %v1227
        %v1229 = vpop.f32.mrb[0].mxu0
        %1230 = vmatprep.mubr.bf16.mxu0 0
        %1231 = vmatmul.mubr.bf16.gmra.mrb[0].mxu0 %v1068
        %v1232 = vpop.f32.mrb[0].mxu0
        %v1233 = vadd.f32 0.0, %v1232
        %v1234 = vpop.f32.mrb[0].mxu0
        %v1235 = vpop.f32.mrb[0].mxu0
        %v1236 = vadd.f32 0.0, %v1235
        %v1237 = vpop.f32.mrb[0].mxu0
        %1238 = vmatprep.mubr.bf16.mxu0 0
        %1239 = vmatmul.mubr.bf16.gmra.mrb[0].mxu0 %v1069
        %v1240 = vpop.f32.mrb[0].mxu0
        %v1241 = vadd.f32 0.0, %v1240
        %v1242 = vpop.f32.mrb[0].mxu0
        %v1243 = vpop.f32.mrb[0].mxu0
        %v1244 = vadd.f32 0.0, %v1243
        %v1245 = vpop.f32.mrb[0].mxu0
        %1246 = vmatprep.mubr.bf16.mxu0 0
        %1247 = vmatmul.mubr.bf16.gmra.mrb[0].mxu0 %v1070
        %v1248 = vpop.f32.mrb[0].mxu0
        %v1249 = vadd.f32 0.0, %v1248
        %v1250 = vpop.f32.mrb[0].mxu0
        %v1251 = vpop.f32.mrb[0].mxu0
        %v1252 = vadd.f32 0.0, %v1251
        %v1253 = vpop.f32.mrb[0].mxu0
        %1254 = vmatprep.mubr.bf16.mxu0 0
        %1255 = vmatmul.mubr.bf16.gmra.mrb[0].mxu0 %v1071
        %v1256 = vpop.f32.mrb[0].mxu0
        %v1257 = vadd.f32 0.0, %v1256
        %v1258 = vpop.f32.mrb[0].mxu0
        %v1259 = vpop.f32.mrb[0].mxu0
        %v1260 = vadd.f32 0.0, %v1259
        %v1261 = vpop.f32.mrb[0].mxu0
        %1262 = vmatprep.mubr.bf16.mxu0 0
        %1263 = vmatmul.mubr.bf16.gmra.mrb[0].mxu0 %v1072
        %v1264 = vpop.f32.mrb[0].mxu0
        %v1265 = vadd.f32 0.0, %v1264
        %v1266 = vpop.f32.mrb[0].mxu0
        %v1267 = vpop.f32.mrb[0].mxu0
        %v1268 = vadd.f32 0.0, %v1267
        %v1269 = vpop.f32.mrb[0].mxu0
        %1270 = vmatprep.mubr.bf16.mxu0 0
        %1271 = vmatmul.mubr.bf16.gmra.mrb[0].mxu0 %v1073
        %v1272 = vpop.f32.mrb[0].mxu0
        %v1273 = vadd.f32 0.0, %v1272
        %v1274 = vpop.f32.mrb[0].mxu0
        %v1275 = vpop.f32.mrb[0].mxu0
        %v1276 = vadd.f32 0.0, %v1275
        %v1277 = vpop.f32.mrb[0].mxu0
        %1278 = vmatprep.mubr.bf16.mxu0 0
        %1279 = vmatmul.mubr.bf16.gmra.mrb[0].mxu0 %v1074
        %v1280 = vpop.f32.mrb[0].mxu0
        %v1281 = vadd.f32 0.0, %v1280
        %v1282 = vpop.f32.mrb[0].mxu0
        %v1283 = vpop.f32.mrb[0].mxu0
        %v1284 = vadd.f32 0.0, %v1283
        %v1285 = vpop.f32.mrb[0].mxu0
        %1286 = vmatprep.mubr.bf16.mxu0 0
        %1287 = vmatmul.mubr.bf16.gmra.mrb[0].mxu0 %v1075
        %v1288 = vpop.f32.mrb[0].mxu0
        %v1289 = vadd.f32 0.0, %v1288
        %v1290 = vpop.f32.mrb[0].mxu0
        %v1291 = vpop.f32.mrb[0].mxu0
        %v1292 = vadd.f32 0.0, %v1291
        %v1293 = vpop.f32.mrb[0].mxu0
        %1294 = vmatprep.mubr.bf16.mxu0 0
        %1295 = vmatmul.mubr.bf16.gmra.mrb[0].mxu0 %v1076
        %v1296 = vpop.f32.mrb[0].mxu0
        %v1297 = vadd.f32 0.0, %v1296
        %v1298 = vpop.f32.mrb[0].mxu0
        %v1299 = vpop.f32.mrb[0].mxu0
        %v1300 = vadd.f32 0.0, %v1299
        %v1301 = vpop.f32.mrb[0].mxu0
        %1302 = vdwg.mxu0
        %v1303 = vadd.f32 %v996, %v1177
        %v1304 = vadd.f32 %v997, %v1180
        %v1305 = vadd.f32 %v998, %v1185
        %v1306 = vadd.f32 %v999, %v1188
        %v1307 = vadd.f32 %v1000, %v1193
        %v1308 = vadd.f32 %v1001, %v1196
        %v1309 = vadd.f32 %v1002, %v1201
        %v1310 = vadd.f32 %v1003, %v1204
        %v1311 = vadd.f32 %v1004, %v1209
        %v1312 = vadd.f32 %v1005, %v1212
        %v1313 = vadd.f32 %v1006, %v1217
        %v1314 = vadd.f32 %v1007, %v1220
        %v1315 = vadd.f32 %v1008, %v1225
        %v1316 = vadd.f32 %v1009, %v1228
        %v1317 = vadd.f32 %v1010, %v1233
        %v1318 = vadd.f32 %v1011, %v1236
        %v1319 = vadd.f32 %v1012, %v1241
        %v1320 = vadd.f32 %v1013, %v1244
        %v1321 = vadd.f32 %v1014, %v1249
        %v1322 = vadd.f32 %v1015, %v1252
        %v1323 = vadd.f32 %v1016, %v1257
        %v1324 = vadd.f32 %v1017, %v1260
        %v1325 = vadd.f32 %v1018, %v1265
        %v1326 = vadd.f32 %v1019, %v1268
        %v1327 = vadd.f32 %v1020, %v1273
        %v1328 = vadd.f32 %v1021, %v1276
        %v1329 = vadd.f32 %v1022, %v1281
        %v1330 = vadd.f32 %v1023, %v1284
        %v1331 = vadd.f32 %v1024, %v1289
        %v1332 = vadd.f32 %v1025, %v1292
        %v1333 = vadd.f32 %v1026, %v1297
        %v1334 = vadd.f32 %v1027, %v1300
        %v1335 = vld [vmem:[%s1028 + $0x1] sm:$0xff]
        %v1336 = vld [vmem:[%s1028 + $0x9] sm:$0xff]
        %v1337 = vld [vmem:[%s1028 + $0x19] sm:$0xff]
        %v1338 = vld [vmem:[%s1028 + $0x21] sm:$0xff]
        %v1339 = vld [vmem:[%s1028 + $0x31] sm:$0xff]
        %v1340 = vld [vmem:[%s1028 + $0x39] sm:$0xff]
        %v1341 = vld [vmem:[%s1028 + $0x49] sm:$0xff]
        %v1342 = vld [vmem:[%s1028 + $0x51] sm:$0xff]
        %v1343 = vld [vmem:[%s1028 + $0x61] sm:$0xff]
        %v1344 = vld [vmem:[%s1028 + $0x69] sm:$0xff]
        %v1345 = vld [vmem:[%s1028 + $0x79] sm:$0xff]
        %v1346 = vld [vmem:[%s1028 + $0x81] sm:$0xff]
        %v1347 = vld [vmem:[%s1028 + $0x91] sm:$0xff]
        %v1348 = vld [vmem:[%s1028 + $0x99] sm:$0xff]
        %v1349 = vld [vmem:[%s1028 + $0xa9] sm:$0xff]
        %v1350 = vld [vmem:[%s1028 + $0xb1] sm:$0xff]
        %v1351 = vld [vmem:[%s1028 + $0xc1] sm:$0xff]
        %v1352 = vld [vmem:[%s1028 + $0xc9] sm:$0xff]
        %v1353 = vld [vmem:[%s1028 + $0xd9] sm:$0xff]
        %v1354 = vld [vmem:[%s1028 + $0xe1] sm:$0xff]
        %v1355 = vld [vmem:[%s1028 + $0xf1] sm:$0xff]
        %v1356 = vld [vmem:[%s1028 + $0xf9] sm:$0xff]
        %v1357 = vld [vmem:[%s1028 + $0x109] sm:$0xff]
        %v1358 = vld [vmem:[%s1028 + $0x111] sm:$0xff]
        %v1359 = vld [vmem:[%s1028 + $0x121] sm:$0xff]
        %v1360 = vld [vmem:[%s1028 + $0x129] sm:$0xff]
        %v1361 = vld [vmem:[%s1028 + $0x139] sm:$0xff]
        %v1362 = vld [vmem:[%s1028 + $0x141] sm:$0xff]
        %v1363 = vld [vmem:[%s1028 + $0x151] sm:$0xff]
        %v1364 = vld [vmem:[%s1028 + $0x159] sm:$0xff]
        %v1365 = vld [vmem:[%s1028 + $0x169] sm:$0xff]
        %v1366 = vld [vmem:[%s1028 + $0x171] sm:$0xff]
        %v1367 = vpack.c.bf16 %v1336, %v1335
        %v1368 = vpack.c.bf16 %v1338, %v1337
        %v1369 = vpack.c.bf16 %v1340, %v1339
        %v1370 = vpack.c.bf16 %v1342, %v1341
        %v1371 = vpack.c.bf16 %v1344, %v1343
        %v1372 = vpack.c.bf16 %v1346, %v1345
        %v1373 = vpack.c.bf16 %v1348, %v1347
        %v1374 = vpack.c.bf16 %v1350, %v1349
        %v1375 = vpack.c.bf16 %v1352, %v1351
        %v1376 = vpack.c.bf16 %v1354, %v1353
        %v1377 = vpack.c.bf16 %v1356, %v1355
        %v1378 = vpack.c.bf16 %v1358, %v1357
        %v1379 = vpack.c.bf16 %v1360, %v1359
        %v1380 = vpack.c.bf16 %v1362, %v1361
        %v1381 = vpack.c.bf16 %v1364, %v1363
        %v1382 = vpack.c.bf16 %v1366, %v1365
        %s1383 = scalar_lea.vmem %s172, 256
        %v1384 = vld [vmem:[%s1383] sm:$0xf]
        %v1385 = vld [vmem:[%s1383 + $0x4] sm:$0xf]
        %v1386 = vld [vmem:[%s1383 + $0x8] sm:$0xf]
        %v1387 = vld [vmem:[%s1383 + $0xc] sm:$0xf]
        %v1388 = vld [vmem:[%s1383 + $0x10] sm:$0xf]
        %v1389 = vld [vmem:[%s1383 + $0x14] sm:$0xf]
        %v1390 = vld [vmem:[%s1383 + $0x18] sm:$0xf]
        %v1391 = vld [vmem:[%s1383 + $0x1c] sm:$0xf]
        %v1392 = vld [vmem:[%s1383 + $0x20] sm:$0xf]
        %v1393 = vld [vmem:[%s1383 + $0x24] sm:$0xf]
        %v1394 = vld [vmem:[%s1383 + $0x28] sm:$0xf]
        %v1395 = vld [vmem:[%s1383 + $0x2c] sm:$0xf]
        %v1396 = vld [vmem:[%s1383 + $0x30] sm:$0xf]
        %v1397 = vld [vmem:[%s1383 + $0x34] sm:$0xf]
        %v1398 = vld [vmem:[%s1383 + $0x38] sm:$0xf]
        %v1399 = vld [vmem:[%s1383 + $0x3c] sm:$0xf]
        %v1416 = vunpack.c.l.b16 %v1384
        %v1417 = vunpack.c.l.b16 %v1385
        %v1418 = vunpack.c.l.b16 %v1386
        %v1419 = vunpack.c.l.b16 %v1387
        %v1420 = vunpack.c.l.b16 %v1388
        %v1421 = vunpack.c.l.b16 %v1389
        %v1422 = vunpack.c.l.b16 %v1390
        %v1423 = vunpack.c.l.b16 %v1391
        %v1424 = vunpack.c.l.b16 %v1392
        %v1425 = vunpack.c.l.b16 %v1393
        %v1426 = vunpack.c.l.b16 %v1394
        %v1427 = vunpack.c.l.b16 %v1395
        %v1428 = vunpack.c.l.b16 %v1396
        %v1429 = vunpack.c.l.b16 %v1397
        %v1430 = vunpack.c.l.b16 %v1398
        %v1431 = vunpack.c.l.b16 %v1399
        %v1432 = vpack.c.b16 %v1417, %v1416
        %v1433 = vpack.c.b16 %v1419, %v1418
        %v1434 = vpack.c.b16 %v1421, %v1420
        %v1435 = vpack.c.b16 %v1423, %v1422
        %v1436 = vpack.c.b16 %v1425, %v1424
        %v1437 = vpack.c.b16 %v1427, %v1426
        %v1438 = vpack.c.b16 %v1429, %v1428
        %v1439 = vpack.c.b16 %v1431, %v1430
        %1448 = vmatprep.subr.bf16.mxu0 0
        %1449 = vmatpush1.bf16.msra.mxu0 %v1432
        %1450 = vmatprep.subr.bf16.mxu0 0
        %1451 = vmatpush1.bf16.msra.mxu0 %v1433
        %1452 = vmatprep.subr.bf16.mxu0 0
        %1453 = vmatpush1.bf16.msra.mxu0 %v1434
        %1454 = vmatprep.subr.bf16.mxu0 0
        %1455 = vmatpush1.bf16.msra.mxu0 %v1435
        %1456 = vmatprep.subr.bf16.mxu0 0
        %1457 = vmatpush1.bf16.msra.mxu0 %v1436
        %1458 = vmatprep.subr.bf16.mxu0 0
        %1459 = vmatpush1.bf16.msra.mxu0 %v1437
        %1460 = vmatprep.subr.bf16.mxu0 0
        %1461 = vmatpush1.bf16.msra.mxu0 %v1438
        %1462 = vmatprep.subr.bf16.mxu0 0
        %1463 = vmatpush1.bf16.msra.mxu0 %v1439
        %1464 = vmatprep.subr.bf16.mxu0 0
        %1465 = vmatpush1.bf16.msra.mxu0 0
        %1466 = vmatprep.subr.bf16.mxu0 0
        %1467 = vmatpush1.bf16.msra.mxu0 0
        %1468 = vmatprep.subr.bf16.mxu0 0
        %1469 = vmatpush1.bf16.msra.mxu0 0
        %1470 = vmatprep.subr.bf16.mxu0 0
        %1471 = vmatpush1.bf16.msra.mxu0 0
        %1472 = vmatprep.subr.bf16.mxu0 0
        %1473 = vmatpush1.bf16.msra.mxu0 0
        %1474 = vmatprep.subr.bf16.mxu0 0
        %1475 = vmatpush1.bf16.msra.mxu0 0
        %1476 = vmatprep.subr.bf16.mxu0 0
        %1477 = vmatpush1.bf16.msra.mxu0 0
        %1478 = vmatprep.subr.bf16.mxu0 0
        %1479 = vmatpush1.bf16.msra.mxu0 0
        %1480 = vmatprep.mubr.bf16.mxu0 0
        %1481 = vmatmul.mubr.bf16.gmra.mrb[0].mxu0 %v1367
        %v1482 = vpop.f32.mrb[0].mxu0
        %v1483 = vadd.f32 0.0, %v1482
        %v1484 = vpop.f32.mrb[0].mxu0
        %v1485 = vpop.f32.mrb[0].mxu0
        %v1486 = vadd.f32 0.0, %v1485
        %v1487 = vpop.f32.mrb[0].mxu0
        %1488 = vmatprep.mubr.bf16.mxu0 0
        %1489 = vmatmul.mubr.bf16.gmra.mrb[0].mxu0 %v1368
        %v1490 = vpop.f32.mrb[0].mxu0
        %v1491 = vadd.f32 0.0, %v1490
        %v1492 = vpop.f32.mrb[0].mxu0
        %v1493 = vpop.f32.mrb[0].mxu0
        %v1494 = vadd.f32 0.0, %v1493
        %v1495 = vpop.f32.mrb[0].mxu0
        %1496 = vmatprep.mubr.bf16.mxu0 0
        %1497 = vmatmul.mubr.bf16.gmra.mrb[0].mxu0 %v1369
        %v1498 = vpop.f32.mrb[0].mxu0
        %v1499 = vadd.f32 0.0, %v1498
        %v1500 = vpop.f32.mrb[0].mxu0
        %v1501 = vpop.f32.mrb[0].mxu0
        %v1502 = vadd.f32 0.0, %v1501
        %v1503 = vpop.f32.mrb[0].mxu0
        %1504 = vmatprep.mubr.bf16.mxu0 0
        %1505 = vmatmul.mubr.bf16.gmra.mrb[0].mxu0 %v1370
        %v1506 = vpop.f32.mrb[0].mxu0
        %v1507 = vadd.f32 0.0, %v1506
        %v1508 = vpop.f32.mrb[0].mxu0
        %v1509 = vpop.f32.mrb[0].mxu0
        %v1510 = vadd.f32 0.0, %v1509
        %v1511 = vpop.f32.mrb[0].mxu0
        %1512 = vmatprep.mubr.bf16.mxu0 0
        %1513 = vmatmul.mubr.bf16.gmra.mrb[0].mxu0 %v1371
        %v1514 = vpop.f32.mrb[0].mxu0
        %v1515 = vadd.f32 0.0, %v1514
        %v1516 = vpop.f32.mrb[0].mxu0
        %v1517 = vpop.f32.mrb[0].mxu0
        %v1518 = vadd.f32 0.0, %v1517
        %v1519 = vpop.f32.mrb[0].mxu0
        %1520 = vmatprep.mubr.bf16.mxu0 0
        %1521 = vmatmul.mubr.bf16.gmra.mrb[0].mxu0 %v1372
        %v1522 = vpop.f32.mrb[0].mxu0
        %v1523 = vadd.f32 0.0, %v1522
        %v1524 = vpop.f32.mrb[0].mxu0
        %v1525 = vpop.f32.mrb[0].mxu0
        %v1526 = vadd.f32 0.0, %v1525
        %v1527 = vpop.f32.mrb[0].mxu0
        %1528 = vmatprep.mubr.bf16.mxu0 0
        %1529 = vmatmul.mubr.bf16.gmra.mrb[0].mxu0 %v1373
        %v1530 = vpop.f32.mrb[0].mxu0
        %v1531 = vadd.f32 0.0, %v1530
        %v1532 = vpop.f32.mrb[0].mxu0
        %v1533 = vpop.f32.mrb[0].mxu0
        %v1534 = vadd.f32 0.0, %v1533
        %v1535 = vpop.f32.mrb[0].mxu0
        %1536 = vmatprep.mubr.bf16.mxu0 0
        %1537 = vmatmul.mubr.bf16.gmra.mrb[0].mxu0 %v1374
        %v1538 = vpop.f32.mrb[0].mxu0
        %v1539 = vadd.f32 0.0, %v1538
        %v1540 = vpop.f32.mrb[0].mxu0
        %v1541 = vpop.f32.mrb[0].mxu0
        %v1542 = vadd.f32 0.0, %v1541
        %v1543 = vpop.f32.mrb[0].mxu0
        %1544 = vmatprep.mubr.bf16.mxu0 0
        %1545 = vmatmul.mubr.bf16.gmra.mrb[0].mxu0 %v1375
        %v1546 = vpop.f32.mrb[0].mxu0
        %v1547 = vadd.f32 0.0, %v1546
        %v1548 = vpop.f32.mrb[0].mxu0
        %v1549 = vpop.f32.mrb[0].mxu0
        %v1550 = vadd.f32 0.0, %v1549
        %v1551 = vpop.f32.mrb[0].mxu0
        %1552 = vmatprep.mubr.bf16.mxu0 0
        %1553 = vmatmul.mubr.bf16.gmra.mrb[0].mxu0 %v1376
        %v1554 = vpop.f32.mrb[0].mxu0
        %v1555 = vadd.f32 0.0, %v1554
        %v1556 = vpop.f32.mrb[0].mxu0
        %v1557 = vpop.f32.mrb[0].mxu0
        %v1558 = vadd.f32 0.0, %v1557
        %v1559 = vpop.f32.mrb[0].mxu0
        %1560 = vmatprep.mubr.bf16.mxu0 0
        %1561 = vmatmul.mubr.bf16.gmra.mrb[0].mxu0 %v1377
        %v1562 = vpop.f32.mrb[0].mxu0
        %v1563 = vadd.f32 0.0, %v1562
        %v1564 = vpop.f32.mrb[0].mxu0
        %v1565 = vpop.f32.mrb[0].mxu0
        %v1566 = vadd.f32 0.0, %v1565
        %v1567 = vpop.f32.mrb[0].mxu0
        %1568 = vmatprep.mubr.bf16.mxu0 0
        %1569 = vmatmul.mubr.bf16.gmra.mrb[0].mxu0 %v1378
        %v1570 = vpop.f32.mrb[0].mxu0
        %v1571 = vadd.f32 0.0, %v1570
        %v1572 = vpop.f32.mrb[0].mxu0
        %v1573 = vpop.f32.mrb[0].mxu0
        %v1574 = vadd.f32 0.0, %v1573
        %v1575 = vpop.f32.mrb[0].mxu0
        %1576 = vmatprep.mubr.bf16.mxu0 0
        %1577 = vmatmul.mubr.bf16.gmra.mrb[0].mxu0 %v1379
        %v1578 = vpop.f32.mrb[0].mxu0
        %v1579 = vadd.f32 0.0, %v1578
        %v1580 = vpop.f32.mrb[0].mxu0
        %v1581 = vpop.f32.mrb[0].mxu0
        %v1582 = vadd.f32 0.0, %v1581
        %v1583 = vpop.f32.mrb[0].mxu0
        %1584 = vmatprep.mubr.bf16.mxu0 0
        %1585 = vmatmul.mubr.bf16.gmra.mrb[0].mxu0 %v1380
        %v1586 = vpop.f32.mrb[0].mxu0
        %v1587 = vadd.f32 0.0, %v1586
        %v1588 = vpop.f32.mrb[0].mxu0
        %v1589 = vpop.f32.mrb[0].mxu0
        %v1590 = vadd.f32 0.0, %v1589
        %v1591 = vpop.f32.mrb[0].mxu0
        %1592 = vmatprep.mubr.bf16.mxu0 0
        %1593 = vmatmul.mubr.bf16.gmra.mrb[0].mxu0 %v1381
        %v1594 = vpop.f32.mrb[0].mxu0
        %v1595 = vadd.f32 0.0, %v1594
        %v1596 = vpop.f32.mrb[0].mxu0
        %v1597 = vpop.f32.mrb[0].mxu0
        %v1598 = vadd.f32 0.0, %v1597
        %v1599 = vpop.f32.mrb[0].mxu0
        %1600 = vmatprep.mubr.bf16.mxu0 0
        %1601 = vmatmul.mubr.bf16.gmra.mrb[0].mxu0 %v1382
        %v1602 = vpop.f32.mrb[0].mxu0
        %v1603 = vadd.f32 0.0, %v1602
        %v1604 = vpop.f32.mrb[0].mxu0
        %v1605 = vpop.f32.mrb[0].mxu0
        %v1606 = vadd.f32 0.0, %v1605
        %v1607 = vpop.f32.mrb[0].mxu0
        %1608 = vdwg.mxu0
        %v1609 = vadd.f32 %v1303, %v1483
        %v1610 = vadd.f32 %v1304, %v1486
        %v1611 = vadd.f32 %v1305, %v1491
        %v1612 = vadd.f32 %v1306, %v1494
        %v1613 = vadd.f32 %v1307, %v1499
        %v1614 = vadd.f32 %v1308, %v1502
        %v1615 = vadd.f32 %v1309, %v1507
        %v1616 = vadd.f32 %v1310, %v1510
        %v1617 = vadd.f32 %v1311, %v1515
        %v1618 = vadd.f32 %v1312, %v1518
        %v1619 = vadd.f32 %v1313, %v1523
        %v1620 = vadd.f32 %v1314, %v1526
        %v1621 = vadd.f32 %v1315, %v1531
        %v1622 = vadd.f32 %v1316, %v1534
        %v1623 = vadd.f32 %v1317, %v1539
        %v1624 = vadd.f32 %v1318, %v1542
        %v1625 = vadd.f32 %v1319, %v1547
        %v1626 = vadd.f32 %v1320, %v1550
        %v1627 = vadd.f32 %v1321, %v1555
        %v1628 = vadd.f32 %v1322, %v1558
        %v1629 = vadd.f32 %v1323, %v1563
        %v1630 = vadd.f32 %v1324, %v1566
        %v1631 = vadd.f32 %v1325, %v1571
        %v1632 = vadd.f32 %v1326, %v1574
        %v1633 = vadd.f32 %v1327, %v1579
        %v1634 = vadd.f32 %v1328, %v1582
        %v1635 = vadd.f32 %v1329, %v1587
        %v1636 = vadd.f32 %v1330, %v1590
        %v1637 = vadd.f32 %v1331, %v1595
        %v1638 = vadd.f32 %v1332, %v1598
        %v1639 = vadd.f32 %v1333, %v1603
        %v1640 = vadd.f32 %v1334, %v1606
        %v1641 = vld [vmem:[%s1028 + $0x2] sm:$0xff]
        %v1642 = vld [vmem:[%s1028 + $0xa] sm:$0xff]
        %v1643 = vld [vmem:[%s1028 + $0x1a] sm:$0xff]
        %v1644 = vld [vmem:[%s1028 + $0x22] sm:$0xff]
        %v1645 = vld [vmem:[%s1028 + $0x32] sm:$0xff]
        %v1646 = vld [vmem:[%s1028 + $0x3a] sm:$0xff]
        %v1647 = vld [vmem:[%s1028 + $0x4a] sm:$0xff]
        %v1648 = vld [vmem:[%s1028 + $0x52] sm:$0xff]
        %v1649 = vld [vmem:[%s1028 + $0x62] sm:$0xff]
        %v1650 = vld [vmem:[%s1028 + $0x6a] sm:$0xff]
        %v1651 = vld [vmem:[%s1028 + $0x7a] sm:$0xff]
        %v1652 = vld [vmem:[%s1028 + $0x82] sm:$0xff]
        %v1653 = vld [vmem:[%s1028 + $0x92] sm:$0xff]
        %v1654 = vld [vmem:[%s1028 + $0x9a] sm:$0xff]
        %v1655 = vld [vmem:[%s1028 + $0xaa] sm:$0xff]
        %v1656 = vld [vmem:[%s1028 + $0xb2] sm:$0xff]
        %v1657 = vld [vmem:[%s1028 + $0xc2] sm:$0xff]
        %v1658 = vld [vmem:[%s1028 + $0xca] sm:$0xff]
        %v1659 = vld [vmem:[%s1028 + $0xda] sm:$0xff]
        %v1660 = vld [vmem:[%s1028 + $0xe2] sm:$0xff]
        %v1661 = vld [vmem:[%s1028 + $0xf2] sm:$0xff]
        %v1662 = vld [vmem:[%s1028 + $0xfa] sm:$0xff]
        %v1663 = vld [vmem:[%s1028 + $0x10a] sm:$0xff]
        %v1664 = vld [vmem:[%s1028 + $0x112] sm:$0xff]
        %v1665 = vld [vmem:[%s1028 + $0x122] sm:$0xff]
        %v1666 = vld [vmem:[%s1028 + $0x12a] sm:$0xff]
        %v1667 = vld [vmem:[%s1028 + $0x13a] sm:$0xff]
        %v1668 = vld [vmem:[%s1028 + $0x142] sm:$0xff]
        %v1669 = vld [vmem:[%s1028 + $0x152] sm:$0xff]
        %v1670 = vld [vmem:[%s1028 + $0x15a] sm:$0xff]
        %v1671 = vld [vmem:[%s1028 + $0x16a] sm:$0xff]
        %v1672 = vld [vmem:[%s1028 + $0x172] sm:$0xff]
        %v1673 = vpack.c.bf16 %v1642, %v1641
        %v1674 = vpack.c.bf16 %v1644, %v1643
        %v1675 = vpack.c.bf16 %v1646, %v1645
        %v1676 = vpack.c.bf16 %v1648, %v1647
        %v1677 = vpack.c.bf16 %v1650, %v1649
        %v1678 = vpack.c.bf16 %v1652, %v1651
        %v1679 = vpack.c.bf16 %v1654, %v1653
        %v1680 = vpack.c.bf16 %v1656, %v1655
        %v1681 = vpack.c.bf16 %v1658, %v1657
        %v1682 = vpack.c.bf16 %v1660, %v1659
        %v1683 = vpack.c.bf16 %v1662, %v1661
        %v1684 = vpack.c.bf16 %v1664, %v1663
        %v1685 = vpack.c.bf16 %v1666, %v1665
        %v1686 = vpack.c.bf16 %v1668, %v1667
        %v1687 = vpack.c.bf16 %v1670, %v1669
        %v1688 = vpack.c.bf16 %v1672, %v1671
        %s1689 = scalar_lea.vmem %s172, 320
        %v1690 = vld [vmem:[%s1689] sm:$0xf]
        %v1691 = vld [vmem:[%s1689 + $0x4] sm:$0xf]
        %v1692 = vld [vmem:[%s1689 + $0x8] sm:$0xf]
        %v1693 = vld [vmem:[%s1689 + $0xc] sm:$0xf]
        %v1694 = vld [vmem:[%s1689 + $0x10] sm:$0xf]
        %v1695 = vld [vmem:[%s1689 + $0x14] sm:$0xf]
        %v1696 = vld [vmem:[%s1689 + $0x18] sm:$0xf]
        %v1697 = vld [vmem:[%s1689 + $0x1c] sm:$0xf]
        %v1698 = vld [vmem:[%s1689 + $0x20] sm:$0xf]
        %v1699 = vld [vmem:[%s1689 + $0x24] sm:$0xf]
        %v1700 = vld [vmem:[%s1689 + $0x28] sm:$0xf]
        %v1701 = vld [vmem:[%s1689 + $0x2c] sm:$0xf]
        %v1702 = vld [vmem:[%s1689 + $0x30] sm:$0xf]
        %v1703 = vld [vmem:[%s1689 + $0x34] sm:$0xf]
        %v1704 = vld [vmem:[%s1689 + $0x38] sm:$0xf]
        %v1705 = vld [vmem:[%s1689 + $0x3c] sm:$0xf]
        %v1722 = vunpack.c.l.b16 %v1690
        %v1723 = vunpack.c.l.b16 %v1691
        %v1724 = vunpack.c.l.b16 %v1692
        %v1725 = vunpack.c.l.b16 %v1693
        %v1726 = vunpack.c.l.b16 %v1694
        %v1727 = vunpack.c.l.b16 %v1695
        %v1728 = vunpack.c.l.b16 %v1696
        %v1729 = vunpack.c.l.b16 %v1697
        %v1730 = vunpack.c.l.b16 %v1698
        %v1731 = vunpack.c.l.b16 %v1699
        %v1732 = vunpack.c.l.b16 %v1700
        %v1733 = vunpack.c.l.b16 %v1701
        %v1734 = vunpack.c.l.b16 %v1702
        %v1735 = vunpack.c.l.b16 %v1703
        %v1736 = vunpack.c.l.b16 %v1704
        %v1737 = vunpack.c.l.b16 %v1705
        %v1738 = vpack.c.b16 %v1723, %v1722
        %v1739 = vpack.c.b16 %v1725, %v1724
        %v1740 = vpack.c.b16 %v1727, %v1726
        %v1741 = vpack.c.b16 %v1729, %v1728
        %v1742 = vpack.c.b16 %v1731, %v1730
        %v1743 = vpack.c.b16 %v1733, %v1732
        %v1744 = vpack.c.b16 %v1735, %v1734
        %v1745 = vpack.c.b16 %v1737, %v1736
        %1754 = vmatprep.subr.bf16.mxu0 0
        %1755 = vmatpush1.bf16.msra.mxu0 %v1738
        %1756 = vmatprep.subr.bf16.mxu0 0
        %1757 = vmatpush1.bf16.msra.mxu0 %v1739
        %1758 = vmatprep.subr.bf16.mxu0 0
        %1759 = vmatpush1.bf16.msra.mxu0 %v1740
        %1760 = vmatprep.subr.bf16.mxu0 0
        %1761 = vmatpush1.bf16.msra.mxu0 %v1741
        %1762 = vmatprep.subr.bf16.mxu0 0
        %1763 = vmatpush1.bf16.msra.mxu0 %v1742
        %1764 = vmatprep.subr.bf16.mxu0 0
        %1765 = vmatpush1.bf16.msra.mxu0 %v1743
        %1766 = vmatprep.subr.bf16.mxu0 0
        %1767 = vmatpush1.bf16.msra.mxu0 %v1744
        %1768 = vmatprep.subr.bf16.mxu0 0
        %1769 = vmatpush1.bf16.msra.mxu0 %v1745
        %1770 = vmatprep.subr.bf16.mxu0 0
        %1771 = vmatpush1.bf16.msra.mxu0 0
        %1772 = vmatprep.subr.bf16.mxu0 0
        %1773 = vmatpush1.bf16.msra.mxu0 0
        %1774 = vmatprep.subr.bf16.mxu0 0
        %1775 = vmatpush1.bf16.msra.mxu0 0
        %1776 = vmatprep.subr.bf16.mxu0 0
        %1777 = vmatpush1.bf16.msra.mxu0 0
        %1778 = vmatprep.subr.bf16.mxu0 0
        %1779 = vmatpush1.bf16.msra.mxu0 0
        %1780 = vmatprep.subr.bf16.mxu0 0
        %1781 = vmatpush1.bf16.msra.mxu0 0
        %1782 = vmatprep.subr.bf16.mxu0 0
        %1783 = vmatpush1.bf16.msra.mxu0 0
        %1784 = vmatprep.subr.bf16.mxu0 0
        %1785 = vmatpush1.bf16.msra.mxu0 0
        %1786 = vmatprep.mubr.bf16.mxu0 0
        %1787 = vmatmul.mubr.bf16.gmra.mrb[0].mxu0 %v1673
        %v1788 = vpop.f32.mrb[0].mxu0
        %v1789 = vadd.f32 0.0, %v1788
        %v1790 = vpop.f32.mrb[0].mxu0
        %v1791 = vpop.f32.mrb[0].mxu0
        %v1792 = vadd.f32 0.0, %v1791
        %v1793 = vpop.f32.mrb[0].mxu0
        %1794 = vmatprep.mubr.bf16.mxu0 0
        %1795 = vmatmul.mubr.bf16.gmra.mrb[0].mxu0 %v1674
        %v1796 = vpop.f32.mrb[0].mxu0
        %v1797 = vadd.f32 0.0, %v1796
        %v1798 = vpop.f32.mrb[0].mxu0
        %v1799 = vpop.f32.mrb[0].mxu0
        %v1800 = vadd.f32 0.0, %v1799
        %v1801 = vpop.f32.mrb[0].mxu0
        %1802 = vmatprep.mubr.bf16.mxu0 0
        %1803 = vmatmul.mubr.bf16.gmra.mrb[0].mxu0 %v1675
        %v1804 = vpop.f32.mrb[0].mxu0
        %v1805 = vadd.f32 0.0, %v1804
        %v1806 = vpop.f32.mrb[0].mxu0
        %v1807 = vpop.f32.mrb[0].mxu0
        %v1808 = vadd.f32 0.0, %v1807
        %v1809 = vpop.f32.mrb[0].mxu0
        %1810 = vmatprep.mubr.bf16.mxu0 0
        %1811 = vmatmul.mubr.bf16.gmra.mrb[0].mxu0 %v1676
        %v1812 = vpop.f32.mrb[0].mxu0
        %v1813 = vadd.f32 0.0, %v1812
        %v1814 = vpop.f32.mrb[0].mxu0
        %v1815 = vpop.f32.mrb[0].mxu0
        %v1816 = vadd.f32 0.0, %v1815
        %v1817 = vpop.f32.mrb[0].mxu0
        %1818 = vmatprep.mubr.bf16.mxu0 0
        %1819 = vmatmul.mubr.bf16.gmra.mrb[0].mxu0 %v1677
        %v1820 = vpop.f32.mrb[0].mxu0
        %v1821 = vadd.f32 0.0, %v1820
        %v1822 = vpop.f32.mrb[0].mxu0
        %v1823 = vpop.f32.mrb[0].mxu0
        %v1824 = vadd.f32 0.0, %v1823
        %v1825 = vpop.f32.mrb[0].mxu0
        %1826 = vmatprep.mubr.bf16.mxu0 0
        %1827 = vmatmul.mubr.bf16.gmra.mrb[0].mxu0 %v1678
        %v1828 = vpop.f32.mrb[0].mxu0
        %v1829 = vadd.f32 0.0, %v1828
        %v1830 = vpop.f32.mrb[0].mxu0
        %v1831 = vpop.f32.mrb[0].mxu0
        %v1832 = vadd.f32 0.0, %v1831
        %v1833 = vpop.f32.mrb[0].mxu0
        %1834 = vmatprep.mubr.bf16.mxu0 0
        %1835 = vmatmul.mubr.bf16.gmra.mrb[0].mxu0 %v1679
        %v1836 = vpop.f32.mrb[0].mxu0
        %v1837 = vadd.f32 0.0, %v1836
        %v1838 = vpop.f32.mrb[0].mxu0
        %v1839 = vpop.f32.mrb[0].mxu0
        %v1840 = vadd.f32 0.0, %v1839
        %v1841 = vpop.f32.mrb[0].mxu0
        %1842 = vmatprep.mubr.bf16.mxu0 0
        %1843 = vmatmul.mubr.bf16.gmra.mrb[0].mxu0 %v1680
        %v1844 = vpop.f32.mrb[0].mxu0
        %v1845 = vadd.f32 0.0, %v1844
        %v1846 = vpop.f32.mrb[0].mxu0
        %v1847 = vpop.f32.mrb[0].mxu0
        %v1848 = vadd.f32 0.0, %v1847
        %v1849 = vpop.f32.mrb[0].mxu0
        %1850 = vmatprep.mubr.bf16.mxu0 0
        %1851 = vmatmul.mubr.bf16.gmra.mrb[0].mxu0 %v1681
        %v1852 = vpop.f32.mrb[0].mxu0
        %v1853 = vadd.f32 0.0, %v1852
        %v1854 = vpop.f32.mrb[0].mxu0
        %v1855 = vpop.f32.mrb[0].mxu0
        %v1856 = vadd.f32 0.0, %v1855
        %v1857 = vpop.f32.mrb[0].mxu0
        %1858 = vmatprep.mubr.bf16.mxu0 0
        %1859 = vmatmul.mubr.bf16.gmra.mrb[0].mxu0 %v1682
        %v1860 = vpop.f32.mrb[0].mxu0
        %v1861 = vadd.f32 0.0, %v1860
        %v1862 = vpop.f32.mrb[0].mxu0
        %v1863 = vpop.f32.mrb[0].mxu0
        %v1864 = vadd.f32 0.0, %v1863
        %v1865 = vpop.f32.mrb[0].mxu0
        %1866 = vmatprep.mubr.bf16.mxu0 0
        %1867 = vmatmul.mubr.bf16.gmra.mrb[0].mxu0 %v1683
        %v1868 = vpop.f32.mrb[0].mxu0
        %v1869 = vadd.f32 0.0, %v1868
        %v1870 = vpop.f32.mrb[0].mxu0
        %v1871 = vpop.f32.mrb[0].mxu0
        %v1872 = vadd.f32 0.0, %v1871
        %v1873 = vpop.f32.mrb[0].mxu0
        %1874 = vmatprep.mubr.bf16.mxu0 0
        %1875 = vmatmul.mubr.bf16.gmra.mrb[0].mxu0 %v1684
        %v1876 = vpop.f32.mrb[0].mxu0
        %v1877 = vadd.f32 0.0, %v1876
        %v1878 = vpop.f32.mrb[0].mxu0
        %v1879 = vpop.f32.mrb[0].mxu0
        %v1880 = vadd.f32 0.0, %v1879
        %v1881 = vpop.f32.mrb[0].mxu0
        %1882 = vmatprep.mubr.bf16.mxu0 0
        %1883 = vmatmul.mubr.bf16.gmra.mrb[0].mxu0 %v1685
        %v1884 = vpop.f32.mrb[0].mxu0
        %v1885 = vadd.f32 0.0, %v1884
        %v1886 = vpop.f32.mrb[0].mxu0
        %v1887 = vpop.f32.mrb[0].mxu0
        %v1888 = vadd.f32 0.0, %v1887
        %v1889 = vpop.f32.mrb[0].mxu0
        %1890 = vmatprep.mubr.bf16.mxu0 0
        %1891 = vmatmul.mubr.bf16.gmra.mrb[0].mxu0 %v1686
        %v1892 = vpop.f32.mrb[0].mxu0
        %v1893 = vadd.f32 0.0, %v1892
        %v1894 = vpop.f32.mrb[0].mxu0
        %v1895 = vpop.f32.mrb[0].mxu0
        %v1896 = vadd.f32 0.0, %v1895
        %v1897 = vpop.f32.mrb[0].mxu0
        %1898 = vmatprep.mubr.bf16.mxu0 0
        %1899 = vmatmul.mubr.bf16.gmra.mrb[0].mxu0 %v1687
        %v1900 = vpop.f32.mrb[0].mxu0
        %v1901 = vadd.f32 0.0, %v1900
        %v1902 = vpop.f32.mrb[0].mxu0
        %v1903 = vpop.f32.mrb[0].mxu0
        %v1904 = vadd.f32 0.0, %v1903
        %v1905 = vpop.f32.mrb[0].mxu0
        %1906 = vmatprep.mubr.bf16.mxu0 0
        %1907 = vmatmul.mubr.bf16.gmra.mrb[0].mxu0 %v1688
        %v1908 = vpop.f32.mrb[0].mxu0
        %v1909 = vadd.f32 0.0, %v1908
        %v1910 = vpop.f32.mrb[0].mxu0
        %v1911 = vpop.f32.mrb[0].mxu0
        %v1912 = vadd.f32 0.0, %v1911
        %v1913 = vpop.f32.mrb[0].mxu0
        %1914 = vdwg.mxu0
        %v1915 = vadd.f32 %v1609, %v1789
        %v1916 = vadd.f32 %v1610, %v1792
        %v1917 = vadd.f32 %v1611, %v1797
        %v1918 = vadd.f32 %v1612, %v1800
        %v1919 = vadd.f32 %v1613, %v1805
        %v1920 = vadd.f32 %v1614, %v1808
        %v1921 = vadd.f32 %v1615, %v1813
        %v1922 = vadd.f32 %v1616, %v1816
        %v1923 = vadd.f32 %v1617, %v1821
        %v1924 = vadd.f32 %v1618, %v1824
        %v1925 = vadd.f32 %v1619, %v1829
        %v1926 = vadd.f32 %v1620, %v1832
        %v1927 = vadd.f32 %v1621, %v1837
        %v1928 = vadd.f32 %v1622, %v1840
        %v1929 = vadd.f32 %v1623, %v1845
        %v1930 = vadd.f32 %v1624, %v1848
        %v1931 = vadd.f32 %v1625, %v1853
        %v1932 = vadd.f32 %v1626, %v1856
        %v1933 = vadd.f32 %v1627, %v1861
        %v1934 = vadd.f32 %v1628, %v1864
        %v1935 = vadd.f32 %v1629, %v1869
        %v1936 = vadd.f32 %v1630, %v1872
        %v1937 = vadd.f32 %v1631, %v1877
        %v1938 = vadd.f32 %v1632, %v1880
        %v1939 = vadd.f32 %v1633, %v1885
        %v1940 = vadd.f32 %v1634, %v1888
        %v1941 = vadd.f32 %v1635, %v1893
        %v1942 = vadd.f32 %v1636, %v1896
        %v1943 = vadd.f32 %v1637, %v1901
        %v1944 = vadd.f32 %v1638, %v1904
        %v1945 = vadd.f32 %v1639, %v1909
        %v1946 = vadd.f32 %v1640, %v1912
        %s1947 = scalar_lea.vmem %s168, 48
        %v1948 = vld [vmem:[%s1947] sm:$0xff]
        %v1949 = vld [vmem:[%s1947 + $0x8] sm:$0xff]
        %v1950 = vld [vmem:[%s1947 + $0x18] sm:$0xff]
        %v1951 = vld [vmem:[%s1947 + $0x20] sm:$0xff]
        %v1952 = vld [vmem:[%s1947 + $0x30] sm:$0xff]
        %v1953 = vld [vmem:[%s1947 + $0x38] sm:$0xff]
        %v1954 = vld [vmem:[%s1947 + $0x48] sm:$0xff]
        %v1955 = vld [vmem:[%s1947 + $0x50] sm:$0xff]
        %v1956 = vld [vmem:[%s1947 + $0x60] sm:$0xff]
        %v1957 = vld [vmem:[%s1947 + $0x68] sm:$0xff]
        %v1958 = vld [vmem:[%s1947 + $0x78] sm:$0xff]
        %v1959 = vld [vmem:[%s1947 + $0x80] sm:$0xff]
        %v1960 = vld [vmem:[%s1947 + $0x90] sm:$0xff]
        %v1961 = vld [vmem:[%s1947 + $0x98] sm:$0xff]
        %v1962 = vld [vmem:[%s1947 + $0xa8] sm:$0xff]
        %v1963 = vld [vmem:[%s1947 + $0xb0] sm:$0xff]
        %v1964 = vld [vmem:[%s1947 + $0xc0] sm:$0xff]
        %v1965 = vld [vmem:[%s1947 + $0xc8] sm:$0xff]
        %v1966 = vld [vmem:[%s1947 + $0xd8] sm:$0xff]
        %v1967 = vld [vmem:[%s1947 + $0xe0] sm:$0xff]
        %v1968 = vld [vmem:[%s1947 + $0xf0] sm:$0xff]
        %v1969 = vld [vmem:[%s1947 + $0xf8] sm:$0xff]
        %v1970 = vld [vmem:[%s1947 + $0x108] sm:$0xff]
        %v1971 = vld [vmem:[%s1947 + $0x110] sm:$0xff]
        %v1972 = vld [vmem:[%s1947 + $0x120] sm:$0xff]
        %v1973 = vld [vmem:[%s1947 + $0x128] sm:$0xff]
        %v1974 = vld [vmem:[%s1947 + $0x138] sm:$0xff]
        %v1975 = vld [vmem:[%s1947 + $0x140] sm:$0xff]
        %v1976 = vld [vmem:[%s1947 + $0x150] sm:$0xff]
        %v1977 = vld [vmem:[%s1947 + $0x158] sm:$0xff]
        %v1978 = vld [vmem:[%s1947 + $0x168] sm:$0xff]
        %v1979 = vld [vmem:[%s1947 + $0x170] sm:$0xff]
        %v1980 = vpack.c.bf16 %v1949, %v1948
        %v1981 = vpack.c.bf16 %v1951, %v1950
        %v1982 = vpack.c.bf16 %v1953, %v1952
        %v1983 = vpack.c.bf16 %v1955, %v1954
        %v1984 = vpack.c.bf16 %v1957, %v1956
        %v1985 = vpack.c.bf16 %v1959, %v1958
        %v1986 = vpack.c.bf16 %v1961, %v1960
        %v1987 = vpack.c.bf16 %v1963, %v1962
        %v1988 = vpack.c.bf16 %v1965, %v1964
        %v1989 = vpack.c.bf16 %v1967, %v1966
        %v1990 = vpack.c.bf16 %v1969, %v1968
        %v1991 = vpack.c.bf16 %v1971, %v1970
        %v1992 = vpack.c.bf16 %v1973, %v1972
        %v1993 = vpack.c.bf16 %v1975, %v1974
        %v1994 = vpack.c.bf16 %v1977, %v1976
        %v1995 = vpack.c.bf16 %v1979, %v1978
        %s1996 = scalar_lea.vmem %s172, 384
        %v1997 = vld [vmem:[%s1996] sm:$0xf]
        %v1998 = vld [vmem:[%s1996 + $0x4] sm:$0xf]
        %v1999 = vld [vmem:[%s1996 + $0x8] sm:$0xf]
        %v2000 = vld [vmem:[%s1996 + $0xc] sm:$0xf]
        %v2001 = vld [vmem:[%s1996 + $0x10] sm:$0xf]
        %v2002 = vld [vmem:[%s1996 + $0x14] sm:$0xf]
        %v2003 = vld [vmem:[%s1996 + $0x18] sm:$0xf]
        %v2004 = vld [vmem:[%s1996 + $0x1c] sm:$0xf]
        %v2005 = vld [vmem:[%s1996 + $0x20] sm:$0xf]
        %v2006 = vld [vmem:[%s1996 + $0x24] sm:$0xf]
        %v2007 = vld [vmem:[%s1996 + $0x28] sm:$0xf]
        %v2008 = vld [vmem:[%s1996 + $0x2c] sm:$0xf]
        %v2009 = vld [vmem:[%s1996 + $0x30] sm:$0xf]
        %v2010 = vld [vmem:[%s1996 + $0x34] sm:$0xf]
        %v2011 = vld [vmem:[%s1996 + $0x38] sm:$0xf]
        %v2012 = vld [vmem:[%s1996 + $0x3c] sm:$0xf]
        %v2029 = vunpack.c.l.b16 %v1997
        %v2030 = vunpack.c.l.b16 %v1998
        %v2031 = vunpack.c.l.b16 %v1999
        %v2032 = vunpack.c.l.b16 %v2000
        %v2033 = vunpack.c.l.b16 %v2001
        %v2034 = vunpack.c.l.b16 %v2002
        %v2035 = vunpack.c.l.b16 %v2003
        %v2036 = vunpack.c.l.b16 %v2004
        %v2037 = vunpack.c.l.b16 %v2005
        %v2038 = vunpack.c.l.b16 %v2006
        %v2039 = vunpack.c.l.b16 %v2007
        %v2040 = vunpack.c.l.b16 %v2008
        %v2041 = vunpack.c.l.b16 %v2009
        %v2042 = vunpack.c.l.b16 %v2010
        %v2043 = vunpack.c.l.b16 %v2011
        %v2044 = vunpack.c.l.b16 %v2012
        %v2045 = vpack.c.b16 %v2030, %v2029
        %v2046 = vpack.c.b16 %v2032, %v2031
        %v2047 = vpack.c.b16 %v2034, %v2033
        %v2048 = vpack.c.b16 %v2036, %v2035
        %v2049 = vpack.c.b16 %v2038, %v2037
        %v2050 = vpack.c.b16 %v2040, %v2039
        %v2051 = vpack.c.b16 %v2042, %v2041
        %v2052 = vpack.c.b16 %v2044, %v2043
        %2061 = vmatprep.subr.bf16.mxu0 0
        %2062 = vmatpush1.bf16.msra.mxu0 %v2045
        %2063 = vmatprep.subr.bf16.mxu0 0
        %2064 = vmatpush1.bf16.msra.mxu0 %v2046
        %2065 = vmatprep.subr.bf16.mxu0 0
        %2066 = vmatpush1.bf16.msra.mxu0 %v2047
        %2067 = vmatprep.subr.bf16.mxu0 0
        %2068 = vmatpush1.bf16.msra.mxu0 %v2048
        %2069 = vmatprep.subr.bf16.mxu0 0
        %2070 = vmatpush1.bf16.msra.mxu0 %v2049
        %2071 = vmatprep.subr.bf16.mxu0 0
        %2072 = vmatpush1.bf16.msra.mxu0 %v2050
        %2073 = vmatprep.subr.bf16.mxu0 0
        %2074 = vmatpush1.bf16.msra.mxu0 %v2051
        %2075 = vmatprep.subr.bf16.mxu0 0
        %2076 = vmatpush1.bf16.msra.mxu0 %v2052
        %2077 = vmatprep.subr.bf16.mxu0 0
        %2078 = vmatpush1.bf16.msra.mxu0 0
        %2079 = vmatprep.subr.bf16.mxu0 0
        %2080 = vmatpush1.bf16.msra.mxu0 0
        %2081 = vmatprep.subr.bf16.mxu0 0
        %2082 = vmatpush1.bf16.msra.mxu0 0
        %2083 = vmatprep.subr.bf16.mxu0 0
        %2084 = vmatpush1.bf16.msra.mxu0 0
        %2085 = vmatprep.subr.bf16.mxu0 0
        %2086 = vmatpush1.bf16.msra.mxu0 0
        %2087 = vmatprep.subr.bf16.mxu0 0
        %2088 = vmatpush1.bf16.msra.mxu0 0
        %2089 = vmatprep.subr.bf16.mxu0 0
        %2090 = vmatpush1.bf16.msra.mxu0 0
        %2091 = vmatprep.subr.bf16.mxu0 0
        %2092 = vmatpush1.bf16.msra.mxu0 0
        %2093 = vmatprep.mubr.bf16.mxu0 0
        %2094 = vmatmul.mubr.bf16.gmra.mrb[0].mxu0 %v1980
        %v2095 = vpop.f32.mrb[0].mxu0
        %v2096 = vadd.f32 0.0, %v2095
        %v2097 = vpop.f32.mrb[0].mxu0
        %v2098 = vpop.f32.mrb[0].mxu0
        %v2099 = vadd.f32 0.0, %v2098
        %v2100 = vpop.f32.mrb[0].mxu0
        %2101 = vmatprep.mubr.bf16.mxu0 0
        %2102 = vmatmul.mubr.bf16.gmra.mrb[0].mxu0 %v1981
        %v2103 = vpop.f32.mrb[0].mxu0
        %v2104 = vadd.f32 0.0, %v2103
        %v2105 = vpop.f32.mrb[0].mxu0
        %v2106 = vpop.f32.mrb[0].mxu0
        %v2107 = vadd.f32 0.0, %v2106
        %v2108 = vpop.f32.mrb[0].mxu0
        %2109 = vmatprep.mubr.bf16.mxu0 0
        %2110 = vmatmul.mubr.bf16.gmra.mrb[0].mxu0 %v1982
        %v2111 = vpop.f32.mrb[0].mxu0
        %v2112 = vadd.f32 0.0, %v2111
        %v2113 = vpop.f32.mrb[0].mxu0
        %v2114 = vpop.f32.mrb[0].mxu0
        %v2115 = vadd.f32 0.0, %v2114
        %v2116 = vpop.f32.mrb[0].mxu0
        %2117 = vmatprep.mubr.bf16.mxu0 0
        %2118 = vmatmul.mubr.bf16.gmra.mrb[0].mxu0 %v1983
        %v2119 = vpop.f32.mrb[0].mxu0
        %v2120 = vadd.f32 0.0, %v2119
        %v2121 = vpop.f32.mrb[0].mxu0
        %v2122 = vpop.f32.mrb[0].mxu0
        %v2123 = vadd.f32 0.0, %v2122
        %v2124 = vpop.f32.mrb[0].mxu0
        %2125 = vmatprep.mubr.bf16.mxu0 0
        %2126 = vmatmul.mubr.bf16.gmra.mrb[0].mxu0 %v1984
        %v2127 = vpop.f32.mrb[0].mxu0
        %v2128 = vadd.f32 0.0, %v2127
        %v2129 = vpop.f32.mrb[0].mxu0
        %v2130 = vpop.f32.mrb[0].mxu0
        %v2131 = vadd.f32 0.0, %v2130
        %v2132 = vpop.f32.mrb[0].mxu0
        %2133 = vmatprep.mubr.bf16.mxu0 0
        %2134 = vmatmul.mubr.bf16.gmra.mrb[0].mxu0 %v1985
        %v2135 = vpop.f32.mrb[0].mxu0
        %v2136 = vadd.f32 0.0, %v2135
        %v2137 = vpop.f32.mrb[0].mxu0
        %v2138 = vpop.f32.mrb[0].mxu0
        %v2139 = vadd.f32 0.0, %v2138
        %v2140 = vpop.f32.mrb[0].mxu0
        %2141 = vmatprep.mubr.bf16.mxu0 0
        %2142 = vmatmul.mubr.bf16.gmra.mrb[0].mxu0 %v1986
        %v2143 = vpop.f32.mrb[0].mxu0
        %v2144 = vadd.f32 0.0, %v2143
        %v2145 = vpop.f32.mrb[0].mxu0
        %v2146 = vpop.f32.mrb[0].mxu0
        %v2147 = vadd.f32 0.0, %v2146
        %v2148 = vpop.f32.mrb[0].mxu0
        %2149 = vmatprep.mubr.bf16.mxu0 0
        %2150 = vmatmul.mubr.bf16.gmra.mrb[0].mxu0 %v1987
        %v2151 = vpop.f32.mrb[0].mxu0
        %v2152 = vadd.f32 0.0, %v2151
        %v2153 = vpop.f32.mrb[0].mxu0
        %v2154 = vpop.f32.mrb[0].mxu0
        %v2155 = vadd.f32 0.0, %v2154
        %v2156 = vpop.f32.mrb[0].mxu0
        %2157 = vmatprep.mubr.bf16.mxu0 0
        %2158 = vmatmul.mubr.bf16.gmra.mrb[0].mxu0 %v1988
        %v2159 = vpop.f32.mrb[0].mxu0
        %v2160 = vadd.f32 0.0, %v2159
        %v2161 = vpop.f32.mrb[0].mxu0
        %v2162 = vpop.f32.mrb[0].mxu0
        %v2163 = vadd.f32 0.0, %v2162
        %v2164 = vpop.f32.mrb[0].mxu0
        %2165 = vmatprep.mubr.bf16.mxu0 0
        %2166 = vmatmul.mubr.bf16.gmra.mrb[0].mxu0 %v1989
        %v2167 = vpop.f32.mrb[0].mxu0
        %v2168 = vadd.f32 0.0, %v2167
        %v2169 = vpop.f32.mrb[0].mxu0
        %v2170 = vpop.f32.mrb[0].mxu0
        %v2171 = vadd.f32 0.0, %v2170
        %v2172 = vpop.f32.mrb[0].mxu0
        %2173 = vmatprep.mubr.bf16.mxu0 0
        %2174 = vmatmul.mubr.bf16.gmra.mrb[0].mxu0 %v1990
        %v2175 = vpop.f32.mrb[0].mxu0
        %v2176 = vadd.f32 0.0, %v2175
        %v2177 = vpop.f32.mrb[0].mxu0
        %v2178 = vpop.f32.mrb[0].mxu0
        %v2179 = vadd.f32 0.0, %v2178
        %v2180 = vpop.f32.mrb[0].mxu0
        %2181 = vmatprep.mubr.bf16.mxu0 0
        %2182 = vmatmul.mubr.bf16.gmra.mrb[0].mxu0 %v1991
        %v2183 = vpop.f32.mrb[0].mxu0
        %v2184 = vadd.f32 0.0, %v2183
        %v2185 = vpop.f32.mrb[0].mxu0
        %v2186 = vpop.f32.mrb[0].mxu0
        %v2187 = vadd.f32 0.0, %v2186
        %v2188 = vpop.f32.mrb[0].mxu0
        %2189 = vmatprep.mubr.bf16.mxu0 0
        %2190 = vmatmul.mubr.bf16.gmra.mrb[0].mxu0 %v1992
        %v2191 = vpop.f32.mrb[0].mxu0
        %v2192 = vadd.f32 0.0, %v2191
        %v2193 = vpop.f32.mrb[0].mxu0
        %v2194 = vpop.f32.mrb[0].mxu0
        %v2195 = vadd.f32 0.0, %v2194
        %v2196 = vpop.f32.mrb[0].mxu0
        %2197 = vmatprep.mubr.bf16.mxu0 0
        %2198 = vmatmul.mubr.bf16.gmra.mrb[0].mxu0 %v1993
        %v2199 = vpop.f32.mrb[0].mxu0
        %v2200 = vadd.f32 0.0, %v2199
        %v2201 = vpop.f32.mrb[0].mxu0
        %v2202 = vpop.f32.mrb[0].mxu0
        %v2203 = vadd.f32 0.0, %v2202
        %v2204 = vpop.f32.mrb[0].mxu0
        %2205 = vmatprep.mubr.bf16.mxu0 0
        %2206 = vmatmul.mubr.bf16.gmra.mrb[0].mxu0 %v1994
        %v2207 = vpop.f32.mrb[0].mxu0
        %v2208 = vadd.f32 0.0, %v2207
        %v2209 = vpop.f32.mrb[0].mxu0
        %v2210 = vpop.f32.mrb[0].mxu0
        %v2211 = vadd.f32 0.0, %v2210
        %v2212 = vpop.f32.mrb[0].mxu0
        %2213 = vmatprep.mubr.bf16.mxu0 0
        %2214 = vmatmul.mubr.bf16.gmra.mrb[0].mxu0 %v1995
        %v2215 = vpop.f32.mrb[0].mxu0
        %v2216 = vadd.f32 0.0, %v2215
        %v2217 = vpop.f32.mrb[0].mxu0
        %v2218 = vpop.f32.mrb[0].mxu0
        %v2219 = vadd.f32 0.0, %v2218
        %v2220 = vpop.f32.mrb[0].mxu0
        %2221 = vdwg.mxu0
        %v2222 = vadd.f32 %v1915, %v2096
        %v2223 = vadd.f32 %v1916, %v2099
        %v2224 = vadd.f32 %v1917, %v2104
        %v2225 = vadd.f32 %v1918, %v2107
        %v2226 = vadd.f32 %v1919, %v2112
        %v2227 = vadd.f32 %v1920, %v2115
        %v2228 = vadd.f32 %v1921, %v2120
        %v2229 = vadd.f32 %v1922, %v2123
        %v2230 = vadd.f32 %v1923, %v2128
        %v2231 = vadd.f32 %v1924, %v2131
        %v2232 = vadd.f32 %v1925, %v2136
        %v2233 = vadd.f32 %v1926, %v2139
        %v2234 = vadd.f32 %v1927, %v2144
        %v2235 = vadd.f32 %v1928, %v2147
        %v2236 = vadd.f32 %v1929, %v2152
        %v2237 = vadd.f32 %v1930, %v2155
        %v2238 = vadd.f32 %v1931, %v2160
        %v2239 = vadd.f32 %v1932, %v2163
        %v2240 = vadd.f32 %v1933, %v2168
        %v2241 = vadd.f32 %v1934, %v2171
        %v2242 = vadd.f32 %v1935, %v2176
        %v2243 = vadd.f32 %v1936, %v2179
        %v2244 = vadd.f32 %v1937, %v2184
        %v2245 = vadd.f32 %v1938, %v2187
        %v2246 = vadd.f32 %v1939, %v2192
        %v2247 = vadd.f32 %v1940, %v2195
        %v2248 = vadd.f32 %v1941, %v2200
        %v2249 = vadd.f32 %v1942, %v2203
        %v2250 = vadd.f32 %v1943, %v2208
        %v2251 = vadd.f32 %v1944, %v2211
        %v2252 = vadd.f32 %v1945, %v2216
        %v2253 = vadd.f32 %v1946, %v2219
        %v2254 = vld [vmem:[%s1947 + $0x1] sm:$0xff]
        %v2255 = vld [vmem:[%s1947 + $0x9] sm:$0xff]
        %v2256 = vld [vmem:[%s1947 + $0x19] sm:$0xff]
        %v2257 = vld [vmem:[%s1947 + $0x21] sm:$0xff]
        %v2258 = vld [vmem:[%s1947 + $0x31] sm:$0xff]
        %v2259 = vld [vmem:[%s1947 + $0x39] sm:$0xff]
        %v2260 = vld [vmem:[%s1947 + $0x49] sm:$0xff]
        %v2261 = vld [vmem:[%s1947 + $0x51] sm:$0xff]
        %v2262 = vld [vmem:[%s1947 + $0x61] sm:$0xff]
        %v2263 = vld [vmem:[%s1947 + $0x69] sm:$0xff]
        %v2264 = vld [vmem:[%s1947 + $0x79] sm:$0xff]
        %v2265 = vld [vmem:[%s1947 + $0x81] sm:$0xff]
        %v2266 = vld [vmem:[%s1947 + $0x91] sm:$0xff]
        %v2267 = vld [vmem:[%s1947 + $0x99] sm:$0xff]
        %v2268 = vld [vmem:[%s1947 + $0xa9] sm:$0xff]
        %v2269 = vld [vmem:[%s1947 + $0xb1] sm:$0xff]
        %v2270 = vld [vmem:[%s1947 + $0xc1] sm:$0xff]
        %v2271 = vld [vmem:[%s1947 + $0xc9] sm:$0xff]
        %v2272 = vld [vmem:[%s1947 + $0xd9] sm:$0xff]
        %v2273 = vld [vmem:[%s1947 + $0xe1] sm:$0xff]
        %v2274 = vld [vmem:[%s1947 + $0xf1] sm:$0xff]
        %v2275 = vld [vmem:[%s1947 + $0xf9] sm:$0xff]
        %v2276 = vld [vmem:[%s1947 + $0x109] sm:$0xff]
        %v2277 = vld [vmem:[%s1947 + $0x111] sm:$0xff]
        %v2278 = vld [vmem:[%s1947 + $0x121] sm:$0xff]
        %v2279 = vld [vmem:[%s1947 + $0x129] sm:$0xff]
        %v2280 = vld [vmem:[%s1947 + $0x139] sm:$0xff]
        %v2281 = vld [vmem:[%s1947 + $0x141] sm:$0xff]
        %v2282 = vld [vmem:[%s1947 + $0x151] sm:$0xff]
        %v2283 = vld [vmem:[%s1947 + $0x159] sm:$0xff]
        %v2284 = vld [vmem:[%s1947 + $0x169] sm:$0xff]
        %v2285 = vld [vmem:[%s1947 + $0x171] sm:$0xff]
        %v2286 = vpack.c.bf16 %v2255, %v2254
        %v2287 = vpack.c.bf16 %v2257, %v2256
        %v2288 = vpack.c.bf16 %v2259, %v2258
        %v2289 = vpack.c.bf16 %v2261, %v2260
        %v2290 = vpack.c.bf16 %v2263, %v2262
        %v2291 = vpack.c.bf16 %v2265, %v2264
        %v2292 = vpack.c.bf16 %v2267, %v2266
        %v2293 = vpack.c.bf16 %v2269, %v2268
        %v2294 = vpack.c.bf16 %v2271, %v2270
        %v2295 = vpack.c.bf16 %v2273, %v2272
        %v2296 = vpack.c.bf16 %v2275, %v2274
        %v2297 = vpack.c.bf16 %v2277, %v2276
        %v2298 = vpack.c.bf16 %v2279, %v2278
        %v2299 = vpack.c.bf16 %v2281, %v2280
        %v2300 = vpack.c.bf16 %v2283, %v2282
        %v2301 = vpack.c.bf16 %v2285, %v2284
        %s2302 = scalar_lea.vmem %s172, 448
        %v2303 = vld [vmem:[%s2302] sm:$0xf]
        %v2304 = vld [vmem:[%s2302 + $0x4] sm:$0xf]
        %v2305 = vld [vmem:[%s2302 + $0x8] sm:$0xf]
        %v2306 = vld [vmem:[%s2302 + $0xc] sm:$0xf]
        %v2307 = vld [vmem:[%s2302 + $0x10] sm:$0xf]
        %v2308 = vld [vmem:[%s2302 + $0x14] sm:$0xf]
        %v2309 = vld [vmem:[%s2302 + $0x18] sm:$0xf]
        %v2310 = vld [vmem:[%s2302 + $0x1c] sm:$0xf]
        %v2311 = vld [vmem:[%s2302 + $0x20] sm:$0xf]
        %v2312 = vld [vmem:[%s2302 + $0x24] sm:$0xf]
        %v2313 = vld [vmem:[%s2302 + $0x28] sm:$0xf]
        %v2314 = vld [vmem:[%s2302 + $0x2c] sm:$0xf]
        %v2315 = vld [vmem:[%s2302 + $0x30] sm:$0xf]
        %v2316 = vld [vmem:[%s2302 + $0x34] sm:$0xf]
        %v2317 = vld [vmem:[%s2302 + $0x38] sm:$0xf]
        %v2318 = vld [vmem:[%s2302 + $0x3c] sm:$0xf]
        %v2335 = vunpack.c.l.b16 %v2303
        %v2336 = vunpack.c.l.b16 %v2304
        %v2337 = vunpack.c.l.b16 %v2305
        %v2338 = vunpack.c.l.b16 %v2306
        %v2339 = vunpack.c.l.b16 %v2307
        %v2340 = vunpack.c.l.b16 %v2308
        %v2341 = vunpack.c.l.b16 %v2309
        %v2342 = vunpack.c.l.b16 %v2310
        %v2343 = vunpack.c.l.b16 %v2311
        %v2344 = vunpack.c.l.b16 %v2312
        %v2345 = vunpack.c.l.b16 %v2313
        %v2346 = vunpack.c.l.b16 %v2314
        %v2347 = vunpack.c.l.b16 %v2315
        %v2348 = vunpack.c.l.b16 %v2316
        %v2349 = vunpack.c.l.b16 %v2317
        %v2350 = vunpack.c.l.b16 %v2318
        %v2351 = vpack.c.b16 %v2336, %v2335
        %v2352 = vpack.c.b16 %v2338, %v2337
        %v2353 = vpack.c.b16 %v2340, %v2339
        %v2354 = vpack.c.b16 %v2342, %v2341
        %v2355 = vpack.c.b16 %v2344, %v2343
        %v2356 = vpack.c.b16 %v2346, %v2345
        %v2357 = vpack.c.b16 %v2348, %v2347
        %v2358 = vpack.c.b16 %v2350, %v2349
        %2367 = vmatprep.subr.bf16.mxu0 0
        %2368 = vmatpush1.bf16.msra.mxu0 %v2351
        %2369 = vmatprep.subr.bf16.mxu0 0
        %2370 = vmatpush1.bf16.msra.mxu0 %v2352
        %2371 = vmatprep.subr.bf16.mxu0 0
        %2372 = vmatpush1.bf16.msra.mxu0 %v2353
        %2373 = vmatprep.subr.bf16.mxu0 0
        %2374 = vmatpush1.bf16.msra.mxu0 %v2354
        %2375 = vmatprep.subr.bf16.mxu0 0
        %2376 = vmatpush1.bf16.msra.mxu0 %v2355
        %2377 = vmatprep.subr.bf16.mxu0 0
        %2378 = vmatpush1.bf16.msra.mxu0 %v2356
        %2379 = vmatprep.subr.bf16.mxu0 0
        %2380 = vmatpush1.bf16.msra.mxu0 %v2357
        %2381 = vmatprep.subr.bf16.mxu0 0
        %2382 = vmatpush1.bf16.msra.mxu0 %v2358
        %2383 = vmatprep.subr.bf16.mxu0 0
        %2384 = vmatpush1.bf16.msra.mxu0 0
        %2385 = vmatprep.subr.bf16.mxu0 0
        %2386 = vmatpush1.bf16.msra.mxu0 0
        %2387 = vmatprep.subr.bf16.mxu0 0
        %2388 = vmatpush1.bf16.msra.mxu0 0
        %2389 = vmatprep.subr.bf16.mxu0 0
        %2390 = vmatpush1.bf16.msra.mxu0 0
        %2391 = vmatprep.subr.bf16.mxu0 0
        %2392 = vmatpush1.bf16.msra.mxu0 0
        %2393 = vmatprep.subr.bf16.mxu0 0
        %2394 = vmatpush1.bf16.msra.mxu0 0
        %2395 = vmatprep.subr.bf16.mxu0 0
        %2396 = vmatpush1.bf16.msra.mxu0 0
        %2397 = vmatprep.subr.bf16.mxu0 0
        %2398 = vmatpush1.bf16.msra.mxu0 0
        %2399 = vmatprep.mubr.bf16.mxu0 0
        %2400 = vmatmul.mubr.bf16.gmra.mrb[0].mxu0 %v2286
        %v2401 = vpop.f32.mrb[0].mxu0
        %v2402 = vadd.f32 0.0, %v2401
        %v2403 = vpop.f32.mrb[0].mxu0
        %v2404 = vpop.f32.mrb[0].mxu0
        %v2405 = vadd.f32 0.0, %v2404
        %v2406 = vpop.f32.mrb[0].mxu0
        %2407 = vmatprep.mubr.bf16.mxu0 0
        %2408 = vmatmul.mubr.bf16.gmra.mrb[0].mxu0 %v2287
        %v2409 = vpop.f32.mrb[0].mxu0
        %v2410 = vadd.f32 0.0, %v2409
        %v2411 = vpop.f32.mrb[0].mxu0
        %v2412 = vpop.f32.mrb[0].mxu0
        %v2413 = vadd.f32 0.0, %v2412
        %v2414 = vpop.f32.mrb[0].mxu0
        %2415 = vmatprep.mubr.bf16.mxu0 0
        %2416 = vmatmul.mubr.bf16.gmra.mrb[0].mxu0 %v2288
        %v2417 = vpop.f32.mrb[0].mxu0
        %v2418 = vadd.f32 0.0, %v2417
        %v2419 = vpop.f32.mrb[0].mxu0
        %v2420 = vpop.f32.mrb[0].mxu0
        %v2421 = vadd.f32 0.0, %v2420
        %v2422 = vpop.f32.mrb[0].mxu0
        %2423 = vmatprep.mubr.bf16.mxu0 0
        %2424 = vmatmul.mubr.bf16.gmra.mrb[0].mxu0 %v2289
        %v2425 = vpop.f32.mrb[0].mxu0
        %v2426 = vadd.f32 0.0, %v2425
        %v2427 = vpop.f32.mrb[0].mxu0
        %v2428 = vpop.f32.mrb[0].mxu0
        %v2429 = vadd.f32 0.0, %v2428
        %v2430 = vpop.f32.mrb[0].mxu0
        %2431 = vmatprep.mubr.bf16.mxu0 0
        %2432 = vmatmul.mubr.bf16.gmra.mrb[0].mxu0 %v2290
        %v2433 = vpop.f32.mrb[0].mxu0
        %v2434 = vadd.f32 0.0, %v2433
        %v2435 = vpop.f32.mrb[0].mxu0
        %v2436 = vpop.f32.mrb[0].mxu0
        %v2437 = vadd.f32 0.0, %v2436
        %v2438 = vpop.f32.mrb[0].mxu0
        %2439 = vmatprep.mubr.bf16.mxu0 0
        %2440 = vmatmul.mubr.bf16.gmra.mrb[0].mxu0 %v2291
        %v2441 = vpop.f32.mrb[0].mxu0
        %v2442 = vadd.f32 0.0, %v2441
        %v2443 = vpop.f32.mrb[0].mxu0
        %v2444 = vpop.f32.mrb[0].mxu0
        %v2445 = vadd.f32 0.0, %v2444
        %v2446 = vpop.f32.mrb[0].mxu0
        %2447 = vmatprep.mubr.bf16.mxu0 0
        %2448 = vmatmul.mubr.bf16.gmra.mrb[0].mxu0 %v2292
        %v2449 = vpop.f32.mrb[0].mxu0
        %v2450 = vadd.f32 0.0, %v2449
        %v2451 = vpop.f32.mrb[0].mxu0
        %v2452 = vpop.f32.mrb[0].mxu0
        %v2453 = vadd.f32 0.0, %v2452
        %v2454 = vpop.f32.mrb[0].mxu0
        %2455 = vmatprep.mubr.bf16.mxu0 0
        %2456 = vmatmul.mubr.bf16.gmra.mrb[0].mxu0 %v2293
        %v2457 = vpop.f32.mrb[0].mxu0
        %v2458 = vadd.f32 0.0, %v2457
        %v2459 = vpop.f32.mrb[0].mxu0
        %v2460 = vpop.f32.mrb[0].mxu0
        %v2461 = vadd.f32 0.0, %v2460
        %v2462 = vpop.f32.mrb[0].mxu0
        %2463 = vmatprep.mubr.bf16.mxu0 0
        %2464 = vmatmul.mubr.bf16.gmra.mrb[0].mxu0 %v2294
        %v2465 = vpop.f32.mrb[0].mxu0
        %v2466 = vadd.f32 0.0, %v2465
        %v2467 = vpop.f32.mrb[0].mxu0
        %v2468 = vpop.f32.mrb[0].mxu0
        %v2469 = vadd.f32 0.0, %v2468
        %v2470 = vpop.f32.mrb[0].mxu0
        %2471 = vmatprep.mubr.bf16.mxu0 0
        %2472 = vmatmul.mubr.bf16.gmra.mrb[0].mxu0 %v2295
        %v2473 = vpop.f32.mrb[0].mxu0
        %v2474 = vadd.f32 0.0, %v2473
        %v2475 = vpop.f32.mrb[0].mxu0
        %v2476 = vpop.f32.mrb[0].mxu0
        %v2477 = vadd.f32 0.0, %v2476
        %v2478 = vpop.f32.mrb[0].mxu0
        %2479 = vmatprep.mubr.bf16.mxu0 0
        %2480 = vmatmul.mubr.bf16.gmra.mrb[0].mxu0 %v2296
        %v2481 = vpop.f32.mrb[0].mxu0
        %v2482 = vadd.f32 0.0, %v2481
        %v2483 = vpop.f32.mrb[0].mxu0
        %v2484 = vpop.f32.mrb[0].mxu0
        %v2485 = vadd.f32 0.0, %v2484
        %v2486 = vpop.f32.mrb[0].mxu0
        %2487 = vmatprep.mubr.bf16.mxu0 0
        %2488 = vmatmul.mubr.bf16.gmra.mrb[0].mxu0 %v2297
        %v2489 = vpop.f32.mrb[0].mxu0
        %v2490 = vadd.f32 0.0, %v2489
        %v2491 = vpop.f32.mrb[0].mxu0
        %v2492 = vpop.f32.mrb[0].mxu0
        %v2493 = vadd.f32 0.0, %v2492
        %v2494 = vpop.f32.mrb[0].mxu0
        %2495 = vmatprep.mubr.bf16.mxu0 0
        %2496 = vmatmul.mubr.bf16.gmra.mrb[0].mxu0 %v2298
        %v2497 = vpop.f32.mrb[0].mxu0
        %v2498 = vadd.f32 0.0, %v2497
        %v2499 = vpop.f32.mrb[0].mxu0
        %v2500 = vpop.f32.mrb[0].mxu0
        %v2501 = vadd.f32 0.0, %v2500
        %v2502 = vpop.f32.mrb[0].mxu0
        %2503 = vmatprep.mubr.bf16.mxu0 0
        %2504 = vmatmul.mubr.bf16.gmra.mrb[0].mxu0 %v2299
        %v2505 = vpop.f32.mrb[0].mxu0
        %v2506 = vadd.f32 0.0, %v2505
        %v2507 = vpop.f32.mrb[0].mxu0
        %v2508 = vpop.f32.mrb[0].mxu0
        %v2509 = vadd.f32 0.0, %v2508
        %v2510 = vpop.f32.mrb[0].mxu0
        %2511 = vmatprep.mubr.bf16.mxu0 0
        %2512 = vmatmul.mubr.bf16.gmra.mrb[0].mxu0 %v2300
        %v2513 = vpop.f32.mrb[0].mxu0
        %v2514 = vadd.f32 0.0, %v2513
        %v2515 = vpop.f32.mrb[0].mxu0
        %v2516 = vpop.f32.mrb[0].mxu0
        %v2517 = vadd.f32 0.0, %v2516
        %v2518 = vpop.f32.mrb[0].mxu0
        %2519 = vmatprep.mubr.bf16.mxu0 0
        %2520 = vmatmul.mubr.bf16.gmra.mrb[0].mxu0 %v2301
        %v2521 = vpop.f32.mrb[0].mxu0
        %v2522 = vadd.f32 0.0, %v2521
        %v2523 = vpop.f32.mrb[0].mxu0
        %v2524 = vpop.f32.mrb[0].mxu0
        %v2525 = vadd.f32 0.0, %v2524
        %v2526 = vpop.f32.mrb[0].mxu0
        %2527 = vdwg.mxu0
        %v2528 = vadd.f32 %v2222, %v2402
        %v2529 = vadd.f32 %v2223, %v2405
        %v2530 = vadd.f32 %v2224, %v2410
        %v2531 = vadd.f32 %v2225, %v2413
        %v2532 = vadd.f32 %v2226, %v2418
        %v2533 = vadd.f32 %v2227, %v2421
        %v2534 = vadd.f32 %v2228, %v2426
        %v2535 = vadd.f32 %v2229, %v2429
        %v2536 = vadd.f32 %v2230, %v2434
        %v2537 = vadd.f32 %v2231, %v2437
        %v2538 = vadd.f32 %v2232, %v2442
        %v2539 = vadd.f32 %v2233, %v2445
        %v2540 = vadd.f32 %v2234, %v2450
        %v2541 = vadd.f32 %v2235, %v2453
        %v2542 = vadd.f32 %v2236, %v2458
        %v2543 = vadd.f32 %v2237, %v2461
        %v2544 = vadd.f32 %v2238, %v2466
        %v2545 = vadd.f32 %v2239, %v2469
        %v2546 = vadd.f32 %v2240, %v2474
        %v2547 = vadd.f32 %v2241, %v2477
        %v2548 = vadd.f32 %v2242, %v2482
        %v2549 = vadd.f32 %v2243, %v2485
        %v2550 = vadd.f32 %v2244, %v2490
        %v2551 = vadd.f32 %v2245, %v2493
        %v2552 = vadd.f32 %v2246, %v2498
        %v2553 = vadd.f32 %v2247, %v2501
        %v2554 = vadd.f32 %v2248, %v2506
        %v2555 = vadd.f32 %v2249, %v2509
        %v2556 = vadd.f32 %v2250, %v2514
        %v2557 = vadd.f32 %v2251, %v2517
        %v2558 = vadd.f32 %v2252, %v2522
        %v2559 = vadd.f32 %v2253, %v2525
        %v2560 = vld [vmem:[%s1947 + $0x2] sm:$0xff]
        %v2561 = vld [vmem:[%s1947 + $0xa] sm:$0xff]
        %v2562 = vld [vmem:[%s1947 + $0x1a] sm:$0xff]
        %v2563 = vld [vmem:[%s1947 + $0x22] sm:$0xff]
        %v2564 = vld [vmem:[%s1947 + $0x32] sm:$0xff]
        %v2565 = vld [vmem:[%s1947 + $0x3a] sm:$0xff]
        %v2566 = vld [vmem:[%s1947 + $0x4a] sm:$0xff]
        %v2567 = vld [vmem:[%s1947 + $0x52] sm:$0xff]
        %v2568 = vld [vmem:[%s1947 + $0x62] sm:$0xff]
        %v2569 = vld [vmem:[%s1947 + $0x6a] sm:$0xff]
        %v2570 = vld [vmem:[%s1947 + $0x7a] sm:$0xff]
        %v2571 = vld [vmem:[%s1947 + $0x82] sm:$0xff]
        %v2572 = vld [vmem:[%s1947 + $0x92] sm:$0xff]
        %v2573 = vld [vmem:[%s1947 + $0x9a] sm:$0xff]
        %v2574 = vld [vmem:[%s1947 + $0xaa] sm:$0xff]
        %v2575 = vld [vmem:[%s1947 + $0xb2] sm:$0xff]
        %v2576 = vld [vmem:[%s1947 + $0xc2] sm:$0xff]
        %v2577 = vld [vmem:[%s1947 + $0xca] sm:$0xff]
        %v2578 = vld [vmem:[%s1947 + $0xda] sm:$0xff]
        %v2579 = vld [vmem:[%s1947 + $0xe2] sm:$0xff]
        %v2580 = vld [vmem:[%s1947 + $0xf2] sm:$0xff]
        %v2581 = vld [vmem:[%s1947 + $0xfa] sm:$0xff]
        %v2582 = vld [vmem:[%s1947 + $0x10a] sm:$0xff]
        %v2583 = vld [vmem:[%s1947 + $0x112] sm:$0xff]
        %v2584 = vld [vmem:[%s1947 + $0x122] sm:$0xff]
        %v2585 = vld [vmem:[%s1947 + $0x12a] sm:$0xff]
        %v2586 = vld [vmem:[%s1947 + $0x13a] sm:$0xff]
        %v2587 = vld [vmem:[%s1947 + $0x142] sm:$0xff]
        %v2588 = vld [vmem:[%s1947 + $0x152] sm:$0xff]
        %v2589 = vld [vmem:[%s1947 + $0x15a] sm:$0xff]
        %v2590 = vld [vmem:[%s1947 + $0x16a] sm:$0xff]
        %v2591 = vld [vmem:[%s1947 + $0x172] sm:$0xff]
        %v2592 = vpack.c.bf16 %v2561, %v2560
        %v2593 = vpack.c.bf16 %v2563, %v2562
        %v2594 = vpack.c.bf16 %v2565, %v2564
        %v2595 = vpack.c.bf16 %v2567, %v2566
        %v2596 = vpack.c.bf16 %v2569, %v2568
        %v2597 = vpack.c.bf16 %v2571, %v2570
        %v2598 = vpack.c.bf16 %v2573, %v2572
        %v2599 = vpack.c.bf16 %v2575, %v2574
        %v2600 = vpack.c.bf16 %v2577, %v2576
        %v2601 = vpack.c.bf16 %v2579, %v2578
        %v2602 = vpack.c.bf16 %v2581, %v2580
        %v2603 = vpack.c.bf16 %v2583, %v2582
        %v2604 = vpack.c.bf16 %v2585, %v2584
        %v2605 = vpack.c.bf16 %v2587, %v2586
        %v2606 = vpack.c.bf16 %v2589, %v2588
        %v2607 = vpack.c.bf16 %v2591, %v2590
        %s2608 = scalar_lea.vmem %s172, 512
        %v2609 = vld [vmem:[%s2608] sm:$0xf]
        %v2610 = vld [vmem:[%s2608 + $0x4] sm:$0xf]
        %v2611 = vld [vmem:[%s2608 + $0x8] sm:$0xf]
        %v2612 = vld [vmem:[%s2608 + $0xc] sm:$0xf]
        %v2613 = vld [vmem:[%s2608 + $0x10] sm:$0xf]
        %v2614 = vld [vmem:[%s2608 + $0x14] sm:$0xf]
        %v2615 = vld [vmem:[%s2608 + $0x18] sm:$0xf]
        %v2616 = vld [vmem:[%s2608 + $0x1c] sm:$0xf]
        %v2617 = vld [vmem:[%s2608 + $0x20] sm:$0xf]
        %v2618 = vld [vmem:[%s2608 + $0x24] sm:$0xf]
        %v2619 = vld [vmem:[%s2608 + $0x28] sm:$0xf]
        %v2620 = vld [vmem:[%s2608 + $0x2c] sm:$0xf]
        %v2621 = vld [vmem:[%s2608 + $0x30] sm:$0xf]
        %v2622 = vld [vmem:[%s2608 + $0x34] sm:$0xf]
        %v2623 = vld [vmem:[%s2608 + $0x38] sm:$0xf]
        %v2624 = vld [vmem:[%s2608 + $0x3c] sm:$0xf]
        %v2641 = vunpack.c.l.b16 %v2609
        %v2642 = vunpack.c.l.b16 %v2610
        %v2643 = vunpack.c.l.b16 %v2611
        %v2644 = vunpack.c.l.b16 %v2612
        %v2645 = vunpack.c.l.b16 %v2613
        %v2646 = vunpack.c.l.b16 %v2614
        %v2647 = vunpack.c.l.b16 %v2615
        %v2648 = vunpack.c.l.b16 %v2616
        %v2649 = vunpack.c.l.b16 %v2617
        %v2650 = vunpack.c.l.b16 %v2618
        %v2651 = vunpack.c.l.b16 %v2619
        %v2652 = vunpack.c.l.b16 %v2620
        %v2653 = vunpack.c.l.b16 %v2621
        %v2654 = vunpack.c.l.b16 %v2622
        %v2655 = vunpack.c.l.b16 %v2623
        %v2656 = vunpack.c.l.b16 %v2624
        %v2657 = vpack.c.b16 %v2642, %v2641
        %v2658 = vpack.c.b16 %v2644, %v2643
        %v2659 = vpack.c.b16 %v2646, %v2645
        %v2660 = vpack.c.b16 %v2648, %v2647
        %v2661 = vpack.c.b16 %v2650, %v2649
        %v2662 = vpack.c.b16 %v2652, %v2651
        %v2663 = vpack.c.b16 %v2654, %v2653
        %v2664 = vpack.c.b16 %v2656, %v2655
        %2673 = vmatprep.subr.bf16.mxu0 0
        %2674 = vmatpush1.bf16.msra.mxu0 %v2657
        %2675 = vmatprep.subr.bf16.mxu0 0
        %2676 = vmatpush1.bf16.msra.mxu0 %v2658
        %2677 = vmatprep.subr.bf16.mxu0 0
        %2678 = vmatpush1.bf16.msra.mxu0 %v2659
        %2679 = vmatprep.subr.bf16.mxu0 0
        %2680 = vmatpush1.bf16.msra.mxu0 %v2660
        %2681 = vmatprep.subr.bf16.mxu0 0
        %2682 = vmatpush1.bf16.msra.mxu0 %v2661
        %2683 = vmatprep.subr.bf16.mxu0 0
        %2684 = vmatpush1.bf16.msra.mxu0 %v2662
        %2685 = vmatprep.subr.bf16.mxu0 0
        %2686 = vmatpush1.bf16.msra.mxu0 %v2663
        %2687 = vmatprep.subr.bf16.mxu0 0
        %2688 = vmatpush1.bf16.msra.mxu0 %v2664
        %2689 = vmatprep.subr.bf16.mxu0 0
        %2690 = vmatpush1.bf16.msra.mxu0 0
        %2691 = vmatprep.subr.bf16.mxu0 0
        %2692 = vmatpush1.bf16.msra.mxu0 0
        %2693 = vmatprep.subr.bf16.mxu0 0
        %2694 = vmatpush1.bf16.msra.mxu0 0
        %2695 = vmatprep.subr.bf16.mxu0 0
        %2696 = vmatpush1.bf16.msra.mxu0 0
        %2697 = vmatprep.subr.bf16.mxu0 0
        %2698 = vmatpush1.bf16.msra.mxu0 0
        %2699 = vmatprep.subr.bf16.mxu0 0
        %2700 = vmatpush1.bf16.msra.mxu0 0
        %2701 = vmatprep.subr.bf16.mxu0 0
        %2702 = vmatpush1.bf16.msra.mxu0 0
        %2703 = vmatprep.subr.bf16.mxu0 0
        %2704 = vmatpush1.bf16.msra.mxu0 0
        %2705 = vmatprep.mubr.bf16.mxu0 0
        %2706 = vmatmul.mubr.bf16.gmra.mrb[0].mxu0 %v2592
        %v2707 = vpop.f32.mrb[0].mxu0
        %v2708 = vadd.f32 0.0, %v2707
        %v2709 = vpop.f32.mrb[0].mxu0
        %v2710 = vpop.f32.mrb[0].mxu0
        %v2711 = vadd.f32 0.0, %v2710
        %v2712 = vpop.f32.mrb[0].mxu0
        %2713 = vmatprep.mubr.bf16.mxu0 0
        %2714 = vmatmul.mubr.bf16.gmra.mrb[0].mxu0 %v2593
        %v2715 = vpop.f32.mrb[0].mxu0
        %v2716 = vadd.f32 0.0, %v2715
        %v2717 = vpop.f32.mrb[0].mxu0
        %v2718 = vpop.f32.mrb[0].mxu0
        %v2719 = vadd.f32 0.0, %v2718
        %v2720 = vpop.f32.mrb[0].mxu0
        %2721 = vmatprep.mubr.bf16.mxu0 0
        %2722 = vmatmul.mubr.bf16.gmra.mrb[0].mxu0 %v2594
        %v2723 = vpop.f32.mrb[0].mxu0
        %v2724 = vadd.f32 0.0, %v2723
        %v2725 = vpop.f32.mrb[0].mxu0
        %v2726 = vpop.f32.mrb[0].mxu0
        %v2727 = vadd.f32 0.0, %v2726
        %v2728 = vpop.f32.mrb[0].mxu0
        %2729 = vmatprep.mubr.bf16.mxu0 0
        %2730 = vmatmul.mubr.bf16.gmra.mrb[0].mxu0 %v2595
        %v2731 = vpop.f32.mrb[0].mxu0
        %v2732 = vadd.f32 0.0, %v2731
        %v2733 = vpop.f32.mrb[0].mxu0
        %v2734 = vpop.f32.mrb[0].mxu0
        %v2735 = vadd.f32 0.0, %v2734
        %v2736 = vpop.f32.mrb[0].mxu0
        %2737 = vmatprep.mubr.bf16.mxu0 0
        %2738 = vmatmul.mubr.bf16.gmra.mrb[0].mxu0 %v2596
        %v2739 = vpop.f32.mrb[0].mxu0
        %v2740 = vadd.f32 0.0, %v2739
        %v2741 = vpop.f32.mrb[0].mxu0
        %v2742 = vpop.f32.mrb[0].mxu0
        %v2743 = vadd.f32 0.0, %v2742
        %v2744 = vpop.f32.mrb[0].mxu0
        %2745 = vmatprep.mubr.bf16.mxu0 0
        %2746 = vmatmul.mubr.bf16.gmra.mrb[0].mxu0 %v2597
        %v2747 = vpop.f32.mrb[0].mxu0
        %v2748 = vadd.f32 0.0, %v2747
        %v2749 = vpop.f32.mrb[0].mxu0
        %v2750 = vpop.f32.mrb[0].mxu0
        %v2751 = vadd.f32 0.0, %v2750
        %v2752 = vpop.f32.mrb[0].mxu0
        %2753 = vmatprep.mubr.bf16.mxu0 0
        %2754 = vmatmul.mubr.bf16.gmra.mrb[0].mxu0 %v2598
        %v2755 = vpop.f32.mrb[0].mxu0
        %v2756 = vadd.f32 0.0, %v2755
        %v2757 = vpop.f32.mrb[0].mxu0
        %v2758 = vpop.f32.mrb[0].mxu0
        %v2759 = vadd.f32 0.0, %v2758
        %v2760 = vpop.f32.mrb[0].mxu0
        %2761 = vmatprep.mubr.bf16.mxu0 0
        %2762 = vmatmul.mubr.bf16.gmra.mrb[0].mxu0 %v2599
        %v2763 = vpop.f32.mrb[0].mxu0
        %v2764 = vadd.f32 0.0, %v2763
        %v2765 = vpop.f32.mrb[0].mxu0
        %v2766 = vpop.f32.mrb[0].mxu0
        %v2767 = vadd.f32 0.0, %v2766
        %v2768 = vpop.f32.mrb[0].mxu0
        %2769 = vmatprep.mubr.bf16.mxu0 0
        %2770 = vmatmul.mubr.bf16.gmra.mrb[0].mxu0 %v2600
        %v2771 = vpop.f32.mrb[0].mxu0
        %v2772 = vadd.f32 0.0, %v2771
        %v2773 = vpop.f32.mrb[0].mxu0
        %v2774 = vpop.f32.mrb[0].mxu0
        %v2775 = vadd.f32 0.0, %v2774
        %v2776 = vpop.f32.mrb[0].mxu0
        %2777 = vmatprep.mubr.bf16.mxu0 0
        %2778 = vmatmul.mubr.bf16.gmra.mrb[0].mxu0 %v2601
        %v2779 = vpop.f32.mrb[0].mxu0
        %v2780 = vadd.f32 0.0, %v2779
        %v2781 = vpop.f32.mrb[0].mxu0
        %v2782 = vpop.f32.mrb[0].mxu0
        %v2783 = vadd.f32 0.0, %v2782
        %v2784 = vpop.f32.mrb[0].mxu0
        %2785 = vmatprep.mubr.bf16.mxu0 0
        %2786 = vmatmul.mubr.bf16.gmra.mrb[0].mxu0 %v2602
        %v2787 = vpop.f32.mrb[0].mxu0
        %v2788 = vadd.f32 0.0, %v2787
        %v2789 = vpop.f32.mrb[0].mxu0
        %v2790 = vpop.f32.mrb[0].mxu0
        %v2791 = vadd.f32 0.0, %v2790
        %v2792 = vpop.f32.mrb[0].mxu0
        %2793 = vmatprep.mubr.bf16.mxu0 0
        %2794 = vmatmul.mubr.bf16.gmra.mrb[0].mxu0 %v2603
        %v2795 = vpop.f32.mrb[0].mxu0
        %v2796 = vadd.f32 0.0, %v2795
        %v2797 = vpop.f32.mrb[0].mxu0
        %v2798 = vpop.f32.mrb[0].mxu0
        %v2799 = vadd.f32 0.0, %v2798
        %v2800 = vpop.f32.mrb[0].mxu0
        %2801 = vmatprep.mubr.bf16.mxu0 0
        %2802 = vmatmul.mubr.bf16.gmra.mrb[0].mxu0 %v2604
        %v2803 = vpop.f32.mrb[0].mxu0
        %v2804 = vadd.f32 0.0, %v2803
        %v2805 = vpop.f32.mrb[0].mxu0
        %v2806 = vpop.f32.mrb[0].mxu0
        %v2807 = vadd.f32 0.0, %v2806
        %v2808 = vpop.f32.mrb[0].mxu0
        %2809 = vmatprep.mubr.bf16.mxu0 0
        %2810 = vmatmul.mubr.bf16.gmra.mrb[0].mxu0 %v2605
        %v2811 = vpop.f32.mrb[0].mxu0
        %v2812 = vadd.f32 0.0, %v2811
        %v2813 = vpop.f32.mrb[0].mxu0
        %v2814 = vpop.f32.mrb[0].mxu0
        %v2815 = vadd.f32 0.0, %v2814
        %v2816 = vpop.f32.mrb[0].mxu0
        %2817 = vmatprep.mubr.bf16.mxu0 0
        %2818 = vmatmul.mubr.bf16.gmra.mrb[0].mxu0 %v2606
        %v2819 = vpop.f32.mrb[0].mxu0
        %v2820 = vadd.f32 0.0, %v2819
        %v2821 = vpop.f32.mrb[0].mxu0
        %v2822 = vpop.f32.mrb[0].mxu0
        %v2823 = vadd.f32 0.0, %v2822
        %v2824 = vpop.f32.mrb[0].mxu0
        %2825 = vmatprep.mubr.bf16.mxu0 0
        %2826 = vmatmul.mubr.bf16.gmra.mrb[0].mxu0 %v2607
        %v2827 = vpop.f32.mrb[0].mxu0
        %v2828 = vadd.f32 0.0, %v2827
        %v2829 = vpop.f32.mrb[0].mxu0
        %v2830 = vpop.f32.mrb[0].mxu0
        %v2831 = vadd.f32 0.0, %v2830
        %v2832 = vpop.f32.mrb[0].mxu0
        %2833 = vdwg.mxu0
        %v2834 = vadd.f32 %v2528, %v2708
        %v2835 = vadd.f32 %v2529, %v2711
        %v2836 = vadd.f32 %v2530, %v2716
        %v2837 = vadd.f32 %v2531, %v2719
        %v2838 = vadd.f32 %v2532, %v2724
        %v2839 = vadd.f32 %v2533, %v2727
        %v2840 = vadd.f32 %v2534, %v2732
        %v2841 = vadd.f32 %v2535, %v2735
        %v2842 = vadd.f32 %v2536, %v2740
        %v2843 = vadd.f32 %v2537, %v2743
        %v2844 = vadd.f32 %v2538, %v2748
        %v2845 = vadd.f32 %v2539, %v2751
        %v2846 = vadd.f32 %v2540, %v2756
        %v2847 = vadd.f32 %v2541, %v2759
        %v2848 = vadd.f32 %v2542, %v2764
        %v2849 = vadd.f32 %v2543, %v2767
        %v2850 = vadd.f32 %v2544, %v2772
        %v2851 = vadd.f32 %v2545, %v2775
        %v2852 = vadd.f32 %v2546, %v2780
        %v2853 = vadd.f32 %v2547, %v2783
        %v2854 = vadd.f32 %v2548, %v2788
        %v2855 = vadd.f32 %v2549, %v2791
        %v2856 = vadd.f32 %v2550, %v2796
        %v2857 = vadd.f32 %v2551, %v2799
        %v2858 = vadd.f32 %v2552, %v2804
        %v2859 = vadd.f32 %v2553, %v2807
        %v2860 = vadd.f32 %v2554, %v2812
        %v2861 = vadd.f32 %v2555, %v2815
        %v2862 = vadd.f32 %v2556, %v2820
        %v2863 = vadd.f32 %v2557, %v2823
        %v2864 = vadd.f32 %v2558, %v2828
        %v2865 = vadd.f32 %v2559, %v2831
        %2866 = vst [vmem:[%s163] sm:$0xff] %v2834
        %2867 = vst [vmem:[%s163 + $0x8] sm:$0xff] %v2835
        %2868 = vst [vmem:[%s163 + $0x10] sm:$0xff] %v2836
        %2869 = vst [vmem:[%s163 + $0x18] sm:$0xff] %v2837
        %2870 = vst [vmem:[%s163 + $0x20] sm:$0xff] %v2838
        %2871 = vst [vmem:[%s163 + $0x28] sm:$0xff] %v2839
        %2872 = vst [vmem:[%s163 + $0x30] sm:$0xff] %v2840
        %2873 = vst [vmem:[%s163 + $0x38] sm:$0xff] %v2841
        %2874 = vst [vmem:[%s163 + $0x40] sm:$0xff] %v2842
        %2875 = vst [vmem:[%s163 + $0x48] sm:$0xff] %v2843
        %2876 = vst [vmem:[%s163 + $0x50] sm:$0xff] %v2844
        %2877 = vst [vmem:[%s163 + $0x58] sm:$0xff] %v2845
        %2878 = vst [vmem:[%s163 + $0x60] sm:$0xff] %v2846
        %2879 = vst [vmem:[%s163 + $0x68] sm:$0xff] %v2847
        %2880 = vst [vmem:[%s163 + $0x70] sm:$0xff] %v2848
        %2881 = vst [vmem:[%s163 + $0x78] sm:$0xff] %v2849
        %2882 = vst [vmem:[%s163 + $0x80] sm:$0xff] %v2850
        %2883 = vst [vmem:[%s163 + $0x88] sm:$0xff] %v2851
        %2884 = vst [vmem:[%s163 + $0x90] sm:$0xff] %v2852
        %2885 = vst [vmem:[%s163 + $0x98] sm:$0xff] %v2853
        %2886 = vst [vmem:[%s163 + $0xa0] sm:$0xff] %v2854
        %2887 = vst [vmem:[%s163 + $0xa8] sm:$0xff] %v2855
        %2888 = vst [vmem:[%s163 + $0xb0] sm:$0xff] %v2856
        %2889 = vst [vmem:[%s163 + $0xb8] sm:$0xff] %v2857
        %2890 = vst [vmem:[%s163 + $0xc0] sm:$0xff] %v2858
        %2891 = vst [vmem:[%s163 + $0xc8] sm:$0xff] %v2859
        %2892 = vst [vmem:[%s163 + $0xd0] sm:$0xff] %v2860
        %2893 = vst [vmem:[%s163 + $0xd8] sm:$0xff] %v2861
        %2894 = vst [vmem:[%s163 + $0xe0] sm:$0xff] %v2862
        %2895 = vst [vmem:[%s163 + $0xe8] sm:$0xff] %v2863
        %2896 = vst [vmem:[%s163 + $0xf0] sm:$0xff] %v2864
        %2897 = vst [vmem:[%s163 + $0xf8] sm:$0xff] %v2865
        %s2898 = sand.u32 %s90, 1
        %s2899 = scalar_lea.sflag [#allocation3], %s2898
        %s2900 = sand.u32 %s90, 1
        %s2901 = smul.addr %s2900, 256
        %s2902 = scalar_lea.vmem [#allocation2], %s2901
        // Predicated region
        $region29: #{tpu_custom_call.1} parent=27 // pred_check
          %p2903 = pneg %p100
        $region30: #{tpu_custom_call.1} parent=27 // pred_check_branch
          %2905 = sbr.rel (%p2903) target = $region32
        $region31: #{tpu_custom_call.1} parent=27 // pred_region
          %s2906 = smul.u32 32, %s20
          %s2908 = ssub.s32 4096, 4096
          %2909 = vsyncadd %s2899, %s2908
          %s2910 = sadd.s32 %s21, %s2906
          %s2911 = smul.addr %s2910, 128
          %s2912 = scalar_lea.hbm %s2, %s2911
          %s2913 = sshll.u32 %s2902, 4
          %s2914 = int_to_ptr.vmem [resolvable:$true] %s2913
          %2919 = dma.vmem_to_hbm [thread:$0]  %s2914, 4096, %s2912, %s2899, 128, 128, 8
        $region32: #{tpu_custom_call.1} parent=27 // pred_fallthru
          _
      $region28: #{tpu_custom_call.1} parent=5 // pred_fallthru
        _
      %p2920 = scmp.le.s32.totalorder 2, %s11
      // Predicated region
      $region33: #{tpu_custom_call.1} parent=5 // pred_check
        %p2921 = pneg %p2920
      $region34: #{tpu_custom_call.1} parent=5 // pred_check_branch
        %2923 = sbr.rel (%p2921) target = $region36
      $region35: #{tpu_custom_call.1} parent=5 // pred_region
        %s2924 = ssub.s32 %s11, 2
        // Predicated region
        $region37: #{tpu_custom_call.1} parent=35 // pred_check
          %p2925 = pneg %p106
        $region38: #{tpu_custom_call.1} parent=35 // pred_check_branch
          %2927 = sbr.rel (%p2925) target = $region40
        $region39: #{tpu_custom_call.1} parent=35 // pred_region
          %s2928 = sand.u32 %s91, 1
          %s2929 = scalar_lea.sflag [#allocation3], %s2928
          %s2930 = sand.u32 %s91, 1
          %s2931 = smul.addr %s2930, 256
          %s2932 = scalar_lea.vmem [#allocation2], %s2931
          %2933 = dma.done %s2929, 4096
        $region40: #{tpu_custom_call.1} parent=35 // pred_fallthru
          _
      $region36: #{tpu_custom_call.1} parent=5 // pred_fallthru
        _
    $region6: #{tpu_custom_call.1} parent=1 // loop_footer
      %s15 = sadd.s32 1, %s11
    $region7: #{tpu_custom_call.1} parent=1 // loop_footer_branch
      %10 = sbr.rel target = $region3
    $region8: #{tpu_custom_call.1} parent=1 // loop_exit
      _
    %2934 = vsyncpa [#allocation3], 1
    %s2935 = scalar_lea.sflag [#allocation3], 1
    %2936 = vsyncpa %s2935, 1

</llo_original>
